<compile_context>
chip_gen: v7x
topology: tpu7x:2x2x1
jax: 0.10.0
libtpu: 0.0.40
codegen_flags: <defaults>
</compile_context>

<pallas_src>
import functools

import jax
import jax.numpy as jnp
from jax import lax
from jax.experimental import pallas as pl
from jax.experimental.pallas import tpu as pltpu

MAX_LENGTH = 10
NUM_LAYERS = 2
SOS_INDEX = 1


# ------------------------------------------------------------------
# Single fused kernel: encoder + full decoder loop + gather + BCE loss
# ------------------------------------------------------------------
def _conv_discriminator_kernel(
        ids_pad_ref, enc_emb_ref, conv_w3_ref, w_comb0_ref, w_comb1_ref,
        w_gru_ref, b_gru_ref, w_out_attn_ref, b_misc_ref,
        probs_ref, loss_ref,
        *, target_value, max_length, num_layers):
    f32, bf16 = jnp.float32, jnp.bfloat16

    B, Lp2 = ids_pad_ref.shape
    L = Lp2 - 2
    V, H = enc_emb_ref.shape
    T = probs_ref.shape[1]
    ML, NL = max_length, num_layers

    # ---- small packed parameters (one operand, sliced here) -----------------
    b_misc = b_misc_ref[...]                     # (4, max(H, V)) f32
    conv_b = b_misc[0:1, :H]                     # (1, H)
    b_comb = b_misc[1:2, :H]                     # (1, H)
    b_out = b_misc[2:3, :V]                      # (1, V)
    dec_sos = b_misc[3:4, :H]                    # (1, H)

    # ---- encoder: embedding lookup as one-hot matmul -------------------------
    # ids are padded with -1 at both ends -> all-zero one-hot rows, which
    # implements the Conv1d zero padding for free.
    ids_pad = ids_pad_ref[...]                                     # (B, L+2)
    onehot = (lax.broadcasted_iota(jnp.int32, (B, Lp2, V), 2)
              == ids_pad[:, :, None]).astype(f32)                  # (B, L+2, V)
    emb_pad = lax.dot_general(
        onehot.astype(bf16), enc_emb_ref[...],
        dimension_numbers=(((2,), (0,)), ((), ())),
        preferred_element_type=f32)                                # (B, L+2, H)

    # im2col: one K=3H MXU issue for the whole Conv1d(H,H,k=3,pad=1).
    x3 = jnp.concatenate([emb_pad[:, 0:L, :],
                          emb_pad[:, 1:L + 1, :],
                          emb_pad[:, 2:L + 2, :]], axis=-1)        # (B, L, 3H)
    enc = jnp.tanh(
        lax.dot_general(x3.astype(bf16), conv_w3_ref[...],
                        dimension_numbers=(((2,), (0,)), ((), ())),
                        preferred_element_type=f32)
        + conv_b[None, :, :])                                      # (B, L, H)

    # initial decoder hidden = last encoder position, stacked num_layers times
    h_last = enc[:, L - 1, :]                                      # (B, H)
    hs = [h_last] * NL

    # ---- loop-invariant decoder work (hoisted out of the serial step loop) ---
    w_out_attn = w_out_attn_ref[...]                               # (H, V+ML) bf16
    w_attn = w_out_attn[:, V:]                                     # (H, ML)   bf16

    emb_sos = jnp.broadcast_to(dec_sos, (B, H))                    # (B, H)
    emb_sos_b = emb_sos.astype(bf16)
    s_emb = jnp.dot(emb_sos_b, w_attn, preferred_element_type=f32)      # (B, ML)
    x_emb = (jnp.dot(emb_sos_b, w_comb0_ref[...],
                     preferred_element_type=f32) + b_comb)              # (B, H)
    # step-0 seed of the h-contribution to the attention scores
    score_h = jnp.dot(h_last.astype(bf16), w_attn,
                      preferred_element_type=f32)                       # (B, ML)

    # enc projected through w_comb1 ONCE (attention-weighted sum commutes with
    # the linear map), right-aligned into the MAX_LENGTH buffer ONCE.
    enc_c = lax.dot_general(enc.astype(bf16), w_comb1_ref[...],
                            dimension_numbers=(((2,), (0,)), ((), ())),
                            preferred_element_type=f32)            # (B, L, H)
    if ML > L:
        enc_cp = jnp.concatenate(
            [jnp.zeros((B, ML - L, H), f32), enc_c], axis=1)       # (B, ML, H)
    else:
        enc_cp = enc_c

    p_cols = []

    # ---- decoder loop, fully unrolled (T is small & static) -------------------
    for di in range(T):
        # additive attention over MAX_LENGTH slots
        scores = s_emb + score_h                                   # (B, ML)
        scores = scores - jnp.max(scores, axis=-1, keepdims=True)
        e = jnp.exp(scores)
        attn = e * pl.reciprocal(jnp.sum(e, axis=-1, keepdims=True),
                                 approx=True)                      # (B, ML)

        # attention-weighted, pre-projected context (w_comb1 hoisted)
        ctx_c = jnp.sum(attn[:, :, None] * enc_cp, axis=1)         # (B, H)
        x = jnp.maximum(x_emb + ctx_c, 0.0)                        # (B, H)

        # stacked GRU cells: one fused (B,2H)@(2H,4H) MXU issue per layer,
        # gate columns [r | z | n_i | n_h]  (exact vs. the two-matmul form)
        for l in range(NL):
            h = hs[l]
            xh = jnp.concatenate([x, h], axis=-1).astype(bf16)     # (B, 2H)
            g = (jnp.dot(xh, w_gru_ref[l],
                         preferred_element_type=f32)
                 + b_gru_ref[l])                                   # (B, 4H)
            r = jax.nn.sigmoid(g[:, 0:H])
            z = jax.nn.sigmoid(g[:, H:2 * H])
            n = jnp.tanh(g[:, 2 * H:3 * H] + r * g[:, 3 * H:4 * H])
            hn = (1.0 - z) * n + z * h
            hs[l] = hn
            x = hn

        # fused output projection + next-step attention-score contribution
        y = jnp.dot(x.astype(bf16), w_out_attn,
                    preferred_element_type=f32)                    # (B, V+ML)
        p_full = jax.nn.sigmoid(y[:, :V] + b_out)                  # (B, V)
        score_h = y[:, V:]                                         # (B, ML)

        # fused gather p[b] = p_full[b, input[b, di]] (reuses encoder one-hot)
        p = jnp.sum(p_full * onehot[:, di + 1, :], axis=-1,
                    keepdims=True)                                 # (B, 1)
        p_cols.append(p)

    probs = jnp.concatenate(p_cols, axis=1)                        # (B, T)

    # ---- BCELoss(mean) then /= batch (as in the reference), torch log clamp --
    t = float(target_value)
    log_p = jnp.maximum(jnp.log(probs), -100.0)
    log_1mp = jnp.maximum(jnp.log(1.0 - probs), -100.0)
    bce = -(t * log_p + (1.0 - t) * log_1mp)
    loss = jnp.mean(bce) / B

    probs_ref[...] = probs
    loss_ref[...] = loss[None, None]


# ------------------------------------------------------------------
# Parameters: synthetic weights generated, then pre-packed kernel-ready
# ------------------------------------------------------------------
def make_params(key, vocab_size, hidden, max_length=MAX_LENGTH,
                num_layers=NUM_LAYERS):
    ks = jax.random.split(key, 13)
    s = 0.1
    H, V, ML, NL = hidden, vocab_size, max_length, num_layers

    enc_emb = jax.random.normal(ks[0], (V, H), jnp.float32) * s
    conv_w3 = jax.random.normal(ks[1], (3 * H, H), jnp.float32) * s   # taps stacked
    conv_b = jax.random.normal(ks[2], (H,), jnp.float32) * s
    dec_sos = jax.random.normal(ks[3], (H,), jnp.float32) * s         # SOS embedding
    w_attn = jax.random.normal(ks[4], (H, ML), jnp.float32) * s
    w_comb0 = jax.random.normal(ks[5], (H, H), jnp.float32) * s       # emb half
    w_comb1 = jax.random.normal(ks[6], (H, H), jnp.float32) * s       # ctx half
    w_ih = jax.random.normal(ks[7], (NL, H, 3 * H), jnp.float32) * s
    b_ih = jax.random.normal(ks[8], (NL, 3 * H), jnp.float32) * s
    w_hh = jax.random.normal(ks[9], (NL, H, 3 * H), jnp.float32) * s
    b_hh = jax.random.normal(ks[10], (NL, 3 * H), jnp.float32) * s
    b_comb = jax.random.normal(ks[11], (H,), jnp.float32) * s
    w_out = jax.random.normal(ks[12], (H, V), jnp.float32) * s
    b_out = jnp.zeros((V,), jnp.float32)

    # --- fused GRU weights: K = 2H, gate columns [r | z | n_i | n_h] ----------
    zeros_hh = jnp.zeros((NL, H, H), jnp.float32)
    w_gru_x = jnp.concatenate(          # rows 0:H  (multiply x)
        [w_ih[:, :, 0:H], w_ih[:, :, H:2 * H], w_ih[:, :, 2 * H:3 * H],
         zeros_hh], axis=2)
    w_gru_h = jnp.concatenate(          # rows H:2H (multiply h)
        [w_hh[:, :, 0:H], w_hh[:, :, H:2 * H], zeros_hh,
         w_hh[:, :, 2 * H:3 * H]], axis=2)
    w_gru = jnp.concatenate([w_gru_x, w_gru_h], axis=1)            # (NL, 2H, 4H)
    b_gru = jnp.concatenate(
        [b_ih[:, 0:H] + b_hh[:, 0:H],
         b_ih[:, H:2 * H] + b_hh[:, H:2 * H],
         b_ih[:, 2 * H:3 * H],
         b_hh[:, 2 * H:3 * H]], axis=1)[:, None, :]                # (NL, 1, 4H)

    # --- fused output / attention projection: N = V + ML ----------------------
    w_out_attn = jnp.concatenate([w_out, w_attn], axis=1)          # (H, V+ML)

    # --- tiny vectors packed into a single operand -----------------------------
    W = max(H, V)

    def _row(v):
        return jnp.pad(v, (0, W - v.shape[0]))[None, :]

    b_misc = jnp.concatenate(
        [_row(conv_b), _row(b_comb), _row(b_out), _row(dec_sos)], axis=0)

    return dict(
        enc_emb=enc_emb.astype(jnp.bfloat16),
        conv_w3=conv_w3.astype(jnp.bfloat16),
        w_comb0=w_comb0.astype(jnp.bfloat16),
        w_comb1=w_comb1.astype(jnp.bfloat16),
        w_gru=w_gru.astype(jnp.bfloat16),
        b_gru=b_gru,                                   # f32
        w_out_attn=w_out_attn.astype(jnp.bfloat16),
        b_misc=b_misc,                                 # f32
    )


# ------------------------------------------------------------------
# Wrapper: one pallas_call, no grid, everything resident in VMEM
# ------------------------------------------------------------------
@functools.partial(jax.jit, static_argnames=("true_sample",))
def conv_discriminator_forward(params, input_tensor, target_tensor,
                               true_sample):
    B, L = input_tensor.shape
    T = target_tensor.shape[1]
    V, H = params["enc_emb"].shape
    assert L == T, "module requires input_length == target_length"
    assert L <= MAX_LENGTH

    # pad the int ids with -1: inside the kernel those rows become all-zero
    # one-hot rows == the Conv1d zero padding (tiny int op, no f32 HBM traffic)
    ids_pad = jnp.pad(input_tensor.astype(jnp.int32), ((0, 0), (1, 1)),
                      constant_values=-1)

    kernel = functools.partial(
        _conv_discriminator_kernel,
        target_value=float(bool(true_sample)),
        max_length=MAX_LENGTH, num_layers=NUM_LAYERS)

    probs, loss = pl.pallas_call(
        kernel,
        out_shape=(jax.ShapeDtypeStruct((B, T), jnp.float32),
                   jax.ShapeDtypeStruct((1, 1), jnp.float32)),
        in_specs=[pl.BlockSpec(memory_space=pltpu.MemorySpace.VMEM)] * 9,
        out_specs=(pl.BlockSpec(memory_space=pltpu.MemorySpace.VMEM),
                   pl.BlockSpec(memory_space=pltpu.MemorySpace.VMEM)),
    )(ids_pad,
      params["enc_emb"], params["conv_w3"],
      params["w_comb0"], params["w_comb1"],
      params["w_gru"], params["b_gru"],
      params["w_out_attn"], params["b_misc"])

    return loss[0, 0], probs


if __name__ == "__main__":
    B, L = 2, 8           # input_length == target_length (module requires it)
    T = 8
    H = 128               # encoder.hidden_size
    V = 128               # vocab_size

    key = jax.random.PRNGKey(0)
    kp, ki, kt = jax.random.split(key, 3)
    params = make_params(kp, V, H)

    input_tensor = jax.random.randint(ki, (B, L), 2, V, dtype=jnp.int32)
    target_tensor = jax.random.randint(kt, (B, T), 2, V, dtype=jnp.int32)

    loss, out_probabilities = conv_discriminator_forward(
        params, input_tensor, target_tensor, True)
    jax.block_until_ready((loss, out_probabilities))

    assert out_probabilities.shape == input_tensor.shape
    assert loss.shape == ()
    print("KERNEL_OK")
</pallas_src>

<mosaic_0001>
module attributes {stable_mosaic.version = 11 : i64} {
  func.func @_conv_discriminator_kernel(%arg0: memref<2x10xi32, #tpu.memory_space<vmem>>, %arg1: memref<128x128xbf16, #tpu.memory_space<vmem>>, %arg2: memref<384x128xbf16, #tpu.memory_space<vmem>>, %arg3: memref<128x128xbf16, #tpu.memory_space<vmem>>, %arg4: memref<128x128xbf16, #tpu.memory_space<vmem>>, %arg5: memref<2x256x512xbf16, #tpu.memory_space<vmem>>, %arg6: memref<2x1x512xf32, #tpu.memory_space<vmem>>, %arg7: memref<128x138xbf16, #tpu.memory_space<vmem>>, %arg8: memref<4x128xf32, #tpu.memory_space<vmem>>, %arg9: memref<2x8xf32, #tpu.memory_space<vmem>>, %arg10: memref<1x1xf32, #tpu.memory_space<vmem>>) attributes {dimension_semantics = [], scalar_prefetch = 0 : i64, scratch_operands = 0 : i64, tpu.core_type = #tpu.core_type<tc>} {
    %c0 = arith.constant 0 : index
    %c0_0 = arith.constant 0 : index
    %0 = vector.load %arg8[%c0, %c0_0] : memref<4x128xf32, #tpu.memory_space<vmem>>, vector<4x128xf32>
    %1 = vector.extract_strided_slice %0 {offsets = [0, 0], sizes = [1, 128], strides = [1, 1]} : vector<4x128xf32> to vector<1x128xf32>
    %2 = vector.extract_strided_slice %0 {offsets = [1, 0], sizes = [1, 128], strides = [1, 1]} : vector<4x128xf32> to vector<1x128xf32>
    %3 = vector.extract_strided_slice %0 {offsets = [2, 0], sizes = [1, 128], strides = [1, 1]} : vector<4x128xf32> to vector<1x128xf32>
    %4 = vector.extract_strided_slice %0 {offsets = [3, 0], sizes = [1, 128], strides = [1, 1]} : vector<4x128xf32> to vector<1x128xf32>
    %c0_1 = arith.constant 0 : index
    %c0_2 = arith.constant 0 : index
    %5 = vector.load %arg0[%c0_1, %c0_2] : memref<2x10xi32, #tpu.memory_space<vmem>>, vector<2x10xi32>
    %6 = tpu.iota {dimensions = array<i32: 2>} : vector<2x10x128xi32>
    %7 = vector.shape_cast %5 : vector<2x10xi32> to vector<2x10x1xi32>
    %8 = vector.broadcast %7 : vector<2x10x1xi32> to vector<2x10x128xi32>
    %9 = arith.cmpi eq, %6, %8 : vector<2x10x128xi32>
    %10 = arith.extui %9 : vector<2x10x128xi1> to vector<2x10x128xi32>
    %11 = arith.sitofp %10 : vector<2x10x128xi32> to vector<2x10x128xf32>
    %12 = arith.truncf %11 : vector<2x10x128xf32> to vector<2x10x128xbf16>
    %c0_3 = arith.constant 0 : index
    %c0_4 = arith.constant 0 : index
    %13 = vector.load %arg1[%c0_3, %c0_4] : memref<128x128xbf16, #tpu.memory_space<vmem>>, vector<128x128xbf16>
    %cst = arith.constant dense<0.000000e+00> : vector<2x10x128xf32>
    %14 = tpu.matmul %12, %13, %cst {dimension_numbers = #tpu.dot_dimension_numbers<[2], [0], [0, 1], [1], [0, 0, 0, 1, 1, 1], [], []>} : vector<2x10x128xbf16>, vector<128x128xbf16>, vector<2x10x128xf32> -> vector<2x10x128xf32>
    %15 = vector.extract_strided_slice %14 {offsets = [0, 0, 0], sizes = [2, 8, 128], strides = [1, 1, 1]} : vector<2x10x128xf32> to vector<2x8x128xf32>
    %16 = vector.extract_strided_slice %14 {offsets = [0, 1, 0], sizes = [2, 8, 128], strides = [1, 1, 1]} : vector<2x10x128xf32> to vector<2x8x128xf32>
    %17 = vector.extract_strided_slice %14 {offsets = [0, 2, 0], sizes = [2, 8, 128], strides = [1, 1, 1]} : vector<2x10x128xf32> to vector<2x8x128xf32>
    %18 = tpu.concatenate %15, %16, %17 in 2 : vector<2x8x128xf32>, vector<2x8x128xf32>, vector<2x8x128xf32> -> vector<2x8x384xf32>
    %19 = arith.truncf %18 : vector<2x8x384xf32> to vector<2x8x384xbf16>
    %c0_5 = arith.constant 0 : index
    %c0_6 = arith.constant 0 : index
    %20 = vector.load %arg2[%c0_5, %c0_6] : memref<384x128xbf16, #tpu.memory_space<vmem>>, vector<384x128xbf16>
    %cst_7 = arith.constant dense<0.000000e+00> : vector<2x8x128xf32>
    %21 = tpu.matmul %19, %20, %cst_7 {dimension_numbers = #tpu.dot_dimension_numbers<[2], [0], [0, 1], [1], [0, 0, 0, 1, 1, 1], [], []>} : vector<2x8x384xbf16>, vector<384x128xbf16>, vector<2x8x128xf32> -> vector<2x8x128xf32>
    %22 = vector.shape_cast %1 : vector<1x128xf32> to vector<1x1x128xf32>
    %23 = vector.broadcast %22 : vector<1x1x128xf32> to vector<2x8x128xf32>
    %24 = arith.addf %21, %23 : vector<2x8x128xf32>
    %25 = math.tanh %24 : vector<2x8x128xf32>
    %26 = vector.extract_strided_slice %25 {offsets = [0, 7, 0], sizes = [2, 1, 128], strides = [1, 1, 1]} : vector<2x8x128xf32> to vector<2x1x128xf32>
    %27 = vector.shape_cast %26 : vector<2x1x128xf32> to vector<2x128xf32>
    %c0_8 = arith.constant 0 : index
    %c0_9 = arith.constant 0 : index
    %28 = vector.load %arg7[%c0_8, %c0_9] : memref<128x138xbf16, #tpu.memory_space<vmem>>, vector<128x138xbf16>
    %29 = vector.extract_strided_slice %28 {offsets = [0, 128], sizes = [128, 10], strides = [1, 1]} : vector<128x138xbf16> to vector<128x10xbf16>
    %30 = vector.shape_cast %4 : vector<1x128xf32> to vector<1x128xf32>
    %31 = vector.broadcast %30 : vector<1x128xf32> to vector<2x128xf32>
    %32 = arith.truncf %31 : vector<2x128xf32> to vector<2x128xbf16>
    %cst_10 = arith.constant dense<0.000000e+00> : vector<2x10xf32>
    %33 = tpu.matmul %32, %29, %cst_10 {dimension_numbers = #tpu.dot_dimension_numbers<[1], [0], [0], [1], [0, 0, 1, 1], [], []>} : vector<2x128xbf16>, vector<128x10xbf16>, vector<2x10xf32> -> vector<2x10xf32>
    %c0_11 = arith.constant 0 : index
    %c0_12 = arith.constant 0 : index
    %34 = vector.load %arg3[%c0_11, %c0_12] : memref<128x128xbf16, #tpu.memory_space<vmem>>, vector<128x128xbf16>
    %cst_13 = arith.constant dense<0.000000e+00> : vector<2x128xf32>
    %35 = tpu.matmul %32, %34, %cst_13 {dimension_numbers = #tpu.dot_dimension_numbers<[1], [0], [0], [1], [0, 0, 1, 1], [], []>} : vector<2x128xbf16>, vector<128x128xbf16>, vector<2x128xf32> -> vector<2x128xf32>
    %36 = vector.broadcast %2 : vector<1x128xf32> to vector<2x128xf32>
    %37 = arith.addf %35, %36 : vector<2x128xf32>
    %38 = arith.truncf %27 : vector<2x128xf32> to vector<2x128xbf16>
    %cst_14 = arith.constant dense<0.000000e+00> : vector<2x10xf32>
    %39 = tpu.matmul %38, %29, %cst_14 {dimension_numbers = #tpu.dot_dimension_numbers<[1], [0], [0], [1], [0, 0, 1, 1], [], []>} : vector<2x128xbf16>, vector<128x10xbf16>, vector<2x10xf32> -> vector<2x10xf32>
    %40 = arith.truncf %25 : vector<2x8x128xf32> to vector<2x8x128xbf16>
    %c0_15 = arith.constant 0 : index
    %c0_16 = arith.constant 0 : index
    %41 = vector.load %arg4[%c0_15, %c0_16] : memref<128x128xbf16, #tpu.memory_space<vmem>>, vector<128x128xbf16>
    %cst_17 = arith.constant dense<0.000000e+00> : vector<2x8x128xf32>
    %42 = tpu.matmul %40, %41, %cst_17 {dimension_numbers = #tpu.dot_dimension_numbers<[2], [0], [0, 1], [1], [0, 0, 0, 1, 1, 1], [], []>} : vector<2x8x128xbf16>, vector<128x128xbf16>, vector<2x8x128xf32> -> vector<2x8x128xf32>
    %cst_18 = arith.constant 0.000000e+00 : f32
    %43 = vector.broadcast %cst_18 : f32 to vector<2x2x128xf32>
    %44 = tpu.concatenate %43, %42 in 1 : vector<2x2x128xf32>, vector<2x8x128xf32> -> vector<2x10x128xf32>
    %45 = arith.addf %33, %39 : vector<2x10xf32>
    %cst_19 = arith.constant dense<0xFF800000> : vector<2xf32>
    %46 = vector.multi_reduction <maximumf>, %45, %cst_19 [1] : vector<2x10xf32> to vector<2xf32>
    %47 = vector.shape_cast %46 : vector<2xf32> to vector<2x1xf32>
    %48 = vector.broadcast %47 : vector<2x1xf32> to vector<2x10xf32>
    %49 = arith.subf %45, %48 : vector<2x10xf32>
    %50 = math.exp %49 : vector<2x10xf32>
    %cst_20 = arith.constant dense<0.000000e+00> : vector<2xf32>
    %51 = vector.multi_reduction <add>, %50, %cst_20 [1] : vector<2x10xf32> to vector<2xf32>
    %52 = vector.shape_cast %51 : vector<2xf32> to vector<2x1xf32>
    %53 = tpu.reciprocal %52 {approx = true} : vector<2x1xf32> -> vector<2x1xf32>
    %54 = vector.broadcast %53 : vector<2x1xf32> to vector<2x10xf32>
    %55 = arith.mulf %50, %54 : vector<2x10xf32>
    %56 = vector.shape_cast %55 : vector<2x10xf32> to vector<2x10x1xf32>
    %57 = vector.broadcast %56 : vector<2x10x1xf32> to vector<2x10x128xf32>
    %58 = arith.mulf %57, %44 : vector<2x10x128xf32>
    %cst_21 = arith.constant dense<0.000000e+00> : vector<2x128xf32>
    %59 = vector.multi_reduction <add>, %58, %cst_21 [1] : vector<2x10x128xf32> to vector<2x128xf32>
    %60 = arith.addf %37, %59 : vector<2x128xf32>
    %cst_22 = arith.constant 0.000000e+00 : f32
    %61 = vector.broadcast %cst_22 : f32 to vector<2x128xf32>
    %62 = arith.maximumf %60, %61 : vector<2x128xf32>
    %63 = tpu.concatenate %62, %27 in 1 : vector<2x128xf32>, vector<2x128xf32> -> vector<2x256xf32>
    %64 = arith.truncf %63 : vector<2x256xf32> to vector<2x256xbf16>
    %c0_23 = arith.constant 0 : index
    %c0_24 = arith.constant 0 : index
    %c0_25 = arith.constant 0 : index
    %65 = vector.load %arg5[%c0_23, %c0_24, %c0_25] : memref<2x256x512xbf16, #tpu.memory_space<vmem>>, vector<1x256x512xbf16>
    %66 = vector.shape_cast %65 : vector<1x256x512xbf16> to vector<256x512xbf16>
    %cst_26 = arith.constant dense<0.000000e+00> : vector<2x512xf32>
    %67 = tpu.matmul %64, %66, %cst_26 {dimension_numbers = #tpu.dot_dimension_numbers<[1], [0], [0], [1], [0, 0, 1, 1], [], []>} : vector<2x256xbf16>, vector<256x512xbf16>, vector<2x512xf32> -> vector<2x512xf32>
    %c0_27 = arith.constant 0 : index
    %c0_28 = arith.constant 0 : index
    %c0_29 = arith.constant 0 : index
    %68 = vector.load %arg6[%c0_27, %c0_28, %c0_29] : memref<2x1x512xf32, #tpu.memory_space<vmem>>, vector<1x1x512xf32>
    %69 = vector.shape_cast %68 : vector<1x1x512xf32> to vector<1x512xf32>
    %70 = vector.broadcast %69 : vector<1x512xf32> to vector<2x512xf32>
    %71 = arith.addf %67, %70 : vector<2x512xf32>
    %72 = vector.extract_strided_slice %71 {offsets = [0, 0], sizes = [2, 128], strides = [1, 1]} : vector<2x512xf32> to vector<2x128xf32>
    %73 = arith.negf %72 : vector<2x128xf32>
    %74 = math.exp %73 : vector<2x128xf32>
    %cst_30 = arith.constant 1.000000e+00 : f32
    %75 = vector.broadcast %cst_30 : f32 to vector<2x128xf32>
    %76 = arith.addf %75, %74 : vector<2x128xf32>
    %77 = arith.divf %75, %76 : vector<2x128xf32>
    %78 = vector.extract_strided_slice %71 {offsets = [0, 128], sizes = [2, 128], strides = [1, 1]} : vector<2x512xf32> to vector<2x128xf32>
    %79 = arith.negf %78 : vector<2x128xf32>
    %80 = math.exp %79 : vector<2x128xf32>
    %cst_31 = arith.constant 1.000000e+00 : f32
    %81 = vector.broadcast %cst_31 : f32 to vector<2x128xf32>
    %82 = arith.addf %81, %80 : vector<2x128xf32>
    %83 = arith.divf %81, %82 : vector<2x128xf32>
    %84 = vector.extract_strided_slice %71 {offsets = [0, 256], sizes = [2, 128], strides = [1, 1]} : vector<2x512xf32> to vector<2x128xf32>
    %85 = vector.extract_strided_slice %71 {offsets = [0, 384], sizes = [2, 128], strides = [1, 1]} : vector<2x512xf32> to vector<2x128xf32>
    %86 = arith.mulf %77, %85 : vector<2x128xf32>
    %87 = arith.addf %84, %86 : vector<2x128xf32>
    %88 = math.tanh %87 : vector<2x128xf32>
    %cst_32 = arith.constant 1.000000e+00 : f32
    %89 = vector.broadcast %cst_32 : f32 to vector<2x128xf32>
    %90 = arith.subf %89, %83 : vector<2x128xf32>
    %91 = arith.mulf %90, %88 : vector<2x128xf32>
    %92 = arith.mulf %83, %27 : vector<2x128xf32>
    %93 = arith.addf %91, %92 : vector<2x128xf32>
    %94 = tpu.concatenate %93, %27 in 1 : vector<2x128xf32>, vector<2x128xf32> -> vector<2x256xf32>
    %95 = arith.truncf %94 : vector<2x256xf32> to vector<2x256xbf16>
    %c1 = arith.constant 1 : index
    %c0_33 = arith.constant 0 : index
    %c0_34 = arith.constant 0 : index
    %96 = vector.load %arg5[%c1, %c0_33, %c0_34] : memref<2x256x512xbf16, #tpu.memory_space<vmem>>, vector<1x256x512xbf16>
    %97 = vector.shape_cast %96 : vector<1x256x512xbf16> to vector<256x512xbf16>
    %cst_35 = arith.constant dense<0.000000e+00> : vector<2x512xf32>
    %98 = tpu.matmul %95, %97, %cst_35 {dimension_numbers = #tpu.dot_dimension_numbers<[1], [0], [0], [1], [0, 0, 1, 1], [], []>} : vector<2x256xbf16>, vector<256x512xbf16>, vector<2x512xf32> -> vector<2x512xf32>
    %c1_36 = arith.constant 1 : index
    %c0_37 = arith.constant 0 : index
    %c0_38 = arith.constant 0 : index
    %99 = vector.load %arg6[%c1_36, %c0_37, %c0_38] : memref<2x1x512xf32, #tpu.memory_space<vmem>>, vector<1x1x512xf32>
    %100 = vector.shape_cast %99 : vector<1x1x512xf32> to vector<1x512xf32>
    %101 = vector.broadcast %100 : vector<1x512xf32> to vector<2x512xf32>
    %102 = arith.addf %98, %101 : vector<2x512xf32>
    %103 = vector.extract_strided_slice %102 {offsets = [0, 0], sizes = [2, 128], strides = [1, 1]} : vector<2x512xf32> to vector<2x128xf32>
    %104 = arith.negf %103 : vector<2x128xf32>
    %105 = math.exp %104 : vector<2x128xf32>
    %cst_39 = arith.constant 1.000000e+00 : f32
    %106 = vector.broadcast %cst_39 : f32 to vector<2x128xf32>
    %107 = arith.addf %106, %105 : vector<2x128xf32>
    %108 = arith.divf %106, %107 : vector<2x128xf32>
    %109 = vector.extract_strided_slice %102 {offsets = [0, 128], sizes = [2, 128], strides = [1, 1]} : vector<2x512xf32> to vector<2x128xf32>
    %110 = arith.negf %109 : vector<2x128xf32>
    %111 = math.exp %110 : vector<2x128xf32>
    %cst_40 = arith.constant 1.000000e+00 : f32
    %112 = vector.broadcast %cst_40 : f32 to vector<2x128xf32>
    %113 = arith.addf %112, %111 : vector<2x128xf32>
    %114 = arith.divf %112, %113 : vector<2x128xf32>
    %115 = vector.extract_strided_slice %102 {offsets = [0, 256], sizes = [2, 128], strides = [1, 1]} : vector<2x512xf32> to vector<2x128xf32>
    %116 = vector.extract_strided_slice %102 {offsets = [0, 384], sizes = [2, 128], strides = [1, 1]} : vector<2x512xf32> to vector<2x128xf32>
    %117 = arith.mulf %108, %116 : vector<2x128xf32>
    %118 = arith.addf %115, %117 : vector<2x128xf32>
    %119 = math.tanh %118 : vector<2x128xf32>
    %cst_41 = arith.constant 1.000000e+00 : f32
    %120 = vector.broadcast %cst_41 : f32 to vector<2x128xf32>
    %121 = arith.subf %120, %114 : vector<2x128xf32>
    %122 = arith.mulf %121, %119 : vector<2x128xf32>
    %123 = arith.mulf %114, %27 : vector<2x128xf32>
    %124 = arith.addf %122, %123 : vector<2x128xf32>
    %125 = arith.truncf %124 : vector<2x128xf32> to vector<2x128xbf16>
    %cst_42 = arith.constant dense<0.000000e+00> : vector<2x138xf32>
    %126 = tpu.matmul %125, %28, %cst_42 {dimension_numbers = #tpu.dot_dimension_numbers<[1], [0], [0], [1], [0, 0, 1, 1], [], []>} : vector<2x128xbf16>, vector<128x138xbf16>, vector<2x138xf32> -> vector<2x138xf32>
    %127 = vector.extract_strided_slice %126 {offsets = [0, 0], sizes = [2, 128], strides = [1, 1]} : vector<2x138xf32> to vector<2x128xf32>
    %128 = vector.broadcast %3 : vector<1x128xf32> to vector<2x128xf32>
    %129 = arith.addf %127, %128 : vector<2x128xf32>
    %130 = arith.negf %129 : vector<2x128xf32>
    %131 = math.exp %130 : vector<2x128xf32>
    %cst_43 = arith.constant 1.000000e+00 : f32
    %132 = vector.broadcast %cst_43 : f32 to vector<2x128xf32>
    %133 = arith.addf %132, %131 : vector<2x128xf32>
    %134 = arith.divf %132, %133 : vector<2x128xf32>
    %135 = vector.extract_strided_slice %126 {offsets = [0, 128], sizes = [2, 10], strides = [1, 1]} : vector<2x138xf32> to vector<2x10xf32>
    %136 = vector.extract_strided_slice %11 {offsets = [0, 1, 0], sizes = [2, 1, 128], strides = [1, 1, 1]} : vector<2x10x128xf32> to vector<2x1x128xf32>
    %137 = vector.shape_cast %136 : vector<2x1x128xf32> to vector<2x128xf32>
    %138 = arith.mulf %134, %137 : vector<2x128xf32>
    %cst_44 = arith.constant dense<0.000000e+00> : vector<2xf32>
    %139 = vector.multi_reduction <add>, %138, %cst_44 [1] : vector<2x128xf32> to vector<2xf32>
    %140 = vector.shape_cast %139 : vector<2xf32> to vector<2x1xf32>
    %141 = arith.addf %33, %135 : vector<2x10xf32>
    %cst_45 = arith.constant dense<0xFF800000> : vector<2xf32>
    %142 = vector.multi_reduction <maximumf>, %141, %cst_45 [1] : vector<2x10xf32> to vector<2xf32>
    %143 = vector.shape_cast %142 : vector<2xf32> to vector<2x1xf32>
    %144 = vector.broadcast %143 : vector<2x1xf32> to vector<2x10xf32>
    %145 = arith.subf %141, %144 : vector<2x10xf32>
    %146 = math.exp %145 : vector<2x10xf32>
    %cst_46 = arith.constant dense<0.000000e+00> : vector<2xf32>
    %147 = vector.multi_reduction <add>, %146, %cst_46 [1] : vector<2x10xf32> to vector<2xf32>
    %148 = vector.shape_cast %147 : vector<2xf32> to vector<2x1xf32>
    %149 = tpu.reciprocal %148 {approx = true} : vector<2x1xf32> -> vector<2x1xf32>
    %150 = vector.broadcast %149 : vector<2x1xf32> to vector<2x10xf32>
    %151 = arith.mulf %146, %150 : vector<2x10xf32>
    %152 = vector.shape_cast %151 : vector<2x10xf32> to vector<2x10x1xf32>
    %153 = vector.broadcast %152 : vector<2x10x1xf32> to vector<2x10x128xf32>
    %154 = arith.mulf %153, %44 : vector<2x10x128xf32>
    %cst_47 = arith.constant dense<0.000000e+00> : vector<2x128xf32>
    %155 = vector.multi_reduction <add>, %154, %cst_47 [1] : vector<2x10x128xf32> to vector<2x128xf32>
    %156 = arith.addf %37, %155 : vector<2x128xf32>
    %cst_48 = arith.constant 0.000000e+00 : f32
    %157 = vector.broadcast %cst_48 : f32 to vector<2x128xf32>
    %158 = arith.maximumf %156, %157 : vector<2x128xf32>
    %159 = tpu.concatenate %158, %93 in 1 : vector<2x128xf32>, vector<2x128xf32> -> vector<2x256xf32>
    %160 = arith.truncf %159 : vector<2x256xf32> to vector<2x256xbf16>
    %c0_49 = arith.constant 0 : index
    %c0_50 = arith.constant 0 : index
    %c0_51 = arith.constant 0 : index
    %161 = vector.load %arg5[%c0_49, %c0_50, %c0_51] : memref<2x256x512xbf16, #tpu.memory_space<vmem>>, vector<1x256x512xbf16>
    %162 = vector.shape_cast %161 : vector<1x256x512xbf16> to vector<256x512xbf16>
    %cst_52 = arith.constant dense<0.000000e+00> : vector<2x512xf32>
    %163 = tpu.matmul %160, %162, %cst_52 {dimension_numbers = #tpu.dot_dimension_numbers<[1], [0], [0], [1], [0, 0, 1, 1], [], []>} : vector<2x256xbf16>, vector<256x512xbf16>, vector<2x512xf32> -> vector<2x512xf32>
    %c0_53 = arith.constant 0 : index
    %c0_54 = arith.constant 0 : index
    %c0_55 = arith.constant 0 : index
    %164 = vector.load %arg6[%c0_53, %c0_54, %c0_55] : memref<2x1x512xf32, #tpu.memory_space<vmem>>, vector<1x1x512xf32>
    %165 = vector.shape_cast %164 : vector<1x1x512xf32> to vector<1x512xf32>
    %166 = vector.broadcast %165 : vector<1x512xf32> to vector<2x512xf32>
    %167 = arith.addf %163, %166 : vector<2x512xf32>
    %168 = vector.extract_strided_slice %167 {offsets = [0, 0], sizes = [2, 128], strides = [1, 1]} : vector<2x512xf32> to vector<2x128xf32>
    %169 = arith.negf %168 : vector<2x128xf32>
    %170 = math.exp %169 : vector<2x128xf32>
    %cst_56 = arith.constant 1.000000e+00 : f32
    %171 = vector.broadcast %cst_56 : f32 to vector<2x128xf32>
    %172 = arith.addf %171, %170 : vector<2x128xf32>
    %173 = arith.divf %171, %172 : vector<2x128xf32>
    %174 = vector.extract_strided_slice %167 {offsets = [0, 128], sizes = [2, 128], strides = [1, 1]} : vector<2x512xf32> to vector<2x128xf32>
    %175 = arith.negf %174 : vector<2x128xf32>
    %176 = math.exp %175 : vector<2x128xf32>
    %cst_57 = arith.constant 1.000000e+00 : f32
    %177 = vector.broadcast %cst_57 : f32 to vector<2x128xf32>
    %178 = arith.addf %177, %176 : vector<2x128xf32>
    %179 = arith.divf %177, %178 : vector<2x128xf32>
    %180 = vector.extract_strided_slice %167 {offsets = [0, 256], sizes = [2, 128], strides = [1, 1]} : vector<2x512xf32> to vector<2x128xf32>
    %181 = vector.extract_strided_slice %167 {offsets = [0, 384], sizes = [2, 128], strides = [1, 1]} : vector<2x512xf32> to vector<2x128xf32>
    %182 = arith.mulf %173, %181 : vector<2x128xf32>
    %183 = arith.addf %180, %182 : vector<2x128xf32>
    %184 = math.tanh %183 : vector<2x128xf32>
    %cst_58 = arith.constant 1.000000e+00 : f32
    %185 = vector.broadcast %cst_58 : f32 to vector<2x128xf32>
    %186 = arith.subf %185, %179 : vector<2x128xf32>
    %187 = arith.mulf %186, %184 : vector<2x128xf32>
    %188 = arith.mulf %179, %93 : vector<2x128xf32>
    %189 = arith.addf %187, %188 : vector<2x128xf32>
    %190 = tpu.concatenate %189, %124 in 1 : vector<2x128xf32>, vector<2x128xf32> -> vector<2x256xf32>
    %191 = arith.truncf %190 : vector<2x256xf32> to vector<2x256xbf16>
    %c1_59 = arith.constant 1 : index
    %c0_60 = arith.constant 0 : index
    %c0_61 = arith.constant 0 : index
    %192 = vector.load %arg5[%c1_59, %c0_60, %c0_61] : memref<2x256x512xbf16, #tpu.memory_space<vmem>>, vector<1x256x512xbf16>
    %193 = vector.shape_cast %192 : vector<1x256x512xbf16> to vector<256x512xbf16>
    %cst_62 = arith.constant dense<0.000000e+00> : vector<2x512xf32>
    %194 = tpu.matmul %191, %193, %cst_62 {dimension_numbers = #tpu.dot_dimension_numbers<[1], [0], [0], [1], [0, 0, 1, 1], [], []>} : vector<2x256xbf16>, vector<256x512xbf16>, vector<2x512xf32> -> vector<2x512xf32>
    %c1_63 = arith.constant 1 : index
    %c0_64 = arith.constant 0 : index
    %c0_65 = arith.constant 0 : index
    %195 = vector.load %arg6[%c1_63, %c0_64, %c0_65] : memref<2x1x512xf32, #tpu.memory_space<vmem>>, vector<1x1x512xf32>
    %196 = vector.shape_cast %195 : vector<1x1x512xf32> to vector<1x512xf32>
    %197 = vector.broadcast %196 : vector<1x512xf32> to vector<2x512xf32>
    %198 = arith.addf %194, %197 : vector<2x512xf32>
    %199 = vector.extract_strided_slice %198 {offsets = [0, 0], sizes = [2, 128], strides = [1, 1]} : vector<2x512xf32> to vector<2x128xf32>
    %200 = arith.negf %199 : vector<2x128xf32>
    %201 = math.exp %200 : vector<2x128xf32>
    %cst_66 = arith.constant 1.000000e+00 : f32
    %202 = vector.broadcast %cst_66 : f32 to vector<2x128xf32>
    %203 = arith.addf %202, %201 : vector<2x128xf32>
    %204 = arith.divf %202, %203 : vector<2x128xf32>
    %205 = vector.extract_strided_slice %198 {offsets = [0, 128], sizes = [2, 128], strides = [1, 1]} : vector<2x512xf32> to vector<2x128xf32>
    %206 = arith.negf %205 : vector<2x128xf32>
    %207 = math.exp %206 : vector<2x128xf32>
    %cst_67 = arith.constant 1.000000e+00 : f32
    %208 = vector.broadcast %cst_67 : f32 to vector<2x128xf32>
    %209 = arith.addf %208, %207 : vector<2x128xf32>
    %210 = arith.divf %208, %209 : vector<2x128xf32>
    %211 = vector.extract_strided_slice %198 {offsets = [0, 256], sizes = [2, 128], strides = [1, 1]} : vector<2x512xf32> to vector<2x128xf32>
    %212 = vector.extract_strided_slice %198 {offsets = [0, 384], sizes = [2, 128], strides = [1, 1]} : vector<2x512xf32> to vector<2x128xf32>
    %213 = arith.mulf %204, %212 : vector<2x128xf32>
    %214 = arith.addf %211, %213 : vector<2x128xf32>
    %215 = math.tanh %214 : vector<2x128xf32>
    %cst_68 = arith.constant 1.000000e+00 : f32
    %216 = vector.broadcast %cst_68 : f32 to vector<2x128xf32>
    %217 = arith.subf %216, %210 : vector<2x128xf32>
    %218 = arith.mulf %217, %215 : vector<2x128xf32>
    %219 = arith.mulf %210, %124 : vector<2x128xf32>
    %220 = arith.addf %218, %219 : vector<2x128xf32>
    %221 = arith.truncf %220 : vector<2x128xf32> to vector<2x128xbf16>
    %cst_69 = arith.constant dense<0.000000e+00> : vector<2x138xf32>
    %222 = tpu.matmul %221, %28, %cst_69 {dimension_numbers = #tpu.dot_dimension_numbers<[1], [0], [0], [1], [0, 0, 1, 1], [], []>} : vector<2x128xbf16>, vector<128x138xbf16>, vector<2x138xf32> -> vector<2x138xf32>
    %223 = vector.extract_strided_slice %222 {offsets = [0, 0], sizes = [2, 128], strides = [1, 1]} : vector<2x138xf32> to vector<2x128xf32>
    %224 = vector.broadcast %3 : vector<1x128xf32> to vector<2x128xf32>
    %225 = arith.addf %223, %224 : vector<2x128xf32>
    %226 = arith.negf %225 : vector<2x128xf32>
    %227 = math.exp %226 : vector<2x128xf32>
    %cst_70 = arith.constant 1.000000e+00 : f32
    %228 = vector.broadcast %cst_70 : f32 to vector<2x128xf32>
    %229 = arith.addf %228, %227 : vector<2x128xf32>
    %230 = arith.divf %228, %229 : vector<2x128xf32>
    %231 = vector.extract_strided_slice %222 {offsets = [0, 128], sizes = [2, 10], strides = [1, 1]} : vector<2x138xf32> to vector<2x10xf32>
    %232 = vector.extract_strided_slice %11 {offsets = [0, 2, 0], sizes = [2, 1, 128], strides = [1, 1, 1]} : vector<2x10x128xf32> to vector<2x1x128xf32>
    %233 = vector.shape_cast %232 : vector<2x1x128xf32> to vector<2x128xf32>
    %234 = arith.mulf %230, %233 : vector<2x128xf32>
    %cst_71 = arith.constant dense<0.000000e+00> : vector<2xf32>
    %235 = vector.multi_reduction <add>, %234, %cst_71 [1] : vector<2x128xf32> to vector<2xf32>
    %236 = vector.shape_cast %235 : vector<2xf32> to vector<2x1xf32>
    %237 = arith.addf %33, %231 : vector<2x10xf32>
    %cst_72 = arith.constant dense<0xFF800000> : vector<2xf32>
    %238 = vector.multi_reduction <maximumf>, %237, %cst_72 [1] : vector<2x10xf32> to vector<2xf32>
    %239 = vector.shape_cast %238 : vector<2xf32> to vector<2x1xf32>
    %240 = vector.broadcast %239 : vector<2x1xf32> to vector<2x10xf32>
    %241 = arith.subf %237, %240 : vector<2x10xf32>
    %242 = math.exp %241 : vector<2x10xf32>
    %cst_73 = arith.constant dense<0.000000e+00> : vector<2xf32>
    %243 = vector.multi_reduction <add>, %242, %cst_73 [1] : vector<2x10xf32> to vector<2xf32>
    %244 = vector.shape_cast %243 : vector<2xf32> to vector<2x1xf32>
    %245 = tpu.reciprocal %244 {approx = true} : vector<2x1xf32> -> vector<2x1xf32>
    %246 = vector.broadcast %245 : vector<2x1xf32> to vector<2x10xf32>
    %247 = arith.mulf %242, %246 : vector<2x10xf32>
    %248 = vector.shape_cast %247 : vector<2x10xf32> to vector<2x10x1xf32>
    %249 = vector.broadcast %248 : vector<2x10x1xf32> to vector<2x10x128xf32>
    %250 = arith.mulf %249, %44 : vector<2x10x128xf32>
    %cst_74 = arith.constant dense<0.000000e+00> : vector<2x128xf32>
    %251 = vector.multi_reduction <add>, %250, %cst_74 [1] : vector<2x10x128xf32> to vector<2x128xf32>
    %252 = arith.addf %37, %251 : vector<2x128xf32>
    %cst_75 = arith.constant 0.000000e+00 : f32
    %253 = vector.broadcast %cst_75 : f32 to vector<2x128xf32>
    %254 = arith.maximumf %252, %253 : vector<2x128xf32>
    %255 = tpu.concatenate %254, %189 in 1 : vector<2x128xf32>, vector<2x128xf32> -> vector<2x256xf32>
    %256 = arith.truncf %255 : vector<2x256xf32> to vector<2x256xbf16>
    %c0_76 = arith.constant 0 : index
    %c0_77 = arith.constant 0 : index
    %c0_78 = arith.constant 0 : index
    %257 = vector.load %arg5[%c0_76, %c0_77, %c0_78] : memref<2x256x512xbf16, #tpu.memory_space<vmem>>, vector<1x256x512xbf16>
    %258 = vector.shape_cast %257 : vector<1x256x512xbf16> to vector<256x512xbf16>
    %cst_79 = arith.constant dense<0.000000e+00> : vector<2x512xf32>
    %259 = tpu.matmul %256, %258, %cst_79 {dimension_numbers = #tpu.dot_dimension_numbers<[1], [0], [0], [1], [0, 0, 1, 1], [], []>} : vector<2x256xbf16>, vector<256x512xbf16>, vector<2x512xf32> -> vector<2x512xf32>
    %c0_80 = arith.constant 0 : index
    %c0_81 = arith.constant 0 : index
    %c0_82 = arith.constant 0 : index
    %260 = vector.load %arg6[%c0_80, %c0_81, %c0_82] : memref<2x1x512xf32, #tpu.memory_space<vmem>>, vector<1x1x512xf32>
    %261 = vector.shape_cast %260 : vector<1x1x512xf32> to vector<1x512xf32>
    %262 = vector.broadcast %261 : vector<1x512xf32> to vector<2x512xf32>
    %263 = arith.addf %259, %262 : vector<2x512xf32>
    %264 = vector.extract_strided_slice %263 {offsets = [0, 0], sizes = [2, 128], strides = [1, 1]} : vector<2x512xf32> to vector<2x128xf32>
    %265 = arith.negf %264 : vector<2x128xf32>
    %266 = math.exp %265 : vector<2x128xf32>
    %cst_83 = arith.constant 1.000000e+00 : f32
    %267 = vector.broadcast %cst_83 : f32 to vector<2x128xf32>
    %268 = arith.addf %267, %266 : vector<2x128xf32>
    %269 = arith.divf %267, %268 : vector<2x128xf32>
    %270 = vector.extract_strided_slice %263 {offsets = [0, 128], sizes = [2, 128], strides = [1, 1]} : vector<2x512xf32> to vector<2x128xf32>
    %271 = arith.negf %270 : vector<2x128xf32>
    %272 = math.exp %271 : vector<2x128xf32>
    %cst_84 = arith.constant 1.000000e+00 : f32
    %273 = vector.broadcast %cst_84 : f32 to vector<2x128xf32>
    %274 = arith.addf %273, %272 : vector<2x128xf32>
    %275 = arith.divf %273, %274 : vector<2x128xf32>
    %276 = vector.extract_strided_slice %263 {offsets = [0, 256], sizes = [2, 128], strides = [1, 1]} : vector<2x512xf32> to vector<2x128xf32>
    %277 = vector.extract_strided_slice %263 {offsets = [0, 384], sizes = [2, 128], strides = [1, 1]} : vector<2x512xf32> to vector<2x128xf32>
    %278 = arith.mulf %269, %277 : vector<2x128xf32>
    %279 = arith.addf %276, %278 : vector<2x128xf32>
    %280 = math.tanh %279 : vector<2x128xf32>
    %cst_85 = arith.constant 1.000000e+00 : f32
    %281 = vector.broadcast %cst_85 : f32 to vector<2x128xf32>
    %282 = arith.subf %281, %275 : vector<2x128xf32>
    %283 = arith.mulf %282, %280 : vector<2x128xf32>
    %284 = arith.mulf %275, %189 : vector<2x128xf32>
    %285 = arith.addf %283, %284 : vector<2x128xf32>
    %286 = tpu.concatenate %285, %220 in 1 : vector<2x128xf32>, vector<2x128xf32> -> vector<2x256xf32>
    %287 = arith.truncf %286 : vector<2x256xf32> to vector<2x256xbf16>
    %c1_86 = arith.constant 1 : index
    %c0_87 = arith.constant 0 : index
    %c0_88 = arith.constant 0 : index
    %288 = vector.load %arg5[%c1_86, %c0_87, %c0_88] : memref<2x256x512xbf16, #tpu.memory_space<vmem>>, vector<1x256x512xbf16>
    %289 = vector.shape_cast %288 : vector<1x256x512xbf16> to vector<256x512xbf16>
    %cst_89 = arith.constant dense<0.000000e+00> : vector<2x512xf32>
    %290 = tpu.matmul %287, %289, %cst_89 {dimension_numbers = #tpu.dot_dimension_numbers<[1], [0], [0], [1], [0, 0, 1, 1], [], []>} : vector<2x256xbf16>, vector<256x512xbf16>, vector<2x512xf32> -> vector<2x512xf32>
    %c1_90 = arith.constant 1 : index
    %c0_91 = arith.constant 0 : index
    %c0_92 = arith.constant 0 : index
    %291 = vector.load %arg6[%c1_90, %c0_91, %c0_92] : memref<2x1x512xf32, #tpu.memory_space<vmem>>, vector<1x1x512xf32>
    %292 = vector.shape_cast %291 : vector<1x1x512xf32> to vector<1x512xf32>
    %293 = vector.broadcast %292 : vector<1x512xf32> to vector<2x512xf32>
    %294 = arith.addf %290, %293 : vector<2x512xf32>
    %295 = vector.extract_strided_slice %294 {offsets = [0, 0], sizes = [2, 128], strides = [1, 1]} : vector<2x512xf32> to vector<2x128xf32>
    %296 = arith.negf %295 : vector<2x128xf32>
    %297 = math.exp %296 : vector<2x128xf32>
    %cst_93 = arith.constant 1.000000e+00 : f32
    %298 = vector.broadcast %cst_93 : f32 to vector<2x128xf32>
    %299 = arith.addf %298, %297 : vector<2x128xf32>
    %300 = arith.divf %298, %299 : vector<2x128xf32>
    %301 = vector.extract_strided_slice %294 {offsets = [0, 128], sizes = [2, 128], strides = [1, 1]} : vector<2x512xf32> to vector<2x128xf32>
    %302 = arith.negf %301 : vector<2x128xf32>
    %303 = math.exp %302 : vector<2x128xf32>
    %cst_94 = arith.constant 1.000000e+00 : f32
    %304 = vector.broadcast %cst_94 : f32 to vector<2x128xf32>
    %305 = arith.addf %304, %303 : vector<2x128xf32>
    %306 = arith.divf %304, %305 : vector<2x128xf32>
    %307 = vector.extract_strided_slice %294 {offsets = [0, 256], sizes = [2, 128], strides = [1, 1]} : vector<2x512xf32> to vector<2x128xf32>
    %308 = vector.extract_strided_slice %294 {offsets = [0, 384], sizes = [2, 128], strides = [1, 1]} : vector<2x512xf32> to vector<2x128xf32>
    %309 = arith.mulf %300, %308 : vector<2x128xf32>
    %310 = arith.addf %307, %309 : vector<2x128xf32>
    %311 = math.tanh %310 : vector<2x128xf32>
    %cst_95 = arith.constant 1.000000e+00 : f32
    %312 = vector.broadcast %cst_95 : f32 to vector<2x128xf32>
    %313 = arith.subf %312, %306 : vector<2x128xf32>
    %314 = arith.mulf %313, %311 : vector<2x128xf32>
    %315 = arith.mulf %306, %220 : vector<2x128xf32>
    %316 = arith.addf %314, %315 : vector<2x128xf32>
    %317 = arith.truncf %316 : vector<2x128xf32> to vector<2x128xbf16>
    %cst_96 = arith.constant dense<0.000000e+00> : vector<2x138xf32>
    %318 = tpu.matmul %317, %28, %cst_96 {dimension_numbers = #tpu.dot_dimension_numbers<[1], [0], [0], [1], [0, 0, 1, 1], [], []>} : vector<2x128xbf16>, vector<128x138xbf16>, vector<2x138xf32> -> vector<2x138xf32>
    %319 = vector.extract_strided_slice %318 {offsets = [0, 0], sizes = [2, 128], strides = [1, 1]} : vector<2x138xf32> to vector<2x128xf32>
    %320 = vector.broadcast %3 : vector<1x128xf32> to vector<2x128xf32>
    %321 = arith.addf %319, %320 : vector<2x128xf32>
    %322 = arith.negf %321 : vector<2x128xf32>
    %323 = math.exp %322 : vector<2x128xf32>
    %cst_97 = arith.constant 1.000000e+00 : f32
    %324 = vector.broadcast %cst_97 : f32 to vector<2x128xf32>
    %325 = arith.addf %324, %323 : vector<2x128xf32>
    %326 = arith.divf %324, %325 : vector<2x128xf32>
    %327 = vector.extract_strided_slice %318 {offsets = [0, 128], sizes = [2, 10], strides = [1, 1]} : vector<2x138xf32> to vector<2x10xf32>
    %328 = vector.extract_strided_slice %11 {offsets = [0, 3, 0], sizes = [2, 1, 128], strides = [1, 1, 1]} : vector<2x10x128xf32> to vector<2x1x128xf32>
    %329 = vector.shape_cast %328 : vector<2x1x128xf32> to vector<2x128xf32>
    %330 = arith.mulf %326, %329 : vector<2x128xf32>
    %cst_98 = arith.constant dense<0.000000e+00> : vector<2xf32>
    %331 = vector.multi_reduction <add>, %330, %cst_98 [1] : vector<2x128xf32> to vector<2xf32>
    %332 = vector.shape_cast %331 : vector<2xf32> to vector<2x1xf32>
    %333 = arith.addf %33, %327 : vector<2x10xf32>
    %cst_99 = arith.constant dense<0xFF800000> : vector<2xf32>
    %334 = vector.multi_reduction <maximumf>, %333, %cst_99 [1] : vector<2x10xf32> to vector<2xf32>
    %335 = vector.shape_cast %334 : vector<2xf32> to vector<2x1xf32>
    %336 = vector.broadcast %335 : vector<2x1xf32> to vector<2x10xf32>
    %337 = arith.subf %333, %336 : vector<2x10xf32>
    %338 = math.exp %337 : vector<2x10xf32>
    %cst_100 = arith.constant dense<0.000000e+00> : vector<2xf32>
    %339 = vector.multi_reduction <add>, %338, %cst_100 [1] : vector<2x10xf32> to vector<2xf32>
    %340 = vector.shape_cast %339 : vector<2xf32> to vector<2x1xf32>
    %341 = tpu.reciprocal %340 {approx = true} : vector<2x1xf32> -> vector<2x1xf32>
    %342 = vector.broadcast %341 : vector<2x1xf32> to vector<2x10xf32>
    %343 = arith.mulf %338, %342 : vector<2x10xf32>
    %344 = vector.shape_cast %343 : vector<2x10xf32> to vector<2x10x1xf32>
    %345 = vector.broadcast %344 : vector<2x10x1xf32> to vector<2x10x128xf32>
    %346 = arith.mulf %345, %44 : vector<2x10x128xf32>
    %cst_101 = arith.constant dense<0.000000e+00> : vector<2x128xf32>
    %347 = vector.multi_reduction <add>, %346, %cst_101 [1] : vector<2x10x128xf32> to vector<2x128xf32>
    %348 = arith.addf %37, %347 : vector<2x128xf32>
    %cst_102 = arith.constant 0.000000e+00 : f32
    %349 = vector.broadcast %cst_102 : f32 to vector<2x128xf32>
    %350 = arith.maximumf %348, %349 : vector<2x128xf32>
    %351 = tpu.concatenate %350, %285 in 1 : vector<2x128xf32>, vector<2x128xf32> -> vector<2x256xf32>
    %352 = arith.truncf %351 : vector<2x256xf32> to vector<2x256xbf16>
    %c0_103 = arith.constant 0 : index
    %c0_104 = arith.constant 0 : index
    %c0_105 = arith.constant 0 : index
    %353 = vector.load %arg5[%c0_103, %c0_104, %c0_105] : memref<2x256x512xbf16, #tpu.memory_space<vmem>>, vector<1x256x512xbf16>
    %354 = vector.shape_cast %353 : vector<1x256x512xbf16> to vector<256x512xbf16>
    %cst_106 = arith.constant dense<0.000000e+00> : vector<2x512xf32>
    %355 = tpu.matmul %352, %354, %cst_106 {dimension_numbers = #tpu.dot_dimension_numbers<[1], [0], [0], [1], [0, 0, 1, 1], [], []>} : vector<2x256xbf16>, vector<256x512xbf16>, vector<2x512xf32> -> vector<2x512xf32>
    %c0_107 = arith.constant 0 : index
    %c0_108 = arith.constant 0 : index
    %c0_109 = arith.constant 0 : index
    %356 = vector.load %arg6[%c0_107, %c0_108, %c0_109] : memref<2x1x512xf32, #tpu.memory_space<vmem>>, vector<1x1x512xf32>
    %357 = vector.shape_cast %356 : vector<1x1x512xf32> to vector<1x512xf32>
    %358 = vector.broadcast %357 : vector<1x512xf32> to vector<2x512xf32>
    %359 = arith.addf %355, %358 : vector<2x512xf32>
    %360 = vector.extract_strided_slice %359 {offsets = [0, 0], sizes = [2, 128], strides = [1, 1]} : vector<2x512xf32> to vector<2x128xf32>
    %361 = arith.negf %360 : vector<2x128xf32>
    %362 = math.exp %361 : vector<2x128xf32>
    %cst_110 = arith.constant 1.000000e+00 : f32
    %363 = vector.broadcast %cst_110 : f32 to vector<2x128xf32>
    %364 = arith.addf %363, %362 : vector<2x128xf32>
    %365 = arith.divf %363, %364 : vector<2x128xf32>
    %366 = vector.extract_strided_slice %359 {offsets = [0, 128], sizes = [2, 128], strides = [1, 1]} : vector<2x512xf32> to vector<2x128xf32>
    %367 = arith.negf %366 : vector<2x128xf32>
    %368 = math.exp %367 : vector<2x128xf32>
    %cst_111 = arith.constant 1.000000e+00 : f32
    %369 = vector.broadcast %cst_111 : f32 to vector<2x128xf32>
    %370 = arith.addf %369, %368 : vector<2x128xf32>
    %371 = arith.divf %369, %370 : vector<2x128xf32>
    %372 = vector.extract_strided_slice %359 {offsets = [0, 256], sizes = [2, 128], strides = [1, 1]} : vector<2x512xf32> to vector<2x128xf32>
    %373 = vector.extract_strided_slice %359 {offsets = [0, 384], sizes = [2, 128], strides = [1, 1]} : vector<2x512xf32> to vector<2x128xf32>
    %374 = arith.mulf %365, %373 : vector<2x128xf32>
    %375 = arith.addf %372, %374 : vector<2x128xf32>
    %376 = math.tanh %375 : vector<2x128xf32>
    %cst_112 = arith.constant 1.000000e+00 : f32
    %377 = vector.broadcast %cst_112 : f32 to vector<2x128xf32>
    %378 = arith.subf %377, %371 : vector<2x128xf32>
    %379 = arith.mulf %378, %376 : vector<2x128xf32>
    %380 = arith.mulf %371, %285 : vector<2x128xf32>
    %381 = arith.addf %379, %380 : vector<2x128xf32>
    %382 = tpu.concatenate %381, %316 in 1 : vector<2x128xf32>, vector<2x128xf32> -> vector<2x256xf32>
    %383 = arith.truncf %382 : vector<2x256xf32> to vector<2x256xbf16>
    %c1_113 = arith.constant 1 : index
    %c0_114 = arith.constant 0 : index
    %c0_115 = arith.constant 0 : index
    %384 = vector.load %arg5[%c1_113, %c0_114, %c0_115] : memref<2x256x512xbf16, #tpu.memory_space<vmem>>, vector<1x256x512xbf16>
    %385 = vector.shape_cast %384 : vector<1x256x512xbf16> to vector<256x512xbf16>
    %cst_116 = arith.constant dense<0.000000e+00> : vector<2x512xf32>
    %386 = tpu.matmul %383, %385, %cst_116 {dimension_numbers = #tpu.dot_dimension_numbers<[1], [0], [0], [1], [0, 0, 1, 1], [], []>} : vector<2x256xbf16>, vector<256x512xbf16>, vector<2x512xf32> -> vector<2x512xf32>
    %c1_117 = arith.constant 1 : index
    %c0_118 = arith.constant 0 : index
    %c0_119 = arith.constant 0 : index
    %387 = vector.load %arg6[%c1_117, %c0_118, %c0_119] : memref<2x1x512xf32, #tpu.memory_space<vmem>>, vector<1x1x512xf32>
    %388 = vector.shape_cast %387 : vector<1x1x512xf32> to vector<1x512xf32>
    %389 = vector.broadcast %388 : vector<1x512xf32> to vector<2x512xf32>
    %390 = arith.addf %386, %389 : vector<2x512xf32>
    %391 = vector.extract_strided_slice %390 {offsets = [0, 0], sizes = [2, 128], strides = [1, 1]} : vector<2x512xf32> to vector<2x128xf32>
    %392 = arith.negf %391 : vector<2x128xf32>
    %393 = math.exp %392 : vector<2x128xf32>
    %cst_120 = arith.constant 1.000000e+00 : f32
    %394 = vector.broadcast %cst_120 : f32 to vector<2x128xf32>
    %395 = arith.addf %394, %393 : vector<2x128xf32>
    %396 = arith.divf %394, %395 : vector<2x128xf32>
    %397 = vector.extract_strided_slice %390 {offsets = [0, 128], sizes = [2, 128], strides = [1, 1]} : vector<2x512xf32> to vector<2x128xf32>
    %398 = arith.negf %397 : vector<2x128xf32>
    %399 = math.exp %398 : vector<2x128xf32>
    %cst_121 = arith.constant 1.000000e+00 : f32
    %400 = vector.broadcast %cst_121 : f32 to vector<2x128xf32>
    %401 = arith.addf %400, %399 : vector<2x128xf32>
    %402 = arith.divf %400, %401 : vector<2x128xf32>
    %403 = vector.extract_strided_slice %390 {offsets = [0, 256], sizes = [2, 128], strides = [1, 1]} : vector<2x512xf32> to vector<2x128xf32>
    %404 = vector.extract_strided_slice %390 {offsets = [0, 384], sizes = [2, 128], strides = [1, 1]} : vector<2x512xf32> to vector<2x128xf32>
    %405 = arith.mulf %396, %404 : vector<2x128xf32>
    %406 = arith.addf %403, %405 : vector<2x128xf32>
    %407 = math.tanh %406 : vector<2x128xf32>
    %cst_122 = arith.constant 1.000000e+00 : f32
    %408 = vector.broadcast %cst_122 : f32 to vector<2x128xf32>
    %409 = arith.subf %408, %402 : vector<2x128xf32>
    %410 = arith.mulf %409, %407 : vector<2x128xf32>
    %411 = arith.mulf %402, %316 : vector<2x128xf32>
    %412 = arith.addf %410, %411 : vector<2x128xf32>
    %413 = arith.truncf %412 : vector<2x128xf32> to vector<2x128xbf16>
    %cst_123 = arith.constant dense<0.000000e+00> : vector<2x138xf32>
    %414 = tpu.matmul %413, %28, %cst_123 {dimension_numbers = #tpu.dot_dimension_numbers<[1], [0], [0], [1], [0, 0, 1, 1], [], []>} : vector<2x128xbf16>, vector<128x138xbf16>, vector<2x138xf32> -> vector<2x138xf32>
    %415 = vector.extract_strided_slice %414 {offsets = [0, 0], sizes = [2, 128], strides = [1, 1]} : vector<2x138xf32> to vector<2x128xf32>
    %416 = vector.broadcast %3 : vector<1x128xf32> to vector<2x128xf32>
    %417 = arith.addf %415, %416 : vector<2x128xf32>
    %418 = arith.negf %417 : vector<2x128xf32>
    %419 = math.exp %418 : vector<2x128xf32>
    %cst_124 = arith.constant 1.000000e+00 : f32
    %420 = vector.broadcast %cst_124 : f32 to vector<2x128xf32>
    %421 = arith.addf %420, %419 : vector<2x128xf32>
    %422 = arith.divf %420, %421 : vector<2x128xf32>
    %423 = vector.extract_strided_slice %414 {offsets = [0, 128], sizes = [2, 10], strides = [1, 1]} : vector<2x138xf32> to vector<2x10xf32>
    %424 = vector.extract_strided_slice %11 {offsets = [0, 4, 0], sizes = [2, 1, 128], strides = [1, 1, 1]} : vector<2x10x128xf32> to vector<2x1x128xf32>
    %425 = vector.shape_cast %424 : vector<2x1x128xf32> to vector<2x128xf32>
    %426 = arith.mulf %422, %425 : vector<2x128xf32>
    %cst_125 = arith.constant dense<0.000000e+00> : vector<2xf32>
    %427 = vector.multi_reduction <add>, %426, %cst_125 [1] : vector<2x128xf32> to vector<2xf32>
    %428 = vector.shape_cast %427 : vector<2xf32> to vector<2x1xf32>
    %429 = arith.addf %33, %423 : vector<2x10xf32>
    %cst_126 = arith.constant dense<0xFF800000> : vector<2xf32>
    %430 = vector.multi_reduction <maximumf>, %429, %cst_126 [1] : vector<2x10xf32> to vector<2xf32>
    %431 = vector.shape_cast %430 : vector<2xf32> to vector<2x1xf32>
    %432 = vector.broadcast %431 : vector<2x1xf32> to vector<2x10xf32>
    %433 = arith.subf %429, %432 : vector<2x10xf32>
    %434 = math.exp %433 : vector<2x10xf32>
    %cst_127 = arith.constant dense<0.000000e+00> : vector<2xf32>
    %435 = vector.multi_reduction <add>, %434, %cst_127 [1] : vector<2x10xf32> to vector<2xf32>
    %436 = vector.shape_cast %435 : vector<2xf32> to vector<2x1xf32>
    %437 = tpu.reciprocal %436 {approx = true} : vector<2x1xf32> -> vector<2x1xf32>
    %438 = vector.broadcast %437 : vector<2x1xf32> to vector<2x10xf32>
    %439 = arith.mulf %434, %438 : vector<2x10xf32>
    %440 = vector.shape_cast %439 : vector<2x10xf32> to vector<2x10x1xf32>
    %441 = vector.broadcast %440 : vector<2x10x1xf32> to vector<2x10x128xf32>
    %442 = arith.mulf %441, %44 : vector<2x10x128xf32>
    %cst_128 = arith.constant dense<0.000000e+00> : vector<2x128xf32>
    %443 = vector.multi_reduction <add>, %442, %cst_128 [1] : vector<2x10x128xf32> to vector<2x128xf32>
    %444 = arith.addf %37, %443 : vector<2x128xf32>
    %cst_129 = arith.constant 0.000000e+00 : f32
    %445 = vector.broadcast %cst_129 : f32 to vector<2x128xf32>
    %446 = arith.maximumf %444, %445 : vector<2x128xf32>
    %447 = tpu.concatenate %446, %381 in 1 : vector<2x128xf32>, vector<2x128xf32> -> vector<2x256xf32>
    %448 = arith.truncf %447 : vector<2x256xf32> to vector<2x256xbf16>
    %c0_130 = arith.constant 0 : index
    %c0_131 = arith.constant 0 : index
    %c0_132 = arith.constant 0 : index
    %449 = vector.load %arg5[%c0_130, %c0_131, %c0_132] : memref<2x256x512xbf16, #tpu.memory_space<vmem>>, vector<1x256x512xbf16>
    %450 = vector.shape_cast %449 : vector<1x256x512xbf16> to vector<256x512xbf16>
    %cst_133 = arith.constant dense<0.000000e+00> : vector<2x512xf32>
    %451 = tpu.matmul %448, %450, %cst_133 {dimension_numbers = #tpu.dot_dimension_numbers<[1], [0], [0], [1], [0, 0, 1, 1], [], []>} : vector<2x256xbf16>, vector<256x512xbf16>, vector<2x512xf32> -> vector<2x512xf32>
    %c0_134 = arith.constant 0 : index
    %c0_135 = arith.constant 0 : index
    %c0_136 = arith.constant 0 : index
    %452 = vector.load %arg6[%c0_134, %c0_135, %c0_136] : memref<2x1x512xf32, #tpu.memory_space<vmem>>, vector<1x1x512xf32>
    %453 = vector.shape_cast %452 : vector<1x1x512xf32> to vector<1x512xf32>
    %454 = vector.broadcast %453 : vector<1x512xf32> to vector<2x512xf32>
    %455 = arith.addf %451, %454 : vector<2x512xf32>
    %456 = vector.extract_strided_slice %455 {offsets = [0, 0], sizes = [2, 128], strides = [1, 1]} : vector<2x512xf32> to vector<2x128xf32>
    %457 = arith.negf %456 : vector<2x128xf32>
    %458 = math.exp %457 : vector<2x128xf32>
    %cst_137 = arith.constant 1.000000e+00 : f32
    %459 = vector.broadcast %cst_137 : f32 to vector<2x128xf32>
    %460 = arith.addf %459, %458 : vector<2x128xf32>
    %461 = arith.divf %459, %460 : vector<2x128xf32>
    %462 = vector.extract_strided_slice %455 {offsets = [0, 128], sizes = [2, 128], strides = [1, 1]} : vector<2x512xf32> to vector<2x128xf32>
    %463 = arith.negf %462 : vector<2x128xf32>
    %464 = math.exp %463 : vector<2x128xf32>
    %cst_138 = arith.constant 1.000000e+00 : f32
    %465 = vector.broadcast %cst_138 : f32 to vector<2x128xf32>
    %466 = arith.addf %465, %464 : vector<2x128xf32>
    %467 = arith.divf %465, %466 : vector<2x128xf32>
    %468 = vector.extract_strided_slice %455 {offsets = [0, 256], sizes = [2, 128], strides = [1, 1]} : vector<2x512xf32> to vector<2x128xf32>
    %469 = vector.extract_strided_slice %455 {offsets = [0, 384], sizes = [2, 128], strides = [1, 1]} : vector<2x512xf32> to vector<2x128xf32>
    %470 = arith.mulf %461, %469 : vector<2x128xf32>
    %471 = arith.addf %468, %470 : vector<2x128xf32>
    %472 = math.tanh %471 : vector<2x128xf32>
    %cst_139 = arith.constant 1.000000e+00 : f32
    %473 = vector.broadcast %cst_139 : f32 to vector<2x128xf32>
    %474 = arith.subf %473, %467 : vector<2x128xf32>
    %475 = arith.mulf %474, %472 : vector<2x128xf32>
    %476 = arith.mulf %467, %381 : vector<2x128xf32>
    %477 = arith.addf %475, %476 : vector<2x128xf32>
    %478 = tpu.concatenate %477, %412 in 1 : vector<2x128xf32>, vector<2x128xf32> -> vector<2x256xf32>
    %479 = arith.truncf %478 : vector<2x256xf32> to vector<2x256xbf16>
    %c1_140 = arith.constant 1 : index
    %c0_141 = arith.constant 0 : index
    %c0_142 = arith.constant 0 : index
    %480 = vector.load %arg5[%c1_140, %c0_141, %c0_142] : memref<2x256x512xbf16, #tpu.memory_space<vmem>>, vector<1x256x512xbf16>
    %481 = vector.shape_cast %480 : vector<1x256x512xbf16> to vector<256x512xbf16>
    %cst_143 = arith.constant dense<0.000000e+00> : vector<2x512xf32>
    %482 = tpu.matmul %479, %481, %cst_143 {dimension_numbers = #tpu.dot_dimension_numbers<[1], [0], [0], [1], [0, 0, 1, 1], [], []>} : vector<2x256xbf16>, vector<256x512xbf16>, vector<2x512xf32> -> vector<2x512xf32>
    %c1_144 = arith.constant 1 : index
    %c0_145 = arith.constant 0 : index
    %c0_146 = arith.constant 0 : index
    %483 = vector.load %arg6[%c1_144, %c0_145, %c0_146] : memref<2x1x512xf32, #tpu.memory_space<vmem>>, vector<1x1x512xf32>
    %484 = vector.shape_cast %483 : vector<1x1x512xf32> to vector<1x512xf32>
    %485 = vector.broadcast %484 : vector<1x512xf32> to vector<2x512xf32>
    %486 = arith.addf %482, %485 : vector<2x512xf32>
    %487 = vector.extract_strided_slice %486 {offsets = [0, 0], sizes = [2, 128], strides = [1, 1]} : vector<2x512xf32> to vector<2x128xf32>
    %488 = arith.negf %487 : vector<2x128xf32>
    %489 = math.exp %488 : vector<2x128xf32>
    %cst_147 = arith.constant 1.000000e+00 : f32
    %490 = vector.broadcast %cst_147 : f32 to vector<2x128xf32>
    %491 = arith.addf %490, %489 : vector<2x128xf32>
    %492 = arith.divf %490, %491 : vector<2x128xf32>
    %493 = vector.extract_strided_slice %486 {offsets = [0, 128], sizes = [2, 128], strides = [1, 1]} : vector<2x512xf32> to vector<2x128xf32>
    %494 = arith.negf %493 : vector<2x128xf32>
    %495 = math.exp %494 : vector<2x128xf32>
    %cst_148 = arith.constant 1.000000e+00 : f32
    %496 = vector.broadcast %cst_148 : f32 to vector<2x128xf32>
    %497 = arith.addf %496, %495 : vector<2x128xf32>
    %498 = arith.divf %496, %497 : vector<2x128xf32>
    %499 = vector.extract_strided_slice %486 {offsets = [0, 256], sizes = [2, 128], strides = [1, 1]} : vector<2x512xf32> to vector<2x128xf32>
    %500 = vector.extract_strided_slice %486 {offsets = [0, 384], sizes = [2, 128], strides = [1, 1]} : vector<2x512xf32> to vector<2x128xf32>
    %501 = arith.mulf %492, %500 : vector<2x128xf32>
    %502 = arith.addf %499, %501 : vector<2x128xf32>
    %503 = math.tanh %502 : vector<2x128xf32>
    %cst_149 = arith.constant 1.000000e+00 : f32
    %504 = vector.broadcast %cst_149 : f32 to vector<2x128xf32>
    %505 = arith.subf %504, %498 : vector<2x128xf32>
    %506 = arith.mulf %505, %503 : vector<2x128xf32>
    %507 = arith.mulf %498, %412 : vector<2x128xf32>
    %508 = arith.addf %506, %507 : vector<2x128xf32>
    %509 = arith.truncf %508 : vector<2x128xf32> to vector<2x128xbf16>
    %cst_150 = arith.constant dense<0.000000e+00> : vector<2x138xf32>
    %510 = tpu.matmul %509, %28, %cst_150 {dimension_numbers = #tpu.dot_dimension_numbers<[1], [0], [0], [1], [0, 0, 1, 1], [], []>} : vector<2x128xbf16>, vector<128x138xbf16>, vector<2x138xf32> -> vector<2x138xf32>
    %511 = vector.extract_strided_slice %510 {offsets = [0, 0], sizes = [2, 128], strides = [1, 1]} : vector<2x138xf32> to vector<2x128xf32>
    %512 = vector.broadcast %3 : vector<1x128xf32> to vector<2x128xf32>
    %513 = arith.addf %511, %512 : vector<2x128xf32>
    %514 = arith.negf %513 : vector<2x128xf32>
    %515 = math.exp %514 : vector<2x128xf32>
    %cst_151 = arith.constant 1.000000e+00 : f32
    %516 = vector.broadcast %cst_151 : f32 to vector<2x128xf32>
    %517 = arith.addf %516, %515 : vector<2x128xf32>
    %518 = arith.divf %516, %517 : vector<2x128xf32>
    %519 = vector.extract_strided_slice %510 {offsets = [0, 128], sizes = [2, 10], strides = [1, 1]} : vector<2x138xf32> to vector<2x10xf32>
    %520 = vector.extract_strided_slice %11 {offsets = [0, 5, 0], sizes = [2, 1, 128], strides = [1, 1, 1]} : vector<2x10x128xf32> to vector<2x1x128xf32>
    %521 = vector.shape_cast %520 : vector<2x1x128xf32> to vector<2x128xf32>
    %522 = arith.mulf %518, %521 : vector<2x128xf32>
    %cst_152 = arith.constant dense<0.000000e+00> : vector<2xf32>
    %523 = vector.multi_reduction <add>, %522, %cst_152 [1] : vector<2x128xf32> to vector<2xf32>
    %524 = vector.shape_cast %523 : vector<2xf32> to vector<2x1xf32>
    %525 = arith.addf %33, %519 : vector<2x10xf32>
    %cst_153 = arith.constant dense<0xFF800000> : vector<2xf32>
    %526 = vector.multi_reduction <maximumf>, %525, %cst_153 [1] : vector<2x10xf32> to vector<2xf32>
    %527 = vector.shape_cast %526 : vector<2xf32> to vector<2x1xf32>
    %528 = vector.broadcast %527 : vector<2x1xf32> to vector<2x10xf32>
    %529 = arith.subf %525, %528 : vector<2x10xf32>
    %530 = math.exp %529 : vector<2x10xf32>
    %cst_154 = arith.constant dense<0.000000e+00> : vector<2xf32>
    %531 = vector.multi_reduction <add>, %530, %cst_154 [1] : vector<2x10xf32> to vector<2xf32>
    %532 = vector.shape_cast %531 : vector<2xf32> to vector<2x1xf32>
    %533 = tpu.reciprocal %532 {approx = true} : vector<2x1xf32> -> vector<2x1xf32>
    %534 = vector.broadcast %533 : vector<2x1xf32> to vector<2x10xf32>
    %535 = arith.mulf %530, %534 : vector<2x10xf32>
    %536 = vector.shape_cast %535 : vector<2x10xf32> to vector<2x10x1xf32>
    %537 = vector.broadcast %536 : vector<2x10x1xf32> to vector<2x10x128xf32>
    %538 = arith.mulf %537, %44 : vector<2x10x128xf32>
    %cst_155 = arith.constant dense<0.000000e+00> : vector<2x128xf32>
    %539 = vector.multi_reduction <add>, %538, %cst_155 [1] : vector<2x10x128xf32> to vector<2x128xf32>
    %540 = arith.addf %37, %539 : vector<2x128xf32>
    %cst_156 = arith.constant 0.000000e+00 : f32
    %541 = vector.broadcast %cst_156 : f32 to vector<2x128xf32>
    %542 = arith.maximumf %540, %541 : vector<2x128xf32>
    %543 = tpu.concatenate %542, %477 in 1 : vector<2x128xf32>, vector<2x128xf32> -> vector<2x256xf32>
    %544 = arith.truncf %543 : vector<2x256xf32> to vector<2x256xbf16>
    %c0_157 = arith.constant 0 : index
    %c0_158 = arith.constant 0 : index
    %c0_159 = arith.constant 0 : index
    %545 = vector.load %arg5[%c0_157, %c0_158, %c0_159] : memref<2x256x512xbf16, #tpu.memory_space<vmem>>, vector<1x256x512xbf16>
    %546 = vector.shape_cast %545 : vector<1x256x512xbf16> to vector<256x512xbf16>
    %cst_160 = arith.constant dense<0.000000e+00> : vector<2x512xf32>
    %547 = tpu.matmul %544, %546, %cst_160 {dimension_numbers = #tpu.dot_dimension_numbers<[1], [0], [0], [1], [0, 0, 1, 1], [], []>} : vector<2x256xbf16>, vector<256x512xbf16>, vector<2x512xf32> -> vector<2x512xf32>
    %c0_161 = arith.constant 0 : index
    %c0_162 = arith.constant 0 : index
    %c0_163 = arith.constant 0 : index
    %548 = vector.load %arg6[%c0_161, %c0_162, %c0_163] : memref<2x1x512xf32, #tpu.memory_space<vmem>>, vector<1x1x512xf32>
    %549 = vector.shape_cast %548 : vector<1x1x512xf32> to vector<1x512xf32>
    %550 = vector.broadcast %549 : vector<1x512xf32> to vector<2x512xf32>
    %551 = arith.addf %547, %550 : vector<2x512xf32>
    %552 = vector.extract_strided_slice %551 {offsets = [0, 0], sizes = [2, 128], strides = [1, 1]} : vector<2x512xf32> to vector<2x128xf32>
    %553 = arith.negf %552 : vector<2x128xf32>
    %554 = math.exp %553 : vector<2x128xf32>
    %cst_164 = arith.constant 1.000000e+00 : f32
    %555 = vector.broadcast %cst_164 : f32 to vector<2x128xf32>
    %556 = arith.addf %555, %554 : vector<2x128xf32>
    %557 = arith.divf %555, %556 : vector<2x128xf32>
    %558 = vector.extract_strided_slice %551 {offsets = [0, 128], sizes = [2, 128], strides = [1, 1]} : vector<2x512xf32> to vector<2x128xf32>
    %559 = arith.negf %558 : vector<2x128xf32>
    %560 = math.exp %559 : vector<2x128xf32>
    %cst_165 = arith.constant 1.000000e+00 : f32
    %561 = vector.broadcast %cst_165 : f32 to vector<2x128xf32>
    %562 = arith.addf %561, %560 : vector<2x128xf32>
    %563 = arith.divf %561, %562 : vector<2x128xf32>
    %564 = vector.extract_strided_slice %551 {offsets = [0, 256], sizes = [2, 128], strides = [1, 1]} : vector<2x512xf32> to vector<2x128xf32>
    %565 = vector.extract_strided_slice %551 {offsets = [0, 384], sizes = [2, 128], strides = [1, 1]} : vector<2x512xf32> to vector<2x128xf32>
    %566 = arith.mulf %557, %565 : vector<2x128xf32>
    %567 = arith.addf %564, %566 : vector<2x128xf32>
    %568 = math.tanh %567 : vector<2x128xf32>
    %cst_166 = arith.constant 1.000000e+00 : f32
    %569 = vector.broadcast %cst_166 : f32 to vector<2x128xf32>
    %570 = arith.subf %569, %563 : vector<2x128xf32>
    %571 = arith.mulf %570, %568 : vector<2x128xf32>
    %572 = arith.mulf %563, %477 : vector<2x128xf32>
    %573 = arith.addf %571, %572 : vector<2x128xf32>
    %574 = tpu.concatenate %573, %508 in 1 : vector<2x128xf32>, vector<2x128xf32> -> vector<2x256xf32>
    %575 = arith.truncf %574 : vector<2x256xf32> to vector<2x256xbf16>
    %c1_167 = arith.constant 1 : index
    %c0_168 = arith.constant 0 : index
    %c0_169 = arith.constant 0 : index
    %576 = vector.load %arg5[%c1_167, %c0_168, %c0_169] : memref<2x256x512xbf16, #tpu.memory_space<vmem>>, vector<1x256x512xbf16>
    %577 = vector.shape_cast %576 : vector<1x256x512xbf16> to vector<256x512xbf16>
    %cst_170 = arith.constant dense<0.000000e+00> : vector<2x512xf32>
    %578 = tpu.matmul %575, %577, %cst_170 {dimension_numbers = #tpu.dot_dimension_numbers<[1], [0], [0], [1], [0, 0, 1, 1], [], []>} : vector<2x256xbf16>, vector<256x512xbf16>, vector<2x512xf32> -> vector<2x512xf32>
    %c1_171 = arith.constant 1 : index
    %c0_172 = arith.constant 0 : index
    %c0_173 = arith.constant 0 : index
    %579 = vector.load %arg6[%c1_171, %c0_172, %c0_173] : memref<2x1x512xf32, #tpu.memory_space<vmem>>, vector<1x1x512xf32>
    %580 = vector.shape_cast %579 : vector<1x1x512xf32> to vector<1x512xf32>
    %581 = vector.broadcast %580 : vector<1x512xf32> to vector<2x512xf32>
    %582 = arith.addf %578, %581 : vector<2x512xf32>
    %583 = vector.extract_strided_slice %582 {offsets = [0, 0], sizes = [2, 128], strides = [1, 1]} : vector<2x512xf32> to vector<2x128xf32>
    %584 = arith.negf %583 : vector<2x128xf32>
    %585 = math.exp %584 : vector<2x128xf32>
    %cst_174 = arith.constant 1.000000e+00 : f32
    %586 = vector.broadcast %cst_174 : f32 to vector<2x128xf32>
    %587 = arith.addf %586, %585 : vector<2x128xf32>
    %588 = arith.divf %586, %587 : vector<2x128xf32>
    %589 = vector.extract_strided_slice %582 {offsets = [0, 128], sizes = [2, 128], strides = [1, 1]} : vector<2x512xf32> to vector<2x128xf32>
    %590 = arith.negf %589 : vector<2x128xf32>
    %591 = math.exp %590 : vector<2x128xf32>
    %cst_175 = arith.constant 1.000000e+00 : f32
    %592 = vector.broadcast %cst_175 : f32 to vector<2x128xf32>
    %593 = arith.addf %592, %591 : vector<2x128xf32>
    %594 = arith.divf %592, %593 : vector<2x128xf32>
    %595 = vector.extract_strided_slice %582 {offsets = [0, 256], sizes = [2, 128], strides = [1, 1]} : vector<2x512xf32> to vector<2x128xf32>
    %596 = vector.extract_strided_slice %582 {offsets = [0, 384], sizes = [2, 128], strides = [1, 1]} : vector<2x512xf32> to vector<2x128xf32>
    %597 = arith.mulf %588, %596 : vector<2x128xf32>
    %598 = arith.addf %595, %597 : vector<2x128xf32>
    %599 = math.tanh %598 : vector<2x128xf32>
    %cst_176 = arith.constant 1.000000e+00 : f32
    %600 = vector.broadcast %cst_176 : f32 to vector<2x128xf32>
    %601 = arith.subf %600, %594 : vector<2x128xf32>
    %602 = arith.mulf %601, %599 : vector<2x128xf32>
    %603 = arith.mulf %594, %508 : vector<2x128xf32>
    %604 = arith.addf %602, %603 : vector<2x128xf32>
    %605 = arith.truncf %604 : vector<2x128xf32> to vector<2x128xbf16>
    %cst_177 = arith.constant dense<0.000000e+00> : vector<2x138xf32>
    %606 = tpu.matmul %605, %28, %cst_177 {dimension_numbers = #tpu.dot_dimension_numbers<[1], [0], [0], [1], [0, 0, 1, 1], [], []>} : vector<2x128xbf16>, vector<128x138xbf16>, vector<2x138xf32> -> vector<2x138xf32>
    %607 = vector.extract_strided_slice %606 {offsets = [0, 0], sizes = [2, 128], strides = [1, 1]} : vector<2x138xf32> to vector<2x128xf32>
    %608 = vector.broadcast %3 : vector<1x128xf32> to vector<2x128xf32>
    %609 = arith.addf %607, %608 : vector<2x128xf32>
    %610 = arith.negf %609 : vector<2x128xf32>
    %611 = math.exp %610 : vector<2x128xf32>
    %cst_178 = arith.constant 1.000000e+00 : f32
    %612 = vector.broadcast %cst_178 : f32 to vector<2x128xf32>
    %613 = arith.addf %612, %611 : vector<2x128xf32>
    %614 = arith.divf %612, %613 : vector<2x128xf32>
    %615 = vector.extract_strided_slice %606 {offsets = [0, 128], sizes = [2, 10], strides = [1, 1]} : vector<2x138xf32> to vector<2x10xf32>
    %616 = vector.extract_strided_slice %11 {offsets = [0, 6, 0], sizes = [2, 1, 128], strides = [1, 1, 1]} : vector<2x10x128xf32> to vector<2x1x128xf32>
    %617 = vector.shape_cast %616 : vector<2x1x128xf32> to vector<2x128xf32>
    %618 = arith.mulf %614, %617 : vector<2x128xf32>
    %cst_179 = arith.constant dense<0.000000e+00> : vector<2xf32>
    %619 = vector.multi_reduction <add>, %618, %cst_179 [1] : vector<2x128xf32> to vector<2xf32>
    %620 = vector.shape_cast %619 : vector<2xf32> to vector<2x1xf32>
    %621 = arith.addf %33, %615 : vector<2x10xf32>
    %cst_180 = arith.constant dense<0xFF800000> : vector<2xf32>
    %622 = vector.multi_reduction <maximumf>, %621, %cst_180 [1] : vector<2x10xf32> to vector<2xf32>
    %623 = vector.shape_cast %622 : vector<2xf32> to vector<2x1xf32>
    %624 = vector.broadcast %623 : vector<2x1xf32> to vector<2x10xf32>
    %625 = arith.subf %621, %624 : vector<2x10xf32>
    %626 = math.exp %625 : vector<2x10xf32>
    %cst_181 = arith.constant dense<0.000000e+00> : vector<2xf32>
    %627 = vector.multi_reduction <add>, %626, %cst_181 [1] : vector<2x10xf32> to vector<2xf32>
    %628 = vector.shape_cast %627 : vector<2xf32> to vector<2x1xf32>
    %629 = tpu.reciprocal %628 {approx = true} : vector<2x1xf32> -> vector<2x1xf32>
    %630 = vector.broadcast %629 : vector<2x1xf32> to vector<2x10xf32>
    %631 = arith.mulf %626, %630 : vector<2x10xf32>
    %632 = vector.shape_cast %631 : vector<2x10xf32> to vector<2x10x1xf32>
    %633 = vector.broadcast %632 : vector<2x10x1xf32> to vector<2x10x128xf32>
    %634 = arith.mulf %633, %44 : vector<2x10x128xf32>
    %cst_182 = arith.constant dense<0.000000e+00> : vector<2x128xf32>
    %635 = vector.multi_reduction <add>, %634, %cst_182 [1] : vector<2x10x128xf32> to vector<2x128xf32>
    %636 = arith.addf %37, %635 : vector<2x128xf32>
    %cst_183 = arith.constant 0.000000e+00 : f32
    %637 = vector.broadcast %cst_183 : f32 to vector<2x128xf32>
    %638 = arith.maximumf %636, %637 : vector<2x128xf32>
    %639 = tpu.concatenate %638, %573 in 1 : vector<2x128xf32>, vector<2x128xf32> -> vector<2x256xf32>
    %640 = arith.truncf %639 : vector<2x256xf32> to vector<2x256xbf16>
    %c0_184 = arith.constant 0 : index
    %c0_185 = arith.constant 0 : index
    %c0_186 = arith.constant 0 : index
    %641 = vector.load %arg5[%c0_184, %c0_185, %c0_186] : memref<2x256x512xbf16, #tpu.memory_space<vmem>>, vector<1x256x512xbf16>
    %642 = vector.shape_cast %641 : vector<1x256x512xbf16> to vector<256x512xbf16>
    %cst_187 = arith.constant dense<0.000000e+00> : vector<2x512xf32>
    %643 = tpu.matmul %640, %642, %cst_187 {dimension_numbers = #tpu.dot_dimension_numbers<[1], [0], [0], [1], [0, 0, 1, 1], [], []>} : vector<2x256xbf16>, vector<256x512xbf16>, vector<2x512xf32> -> vector<2x512xf32>
    %c0_188 = arith.constant 0 : index
    %c0_189 = arith.constant 0 : index
    %c0_190 = arith.constant 0 : index
    %644 = vector.load %arg6[%c0_188, %c0_189, %c0_190] : memref<2x1x512xf32, #tpu.memory_space<vmem>>, vector<1x1x512xf32>
    %645 = vector.shape_cast %644 : vector<1x1x512xf32> to vector<1x512xf32>
    %646 = vector.broadcast %645 : vector<1x512xf32> to vector<2x512xf32>
    %647 = arith.addf %643, %646 : vector<2x512xf32>
    %648 = vector.extract_strided_slice %647 {offsets = [0, 0], sizes = [2, 128], strides = [1, 1]} : vector<2x512xf32> to vector<2x128xf32>
    %649 = arith.negf %648 : vector<2x128xf32>
    %650 = math.exp %649 : vector<2x128xf32>
    %cst_191 = arith.constant 1.000000e+00 : f32
    %651 = vector.broadcast %cst_191 : f32 to vector<2x128xf32>
    %652 = arith.addf %651, %650 : vector<2x128xf32>
    %653 = arith.divf %651, %652 : vector<2x128xf32>
    %654 = vector.extract_strided_slice %647 {offsets = [0, 128], sizes = [2, 128], strides = [1, 1]} : vector<2x512xf32> to vector<2x128xf32>
    %655 = arith.negf %654 : vector<2x128xf32>
    %656 = math.exp %655 : vector<2x128xf32>
    %cst_192 = arith.constant 1.000000e+00 : f32
    %657 = vector.broadcast %cst_192 : f32 to vector<2x128xf32>
    %658 = arith.addf %657, %656 : vector<2x128xf32>
    %659 = arith.divf %657, %658 : vector<2x128xf32>
    %660 = vector.extract_strided_slice %647 {offsets = [0, 256], sizes = [2, 128], strides = [1, 1]} : vector<2x512xf32> to vector<2x128xf32>
    %661 = vector.extract_strided_slice %647 {offsets = [0, 384], sizes = [2, 128], strides = [1, 1]} : vector<2x512xf32> to vector<2x128xf32>
    %662 = arith.mulf %653, %661 : vector<2x128xf32>
    %663 = arith.addf %660, %662 : vector<2x128xf32>
    %664 = math.tanh %663 : vector<2x128xf32>
    %cst_193 = arith.constant 1.000000e+00 : f32
    %665 = vector.broadcast %cst_193 : f32 to vector<2x128xf32>
    %666 = arith.subf %665, %659 : vector<2x128xf32>
    %667 = arith.mulf %666, %664 : vector<2x128xf32>
    %668 = arith.mulf %659, %573 : vector<2x128xf32>
    %669 = arith.addf %667, %668 : vector<2x128xf32>
    %670 = tpu.concatenate %669, %604 in 1 : vector<2x128xf32>, vector<2x128xf32> -> vector<2x256xf32>
    %671 = arith.truncf %670 : vector<2x256xf32> to vector<2x256xbf16>
    %c1_194 = arith.constant 1 : index
    %c0_195 = arith.constant 0 : index
    %c0_196 = arith.constant 0 : index
    %672 = vector.load %arg5[%c1_194, %c0_195, %c0_196] : memref<2x256x512xbf16, #tpu.memory_space<vmem>>, vector<1x256x512xbf16>
    %673 = vector.shape_cast %672 : vector<1x256x512xbf16> to vector<256x512xbf16>
    %cst_197 = arith.constant dense<0.000000e+00> : vector<2x512xf32>
    %674 = tpu.matmul %671, %673, %cst_197 {dimension_numbers = #tpu.dot_dimension_numbers<[1], [0], [0], [1], [0, 0, 1, 1], [], []>} : vector<2x256xbf16>, vector<256x512xbf16>, vector<2x512xf32> -> vector<2x512xf32>
    %c1_198 = arith.constant 1 : index
    %c0_199 = arith.constant 0 : index
    %c0_200 = arith.constant 0 : index
    %675 = vector.load %arg6[%c1_198, %c0_199, %c0_200] : memref<2x1x512xf32, #tpu.memory_space<vmem>>, vector<1x1x512xf32>
    %676 = vector.shape_cast %675 : vector<1x1x512xf32> to vector<1x512xf32>
    %677 = vector.broadcast %676 : vector<1x512xf32> to vector<2x512xf32>
    %678 = arith.addf %674, %677 : vector<2x512xf32>
    %679 = vector.extract_strided_slice %678 {offsets = [0, 0], sizes = [2, 128], strides = [1, 1]} : vector<2x512xf32> to vector<2x128xf32>
    %680 = arith.negf %679 : vector<2x128xf32>
    %681 = math.exp %680 : vector<2x128xf32>
    %cst_201 = arith.constant 1.000000e+00 : f32
    %682 = vector.broadcast %cst_201 : f32 to vector<2x128xf32>
    %683 = arith.addf %682, %681 : vector<2x128xf32>
    %684 = arith.divf %682, %683 : vector<2x128xf32>
    %685 = vector.extract_strided_slice %678 {offsets = [0, 128], sizes = [2, 128], strides = [1, 1]} : vector<2x512xf32> to vector<2x128xf32>
    %686 = arith.negf %685 : vector<2x128xf32>
    %687 = math.exp %686 : vector<2x128xf32>
    %cst_202 = arith.constant 1.000000e+00 : f32
    %688 = vector.broadcast %cst_202 : f32 to vector<2x128xf32>
    %689 = arith.addf %688, %687 : vector<2x128xf32>
    %690 = arith.divf %688, %689 : vector<2x128xf32>
    %691 = vector.extract_strided_slice %678 {offsets = [0, 256], sizes = [2, 128], strides = [1, 1]} : vector<2x512xf32> to vector<2x128xf32>
    %692 = vector.extract_strided_slice %678 {offsets = [0, 384], sizes = [2, 128], strides = [1, 1]} : vector<2x512xf32> to vector<2x128xf32>
    %693 = arith.mulf %684, %692 : vector<2x128xf32>
    %694 = arith.addf %691, %693 : vector<2x128xf32>
    %695 = math.tanh %694 : vector<2x128xf32>
    %cst_203 = arith.constant 1.000000e+00 : f32
    %696 = vector.broadcast %cst_203 : f32 to vector<2x128xf32>
    %697 = arith.subf %696, %690 : vector<2x128xf32>
    %698 = arith.mulf %697, %695 : vector<2x128xf32>
    %699 = arith.mulf %690, %604 : vector<2x128xf32>
    %700 = arith.addf %698, %699 : vector<2x128xf32>
    %701 = arith.truncf %700 : vector<2x128xf32> to vector<2x128xbf16>
    %cst_204 = arith.constant dense<0.000000e+00> : vector<2x138xf32>
    %702 = tpu.matmul %701, %28, %cst_204 {dimension_numbers = #tpu.dot_dimension_numbers<[1], [0], [0], [1], [0, 0, 1, 1], [], []>} : vector<2x128xbf16>, vector<128x138xbf16>, vector<2x138xf32> -> vector<2x138xf32>
    %703 = vector.extract_strided_slice %702 {offsets = [0, 0], sizes = [2, 128], strides = [1, 1]} : vector<2x138xf32> to vector<2x128xf32>
    %704 = vector.broadcast %3 : vector<1x128xf32> to vector<2x128xf32>
    %705 = arith.addf %703, %704 : vector<2x128xf32>
    %706 = arith.negf %705 : vector<2x128xf32>
    %707 = math.exp %706 : vector<2x128xf32>
    %cst_205 = arith.constant 1.000000e+00 : f32
    %708 = vector.broadcast %cst_205 : f32 to vector<2x128xf32>
    %709 = arith.addf %708, %707 : vector<2x128xf32>
    %710 = arith.divf %708, %709 : vector<2x128xf32>
    %711 = vector.extract_strided_slice %702 {offsets = [0, 128], sizes = [2, 10], strides = [1, 1]} : vector<2x138xf32> to vector<2x10xf32>
    %712 = vector.extract_strided_slice %11 {offsets = [0, 7, 0], sizes = [2, 1, 128], strides = [1, 1, 1]} : vector<2x10x128xf32> to vector<2x1x128xf32>
    %713 = vector.shape_cast %712 : vector<2x1x128xf32> to vector<2x128xf32>
    %714 = arith.mulf %710, %713 : vector<2x128xf32>
    %cst_206 = arith.constant dense<0.000000e+00> : vector<2xf32>
    %715 = vector.multi_reduction <add>, %714, %cst_206 [1] : vector<2x128xf32> to vector<2xf32>
    %716 = vector.shape_cast %715 : vector<2xf32> to vector<2x1xf32>
    %717 = arith.addf %33, %711 : vector<2x10xf32>
    %cst_207 = arith.constant dense<0xFF800000> : vector<2xf32>
    %718 = vector.multi_reduction <maximumf>, %717, %cst_207 [1] : vector<2x10xf32> to vector<2xf32>
    %719 = vector.shape_cast %718 : vector<2xf32> to vector<2x1xf32>
    %720 = vector.broadcast %719 : vector<2x1xf32> to vector<2x10xf32>
    %721 = arith.subf %717, %720 : vector<2x10xf32>
    %722 = math.exp %721 : vector<2x10xf32>
    %cst_208 = arith.constant dense<0.000000e+00> : vector<2xf32>
    %723 = vector.multi_reduction <add>, %722, %cst_208 [1] : vector<2x10xf32> to vector<2xf32>
    %724 = vector.shape_cast %723 : vector<2xf32> to vector<2x1xf32>
    %725 = tpu.reciprocal %724 {approx = true} : vector<2x1xf32> -> vector<2x1xf32>
    %726 = vector.broadcast %725 : vector<2x1xf32> to vector<2x10xf32>
    %727 = arith.mulf %722, %726 : vector<2x10xf32>
    %728 = vector.shape_cast %727 : vector<2x10xf32> to vector<2x10x1xf32>
    %729 = vector.broadcast %728 : vector<2x10x1xf32> to vector<2x10x128xf32>
    %730 = arith.mulf %729, %44 : vector<2x10x128xf32>
    %cst_209 = arith.constant dense<0.000000e+00> : vector<2x128xf32>
    %731 = vector.multi_reduction <add>, %730, %cst_209 [1] : vector<2x10x128xf32> to vector<2x128xf32>
    %732 = arith.addf %37, %731 : vector<2x128xf32>
    %cst_210 = arith.constant 0.000000e+00 : f32
    %733 = vector.broadcast %cst_210 : f32 to vector<2x128xf32>
    %734 = arith.maximumf %732, %733 : vector<2x128xf32>
    %735 = tpu.concatenate %734, %669 in 1 : vector<2x128xf32>, vector<2x128xf32> -> vector<2x256xf32>
    %736 = arith.truncf %735 : vector<2x256xf32> to vector<2x256xbf16>
    %c0_211 = arith.constant 0 : index
    %c0_212 = arith.constant 0 : index
    %c0_213 = arith.constant 0 : index
    %737 = vector.load %arg5[%c0_211, %c0_212, %c0_213] : memref<2x256x512xbf16, #tpu.memory_space<vmem>>, vector<1x256x512xbf16>
    %738 = vector.shape_cast %737 : vector<1x256x512xbf16> to vector<256x512xbf16>
    %cst_214 = arith.constant dense<0.000000e+00> : vector<2x512xf32>
    %739 = tpu.matmul %736, %738, %cst_214 {dimension_numbers = #tpu.dot_dimension_numbers<[1], [0], [0], [1], [0, 0, 1, 1], [], []>} : vector<2x256xbf16>, vector<256x512xbf16>, vector<2x512xf32> -> vector<2x512xf32>
    %c0_215 = arith.constant 0 : index
    %c0_216 = arith.constant 0 : index
    %c0_217 = arith.constant 0 : index
    %740 = vector.load %arg6[%c0_215, %c0_216, %c0_217] : memref<2x1x512xf32, #tpu.memory_space<vmem>>, vector<1x1x512xf32>
    %741 = vector.shape_cast %740 : vector<1x1x512xf32> to vector<1x512xf32>
    %742 = vector.broadcast %741 : vector<1x512xf32> to vector<2x512xf32>
    %743 = arith.addf %739, %742 : vector<2x512xf32>
    %744 = vector.extract_strided_slice %743 {offsets = [0, 0], sizes = [2, 128], strides = [1, 1]} : vector<2x512xf32> to vector<2x128xf32>
    %745 = arith.negf %744 : vector<2x128xf32>
    %746 = math.exp %745 : vector<2x128xf32>
    %cst_218 = arith.constant 1.000000e+00 : f32
    %747 = vector.broadcast %cst_218 : f32 to vector<2x128xf32>
    %748 = arith.addf %747, %746 : vector<2x128xf32>
    %749 = arith.divf %747, %748 : vector<2x128xf32>
    %750 = vector.extract_strided_slice %743 {offsets = [0, 128], sizes = [2, 128], strides = [1, 1]} : vector<2x512xf32> to vector<2x128xf32>
    %751 = arith.negf %750 : vector<2x128xf32>
    %752 = math.exp %751 : vector<2x128xf32>
    %cst_219 = arith.constant 1.000000e+00 : f32
    %753 = vector.broadcast %cst_219 : f32 to vector<2x128xf32>
    %754 = arith.addf %753, %752 : vector<2x128xf32>
    %755 = arith.divf %753, %754 : vector<2x128xf32>
    %756 = vector.extract_strided_slice %743 {offsets = [0, 256], sizes = [2, 128], strides = [1, 1]} : vector<2x512xf32> to vector<2x128xf32>
    %757 = vector.extract_strided_slice %743 {offsets = [0, 384], sizes = [2, 128], strides = [1, 1]} : vector<2x512xf32> to vector<2x128xf32>
    %758 = arith.mulf %749, %757 : vector<2x128xf32>
    %759 = arith.addf %756, %758 : vector<2x128xf32>
    %760 = math.tanh %759 : vector<2x128xf32>
    %cst_220 = arith.constant 1.000000e+00 : f32
    %761 = vector.broadcast %cst_220 : f32 to vector<2x128xf32>
    %762 = arith.subf %761, %755 : vector<2x128xf32>
    %763 = arith.mulf %762, %760 : vector<2x128xf32>
    %764 = arith.mulf %755, %669 : vector<2x128xf32>
    %765 = arith.addf %763, %764 : vector<2x128xf32>
    %766 = tpu.concatenate %765, %700 in 1 : vector<2x128xf32>, vector<2x128xf32> -> vector<2x256xf32>
    %767 = arith.truncf %766 : vector<2x256xf32> to vector<2x256xbf16>
    %c1_221 = arith.constant 1 : index
    %c0_222 = arith.constant 0 : index
    %c0_223 = arith.constant 0 : index
    %768 = vector.load %arg5[%c1_221, %c0_222, %c0_223] : memref<2x256x512xbf16, #tpu.memory_space<vmem>>, vector<1x256x512xbf16>
    %769 = vector.shape_cast %768 : vector<1x256x512xbf16> to vector<256x512xbf16>
    %cst_224 = arith.constant dense<0.000000e+00> : vector<2x512xf32>
    %770 = tpu.matmul %767, %769, %cst_224 {dimension_numbers = #tpu.dot_dimension_numbers<[1], [0], [0], [1], [0, 0, 1, 1], [], []>} : vector<2x256xbf16>, vector<256x512xbf16>, vector<2x512xf32> -> vector<2x512xf32>
    %c1_225 = arith.constant 1 : index
    %c0_226 = arith.constant 0 : index
    %c0_227 = arith.constant 0 : index
    %771 = vector.load %arg6[%c1_225, %c0_226, %c0_227] : memref<2x1x512xf32, #tpu.memory_space<vmem>>, vector<1x1x512xf32>
    %772 = vector.shape_cast %771 : vector<1x1x512xf32> to vector<1x512xf32>
    %773 = vector.broadcast %772 : vector<1x512xf32> to vector<2x512xf32>
    %774 = arith.addf %770, %773 : vector<2x512xf32>
    %775 = vector.extract_strided_slice %774 {offsets = [0, 0], sizes = [2, 128], strides = [1, 1]} : vector<2x512xf32> to vector<2x128xf32>
    %776 = arith.negf %775 : vector<2x128xf32>
    %777 = math.exp %776 : vector<2x128xf32>
    %cst_228 = arith.constant 1.000000e+00 : f32
    %778 = vector.broadcast %cst_228 : f32 to vector<2x128xf32>
    %779 = arith.addf %778, %777 : vector<2x128xf32>
    %780 = arith.divf %778, %779 : vector<2x128xf32>
    %781 = vector.extract_strided_slice %774 {offsets = [0, 128], sizes = [2, 128], strides = [1, 1]} : vector<2x512xf32> to vector<2x128xf32>
    %782 = arith.negf %781 : vector<2x128xf32>
    %783 = math.exp %782 : vector<2x128xf32>
    %cst_229 = arith.constant 1.000000e+00 : f32
    %784 = vector.broadcast %cst_229 : f32 to vector<2x128xf32>
    %785 = arith.addf %784, %783 : vector<2x128xf32>
    %786 = arith.divf %784, %785 : vector<2x128xf32>
    %787 = vector.extract_strided_slice %774 {offsets = [0, 256], sizes = [2, 128], strides = [1, 1]} : vector<2x512xf32> to vector<2x128xf32>
    %788 = vector.extract_strided_slice %774 {offsets = [0, 384], sizes = [2, 128], strides = [1, 1]} : vector<2x512xf32> to vector<2x128xf32>
    %789 = arith.mulf %780, %788 : vector<2x128xf32>
    %790 = arith.addf %787, %789 : vector<2x128xf32>
    %791 = math.tanh %790 : vector<2x128xf32>
    %cst_230 = arith.constant 1.000000e+00 : f32
    %792 = vector.broadcast %cst_230 : f32 to vector<2x128xf32>
    %793 = arith.subf %792, %786 : vector<2x128xf32>
    %794 = arith.mulf %793, %791 : vector<2x128xf32>
    %795 = arith.mulf %786, %700 : vector<2x128xf32>
    %796 = arith.addf %794, %795 : vector<2x128xf32>
    %797 = arith.truncf %796 : vector<2x128xf32> to vector<2x128xbf16>
    %cst_231 = arith.constant dense<0.000000e+00> : vector<2x138xf32>
    %798 = tpu.matmul %797, %28, %cst_231 {dimension_numbers = #tpu.dot_dimension_numbers<[1], [0], [0], [1], [0, 0, 1, 1], [], []>} : vector<2x128xbf16>, vector<128x138xbf16>, vector<2x138xf32> -> vector<2x138xf32>
    %799 = vector.extract_strided_slice %798 {offsets = [0, 0], sizes = [2, 128], strides = [1, 1]} : vector<2x138xf32> to vector<2x128xf32>
    %800 = vector.broadcast %3 : vector<1x128xf32> to vector<2x128xf32>
    %801 = arith.addf %799, %800 : vector<2x128xf32>
    %802 = arith.negf %801 : vector<2x128xf32>
    %803 = math.exp %802 : vector<2x128xf32>
    %cst_232 = arith.constant 1.000000e+00 : f32
    %804 = vector.broadcast %cst_232 : f32 to vector<2x128xf32>
    %805 = arith.addf %804, %803 : vector<2x128xf32>
    %806 = arith.divf %804, %805 : vector<2x128xf32>
    %807 = vector.extract_strided_slice %11 {offsets = [0, 8, 0], sizes = [2, 1, 128], strides = [1, 1, 1]} : vector<2x10x128xf32> to vector<2x1x128xf32>
    %808 = vector.shape_cast %807 : vector<2x1x128xf32> to vector<2x128xf32>
    %809 = arith.mulf %806, %808 : vector<2x128xf32>
    %cst_233 = arith.constant dense<0.000000e+00> : vector<2xf32>
    %810 = vector.multi_reduction <add>, %809, %cst_233 [1] : vector<2x128xf32> to vector<2xf32>
    %811 = vector.shape_cast %810 : vector<2xf32> to vector<2x1xf32>
    %812 = tpu.concatenate %140, %236, %332, %428, %524, %620, %716, %811 in 1 : vector<2x1xf32>, vector<2x1xf32>, vector<2x1xf32>, vector<2x1xf32>, vector<2x1xf32>, vector<2x1xf32>, vector<2x1xf32>, vector<2x1xf32> -> vector<2x8xf32>
    %813 = math.log %812 : vector<2x8xf32>
    %cst_234 = arith.constant -1.000000e+02 : f32
    %814 = vector.broadcast %cst_234 : f32 to vector<2x8xf32>
    %815 = arith.maximumf %813, %814 : vector<2x8xf32>
    %cst_235 = arith.constant 1.000000e+00 : f32
    %816 = vector.broadcast %cst_235 : f32 to vector<2x8xf32>
    %817 = arith.subf %816, %812 : vector<2x8xf32>
    %818 = math.log %817 : vector<2x8xf32>
    %cst_236 = arith.constant -1.000000e+02 : f32
    %819 = vector.broadcast %cst_236 : f32 to vector<2x8xf32>
    %820 = arith.maximumf %818, %819 : vector<2x8xf32>
    %cst_237 = arith.constant 1.000000e+00 : f32
    %821 = vector.broadcast %cst_237 : f32 to vector<2x8xf32>
    %822 = arith.mulf %821, %815 : vector<2x8xf32>
    %cst_238 = arith.constant 0.000000e+00 : f32
    %823 = vector.broadcast %cst_238 : f32 to vector<2x8xf32>
    %824 = arith.mulf %823, %820 : vector<2x8xf32>
    %825 = arith.addf %822, %824 : vector<2x8xf32>
    %cst_239 = arith.constant 0.000000e+00 : f32
    %826 = vector.broadcast %cst_239 : f32 to vector<2x8xf32>
    %827 = arith.subf %826, %825 : vector<2x8xf32>
    %828 = vector.shape_cast %827 : vector<2x8xf32> to vector<1x2x8xf32>
    %cst_240 = arith.constant dense<0.000000e+00> : vector<1xf32>
    %829 = vector.multi_reduction <add>, %828, %cst_240 [1, 2] : vector<1x2x8xf32> to vector<1xf32>
    %830 = vector.shape_cast %829 : vector<1xf32> to vector<1x1x1xf32>
    %831 = vector.extract %830[0, 0, 0] : f32 from vector<1x1x1xf32>
    %cst_241 = arith.constant 1.600000e+01 : f32
    %832 = arith.divf %831, %cst_241 : f32
    %cst_242 = arith.constant 2.000000e+00 : f32
    %833 = arith.divf %832, %cst_242 : f32
    %c0_243 = arith.constant 0 : index
    %c0_244 = arith.constant 0 : index
    %834 = vector.load %arg9[%c0_243, %c0_244] : memref<2x8xf32, #tpu.memory_space<vmem>>, vector<2x8xf32>
    tpu.vector_store %arg9[%c0_243, %c0_244], %812 {strides = array<i32>} : memref<2x8xf32, #tpu.memory_space<vmem>>, vector<2x8xf32>,
    %835 = vector.broadcast %833 : f32 to vector<1x1xf32>
    %c0_245 = arith.constant 0 : index
    %c0_246 = arith.constant 0 : index
    %836 = vector.load %arg10[%c0_245, %c0_246] : memref<1x1xf32, #tpu.memory_space<vmem>>, vector<1x1xf32>
    tpu.vector_store %arg10[%c0_245, %c0_246], %835 {strides = array<i32>} : memref<1x1xf32, #tpu.memory_space<vmem>>, vector<1x1xf32>,
    return
  }
}

</mosaic_0001>

<llo_original>
// kernel: conv_discriminator_forward.1
$region0: #{conv_discriminator_forward.1}
  #allocation0 [shape = 'u32[]', space=smem, size = 0x4, offset = 0x4, fixed_abs, tag = 'smem constant byte address 0x4 - core index']
  #allocation1 [shape = 'u32[144,128]{1,0:T(1,128)}', space=vmem, size = 0x12000, scoped, tag = 'internal scratch']
  %s0 = inlined_call_operand.vmem [shape: s32[2,10], index: 0, kind: input, shape index: {}]
  %s1 = inlined_call_operand.hbm [shape: bf16[128,128], index: 1, kind: input, shape index: {}]
  %s2 = inlined_call_operand.vmem [shape: bf16[384,128], index: 2, kind: input, shape index: {}]
  %s3 = inlined_call_operand.hbm [shape: bf16[128,128], index: 3, kind: input, shape index: {}]
  %s4 = inlined_call_operand.hbm [shape: bf16[128,128], index: 4, kind: input, shape index: {}]
  %s5 = inlined_call_operand.hbm [shape: bf16[2,256,512], index: 5, kind: input, shape index: {}]
  %s6 = inlined_call_operand.vmem [shape: f32[2,1,512], index: 6, kind: input, shape index: {}]
  %s7 = inlined_call_operand.vmem [shape: bf16[128,138], index: 7, kind: input, shape index: {}]
  %s8 = inlined_call_operand.vmem [shape: f32[4,128], index: 8, kind: input, shape index: {}]
  %s9 = inlined_call_operand.hbm [shape: f32[2,8], index: 9, kind: output, shape index: {0}]
  %s10 = inlined_call_operand.hbm [shape: f32[1,1], index: 10, kind: output, shape index: {1}]
  %11 = xla_tuple %s9, %s10
  %s12 = sld [smem:[#allocation0]]
  $region70: #{conv_discriminator_forward.1} parent=0
    _
  %s14 = ssub.s32 1, %s12
  %s15 = scalar_select 0, %s14, %s12
  $region1: #{conv_discriminator_forward.1} parent=0
    #allocation2 [shape = 'u8[32768]{0}', space=vmem, size = 0x8000, scoped, tag = 'input window, operand 1, single buffered']
    #allocation3 [shape = 's32[1]{0}', space=sflag, size = 0x4, scoped, tag = 'scoped memory for conv_discriminator_forward.1']
    #allocation4 [shape = 's32[1]{0}', space=sflag, size = 0x4, scoped, tag = 'scoped memory for conv_discriminator_forward.1']
    #allocation5 [shape = 'u8[32768]{0}', space=vmem, size = 0x8000, scoped, tag = 'input window, operand 3, single buffered']
    #allocation6 [shape = 's32[1]{0}', space=sflag, size = 0x4, scoped, tag = 'scoped memory for conv_discriminator_forward.1']
    #allocation7 [shape = 'u8[32768]{0}', space=vmem, size = 0x8000, scoped, tag = 'input window, operand 4, single buffered']
    #allocation8 [shape = 'u8[524288]{0}', space=vmem, size = 0x80000, scoped, tag = 'input window, operand 5, single buffered']
    #allocation9 [shape = 's32[1]{0}', space=sflag, size = 0x4, scoped, tag = 'scoped memory for conv_discriminator_forward.1']
    #allocation10 [shape = 'u8[1024]{0}', space=vmem, size = 0x400, scoped, tag = 'output window, operand 0, single buffered']
    #allocation11 [shape = 'u8[512]{0}', space=vmem, size = 0x400, scoped, tag = 'output window, operand 1, single buffered']
    #allocation12 [shape = 's32[1]{0}', space=sflag, size = 0x4, scoped, tag = 'scoped memory for conv_discriminator_forward.1']
    %16 = vsyncpa [#allocation3], 0
    %17 = vsyncpa [#allocation6], 0
    %18 = vsyncpa [#allocation9], 0
    %19 = vsyncpa [#allocation4], 0
    %20 = vsyncpa [#allocation12], 0
    // Predicated region
    $region2: #{conv_discriminator_forward.1} parent=1 // pred_check
      _
    $region3: #{conv_discriminator_forward.1} parent=1 // pred_check_branch
      %22 = sbr.rel (0) target = $region5
    $region4: #{conv_discriminator_forward.1} parent=1 // pred_region
      _
    $region5: #{conv_discriminator_forward.1} parent=1 // pred_fallthru
      _
    // Predicated region
    $region6: #{conv_discriminator_forward.1} parent=1 // pred_check
      _
    $region7: #{conv_discriminator_forward.1} parent=1 // pred_check_branch
      %24 = sbr.rel (0) target = $region9
    $region8: #{conv_discriminator_forward.1} parent=1 // pred_region
      %s26 = ssub.s32 1024, 1024
      %27 = vsyncadd [#allocation3], %s26
      %s28 = sshll.u32 [#allocation2], 4
      %s29 = int_to_ptr.vmem [resolvable:$true] %s28
      %34 = dma.hbm_to_vmem [thread:$0]  %s1, 1024, %s29, [#allocation3], 64, 64, 4
    $region9: #{conv_discriminator_forward.1} parent=1 // pred_fallthru
      _
    // Predicated region
    $region10: #{conv_discriminator_forward.1} parent=1 // pred_check
      _
    $region11: #{conv_discriminator_forward.1} parent=1 // pred_check_branch
      %36 = sbr.rel (0) target = $region13
    $region12: #{conv_discriminator_forward.1} parent=1 // pred_region
      _
    $region13: #{conv_discriminator_forward.1} parent=1 // pred_fallthru
      _
    // Predicated region
    $region14: #{conv_discriminator_forward.1} parent=1 // pred_check
      _
    $region15: #{conv_discriminator_forward.1} parent=1 // pred_check_branch
      %38 = sbr.rel (0) target = $region17
    $region16: #{conv_discriminator_forward.1} parent=1 // pred_region
      %s40 = ssub.s32 1024, 1024
      %41 = vsyncadd [#allocation6], %s40
      %s42 = sshll.u32 [#allocation5], 4
      %s43 = int_to_ptr.vmem [resolvable:$true] %s42
      %48 = dma.hbm_to_vmem [thread:$0]  %s3, 1024, %s43, [#allocation6], 64, 64, 4
    $region17: #{conv_discriminator_forward.1} parent=1 // pred_fallthru
      _
    // Predicated region
    $region18: #{conv_discriminator_forward.1} parent=1 // pred_check
      _
    $region19: #{conv_discriminator_forward.1} parent=1 // pred_check_branch
      %50 = sbr.rel (0) target = $region21
    $region20: #{conv_discriminator_forward.1} parent=1 // pred_region
      %s52 = ssub.s32 1024, 1024
      %53 = vsyncadd [#allocation6], %s52
      %s54 = sshll.u32 [#allocation7], 4
      %s55 = int_to_ptr.vmem [resolvable:$true] %s54
      %60 = dma.hbm_to_vmem [thread:$0]  %s4, 1024, %s55, [#allocation6], 64, 64, 4
    $region21: #{conv_discriminator_forward.1} parent=1 // pred_fallthru
      _
    // Predicated region
    $region22: #{conv_discriminator_forward.1} parent=1 // pred_check
      _
    $region23: #{conv_discriminator_forward.1} parent=1 // pred_check_branch
      %62 = sbr.rel (0) target = $region25
    $region24: #{conv_discriminator_forward.1} parent=1 // pred_region
      %s64 = ssub.s32 16384, 16384
      %65 = vsyncadd [#allocation9], %s64
      %s66 = sshll.u32 [#allocation8], 4
      %s67 = int_to_ptr.vmem [resolvable:$true] %s66
      %72 = dma.hbm_to_vmem [thread:$0]  %s5, 16384, %s67, [#allocation9], 256, 256, 16
    $region25: #{conv_discriminator_forward.1} parent=1 // pred_fallthru
      _
    // Predicated region
    $region26: #{conv_discriminator_forward.1} parent=1 // pred_check
      _
    $region27: #{conv_discriminator_forward.1} parent=1 // pred_check_branch
      %74 = sbr.rel (0) target = $region29
    $region28: #{conv_discriminator_forward.1} parent=1 // pred_region
      _
    $region29: #{conv_discriminator_forward.1} parent=1 // pred_fallthru
      _
    // Predicated region
    $region30: #{conv_discriminator_forward.1} parent=1 // pred_check
      _
    $region31: #{conv_discriminator_forward.1} parent=1 // pred_check_branch
      %76 = sbr.rel (0) target = $region33
    $region32: #{conv_discriminator_forward.1} parent=1 // pred_region
      _
    $region33: #{conv_discriminator_forward.1} parent=1 // pred_fallthru
      _
    // Predicated region
    $region34: #{conv_discriminator_forward.1} parent=1 // pred_check
      _
    $region35: #{conv_discriminator_forward.1} parent=1 // pred_check_branch
      %78 = sbr.rel (0) target = $region37
    $region36: #{conv_discriminator_forward.1} parent=1 // pred_region
      _
    $region37: #{conv_discriminator_forward.1} parent=1 // pred_fallthru
      _
    // Predicated region
    $region38: #{conv_discriminator_forward.1} parent=1 // pred_check
      _
    $region39: #{conv_discriminator_forward.1} parent=1 // pred_check_branch
      %80 = sbr.rel (0) target = $region41
    $region40: #{conv_discriminator_forward.1} parent=1 // pred_region
      %81 = dma.done [#allocation3], 1024
    $region41: #{conv_discriminator_forward.1} parent=1 // pred_fallthru
      _
    // Predicated region
    $region42: #{conv_discriminator_forward.1} parent=1 // pred_check
      _
    $region43: #{conv_discriminator_forward.1} parent=1 // pred_check_branch
      %83 = sbr.rel (0) target = $region45
    $region44: #{conv_discriminator_forward.1} parent=1 // pred_region
      %84 = dma.done [#allocation6], 1024
    $region45: #{conv_discriminator_forward.1} parent=1 // pred_fallthru
      _
    // Predicated region
    $region46: #{conv_discriminator_forward.1} parent=1 // pred_check
      _
    $region47: #{conv_discriminator_forward.1} parent=1 // pred_check_branch
      %86 = sbr.rel (0) target = $region49
    $region48: #{conv_discriminator_forward.1} parent=1 // pred_region
      %87 = dma.done [#allocation6], 1024
    $region49: #{conv_discriminator_forward.1} parent=1 // pred_fallthru
      _
    // Predicated region
    $region50: #{conv_discriminator_forward.1} parent=1 // pred_check
      _
    $region51: #{conv_discriminator_forward.1} parent=1 // pred_check_branch
      %89 = sbr.rel (0) target = $region53
    $region52: #{conv_discriminator_forward.1} parent=1 // pred_region
      %90 = dma.done [#allocation9], 16384
    $region53: #{conv_discriminator_forward.1} parent=1 // pred_fallthru
      _
    %v92 = vld [vmem:[%s8] sm:$0xf]
    %v93 = vld [vmem:[%s0] sm:$0x3]
    %v94 = vlaneseq
    %v95 = vand.u32 %v94, 127
    %v96 = vlaneseq
    %v97 = vshrl.u32 %v96, 7
    %v98 = vsub.s32 0, %v97
    %v99 = vrot.slane %v93, %v98
    %101 = vbcast.lane.b32.xlu0 %v99, 256
    %v102 = vpop.permute.xlu0 %101
    %s104 = sor.u32 256, 8
    %105 = vbcast.lane.b32.xlu0 %v99, %s104
    %v106 = vpop.permute.xlu0 %105
    %v107 = vlaneseq
    %v108 = vshrl.u32 %v107, 7
    %v109 = vsub.s32 1, %v108
    %v110 = vrot.slane %v93, %v109
    %112 = vbcast.lane.b32.xlu0 %v110, 256
    %v113 = vpop.permute.xlu0 %112
    %s115 = sor.u32 256, 8
    %116 = vbcast.lane.b32.xlu0 %v110, %s115
    %v117 = vpop.permute.xlu0 %116
    %vm118 = vcmp.eq.s32.totalorder %v95, %v102
    %vm119 = vcmp.eq.s32.totalorder %v95, %v106
    %vm120 = vcmp.eq.s32.totalorder %v95, %v113
    %vm121 = vcmp.eq.s32.totalorder %v95, %v117
    %v122 = vsel %vm118, 1, 0
    %v123 = vsel %vm119, 1, 0
    %v124 = vsel %vm120, 1, 0
    %v125 = vsel %vm121, 1, 0
    %v126 = vcvt.s32.f32 %v122
    %v127 = vcvt.s32.f32 %v123
    %v128 = vcvt.s32.f32 %v124
    %v129 = vcvt.s32.f32 %v125
    %v130 = vpack.c.bf16 %v127, %v126
    %v131 = vpack.c.bf16 %v129, %v128
    %v132 = vld [vmem:[#allocation2] sm:$0xf]
    %v133 = vld [vmem:[#allocation2 + $0x4] sm:$0xf]
    %v134 = vld [vmem:[#allocation2 + $0x8] sm:$0xf]
    %v135 = vld [vmem:[#allocation2 + $0xc] sm:$0xf]
    %v136 = vld [vmem:[#allocation2 + $0x10] sm:$0xf]
    %v137 = vld [vmem:[#allocation2 + $0x14] sm:$0xf]
    %v138 = vld [vmem:[#allocation2 + $0x18] sm:$0xf]
    %v139 = vld [vmem:[#allocation2 + $0x1c] sm:$0xf]
    %v140 = vld [vmem:[#allocation2 + $0x20] sm:$0xf]
    %v141 = vld [vmem:[#allocation2 + $0x24] sm:$0xf]
    %v142 = vld [vmem:[#allocation2 + $0x28] sm:$0xf]
    %v143 = vld [vmem:[#allocation2 + $0x2c] sm:$0xf]
    %v144 = vld [vmem:[#allocation2 + $0x30] sm:$0xf]
    %v145 = vld [vmem:[#allocation2 + $0x34] sm:$0xf]
    %v146 = vld [vmem:[#allocation2 + $0x38] sm:$0xf]
    %v147 = vld [vmem:[#allocation2 + $0x3c] sm:$0xf]
    %v150 = vcombine.high %v130, %v130
    %v152 = vunpack.c.l.s4 1966171168
    %v153 = vunpack.c.0.s8 %v152
    %v154 = vlaneseq
    %v155 = vshrl.u32 %v154, 7
    %v156 = vsub.s32 %v153, %v155
    %v157 = vrot.slane %v130, %v156
    %v159 = vunpack.c.l.s4 1966171168
    %v160 = vunpack.c.0.s8 %v159
    %v161 = vlaneseq
    %v162 = vshrl.u32 %v161, 7
    %v163 = vsub.s32 %v160, %v162
    %v164 = vrot.slane %v150, %v163
    %v165 = vcombine.high %v157, %v157
    %v167 = vunpack.c.l.s4 1966171168
    %v168 = vunpack.c.0.s8 %v167
    %v169 = vlaneseq
    %v170 = vshrl.u32 %v169, 7
    %v171 = vsub.s32 %v168, %v170
    %v172 = vrot.slane %v157, %v171
    %v174 = vunpack.c.l.s4 1966171168
    %v175 = vunpack.c.0.s8 %v174
    %v176 = vlaneseq
    %v177 = vshrl.u32 %v176, 7
    %v178 = vsub.s32 %v175, %v177
    %v179 = vrot.slane %v164, %v178
    %v181 = vunpack.c.l.s4 1966171168
    %v182 = vunpack.c.0.s8 %v181
    %v183 = vlaneseq
    %v184 = vshrl.u32 %v183, 7
    %v185 = vsub.s32 %v182, %v184
    %v186 = vrot.slane %v165, %v185
    %v187 = vcombine.high %v172, %v172
    %v188 = vcombine.high %v186, %v186
    %v189 = vcombine.high %v131, %v131
    %v191 = vunpack.c.l.s4 1966171168
    %v192 = vunpack.c.0.s8 %v191
    %v193 = vlaneseq
    %v194 = vshrl.u32 %v193, 7
    %v195 = vsub.s32 %v192, %v194
    %v196 = vrot.slane %v131, %v195
    %v198 = vunpack.c.l.s4 1966171168
    %v199 = vunpack.c.0.s8 %v198
    %v200 = vlaneseq
    %v201 = vshrl.u32 %v200, 7
    %v202 = vsub.s32 %v199, %v201
    %v203 = vrot.slane %v189, %v202
    %v204 = vcombine.high %v196, %v196
    %v206 = vunpack.c.l.s4 1966171168
    %v207 = vunpack.c.0.s8 %v206
    %v208 = vlaneseq
    %v209 = vshrl.u32 %v208, 7
    %v210 = vsub.s32 %v207, %v209
    %v211 = vrot.slane %v196, %v210
    %v213 = vunpack.c.l.s4 1966171168
    %v214 = vunpack.c.0.s8 %v213
    %v215 = vlaneseq
    %v216 = vshrl.u32 %v215, 7
    %v217 = vsub.s32 %v214, %v216
    %v218 = vrot.slane %v203, %v217
    %v220 = vunpack.c.l.s4 1966171168
    %v221 = vunpack.c.0.s8 %v220
    %v222 = vlaneseq
    %v223 = vshrl.u32 %v222, 7
    %v224 = vsub.s32 %v221, %v223
    %v225 = vrot.slane %v204, %v224
    %v226 = vcombine.high %v211, %v211
    %v227 = vcombine.high %v225, %v225
    %v228 = vcombine.low %v172, %v186
    %v229 = vcombine.low %v187, %v188
    %v230 = vcombine.low %v179, %v211
    %v231 = vcombine.low %v225, %v226
    %v233 = vunpack.c.l.s4 1966171168
    %v234 = vunpack.c.0.s8 %v233
    %v235 = vlaneseq
    %v236 = vshrl.u32 %v235, 7
    %v237 = vsub.s32 %v234, %v236
    %v238 = vrot.slane %v228, %v237
    %v240 = vunpack.c.l.s4 1966171168
    %v241 = vunpack.c.0.s8 %v240
    %v242 = vlaneseq
    %v243 = vshrl.u32 %v242, 7
    %v244 = vsub.s32 %v241, %v243
    %v245 = vrot.slane %v229, %v244
    %v247 = vunpack.c.l.s4 1966171168
    %v248 = vunpack.c.0.s8 %v247
    %v249 = vlaneseq
    %v250 = vshrl.u32 %v249, 7
    %v251 = vsub.s32 %v248, %v250
    %v252 = vrot.slane %v230, %v251
    %v254 = vunpack.c.l.s4 1966171168
    %v255 = vunpack.c.0.s8 %v254
    %v256 = vlaneseq
    %v257 = vshrl.u32 %v256, 7
    %v258 = vsub.s32 %v255, %v257
    %v259 = vrot.slane %v231, %v258
    %v260 = vcombine.low %v238, %v245
    %v261 = vcombine.low %v252, %v259
    %v263 = vunpack.c.l.s4 1966171168
    %v264 = vunpack.c.0.s8 %v263
    %v265 = vlaneseq
    %v266 = vshrl.u32 %v265, 7
    %v267 = vsub.s32 %v264, %v266
    %v268 = vrot.slane %v260, %v267
    %v270 = vunpack.c.l.s4 1966171168
    %v271 = vunpack.c.0.s8 %v270
    %v272 = vlaneseq
    %v273 = vshrl.u32 %v272, 7
    %v274 = vsub.s32 %v271, %v273
    %v275 = vrot.slane %v261, %v274
    %v276 = vcombine.low %v268, %v275
    %v277 = vcombine.low %v227, %v218
    %v279 = vunpack.c.l.s4 1966171168
    %v280 = vunpack.c.0.s8 %v279
    %v281 = vlaneseq
    %v282 = vshrl.u32 %v281, 7
    %v283 = vsub.s32 %v280, %v282
    %v284 = vrot.slane %v277, %v283
    %v286 = vunpack.c.l.s4 1966171168
    %v287 = vunpack.c.0.s8 %v286
    %v288 = vlaneseq
    %v289 = vshrl.u32 %v288, 7
    %v290 = vsub.s32 %v287, %v289
    %v291 = vrot.slane %v284, %v290
    %v310 = vunpack.c.l.b16 %v132
    %v311 = vunpack.c.l.b16 %v133
    %v312 = vunpack.c.l.b16 %v134
    %v313 = vunpack.c.l.b16 %v135
    %v314 = vunpack.c.l.b16 %v136
    %v315 = vunpack.c.l.b16 %v137
    %v316 = vunpack.c.l.b16 %v138
    %v317 = vunpack.c.l.b16 %v139
    %v318 = vunpack.c.l.b16 %v140
    %v319 = vunpack.c.l.b16 %v141
    %v320 = vunpack.c.l.b16 %v142
    %v321 = vunpack.c.l.b16 %v143
    %v322 = vunpack.c.l.b16 %v144
    %v323 = vunpack.c.l.b16 %v145
    %v324 = vunpack.c.l.b16 %v146
    %v325 = vunpack.c.l.b16 %v147
    %v326 = vpack.c.b16 %v311, %v310
    %v327 = vpack.c.b16 %v313, %v312
    %v328 = vpack.c.b16 %v315, %v314
    %v329 = vpack.c.b16 %v317, %v316
    %v330 = vpack.c.b16 %v319, %v318
    %v331 = vpack.c.b16 %v321, %v320
    %v332 = vpack.c.b16 %v323, %v322
    %v333 = vpack.c.b16 %v325, %v324
    %342 = vmatprep.subr.bf16.mxu0 0
    %343 = vmatpush1.bf16.msra.mxu0 %v326
    %344 = vmatprep.subr.bf16.mxu0 0
    %345 = vmatpush1.bf16.msra.mxu0 %v327
    %346 = vmatprep.subr.bf16.mxu0 0
    %347 = vmatpush1.bf16.msra.mxu0 %v328
    %348 = vmatprep.subr.bf16.mxu0 0
    %349 = vmatpush1.bf16.msra.mxu0 %v329
    %350 = vmatprep.subr.bf16.mxu0 0
    %351 = vmatpush1.bf16.msra.mxu0 %v330
    %352 = vmatprep.subr.bf16.mxu0 0
    %353 = vmatpush1.bf16.msra.mxu0 %v331
    %354 = vmatprep.subr.bf16.mxu0 0
    %355 = vmatpush1.bf16.msra.mxu0 %v332
    %356 = vmatprep.subr.bf16.mxu0 0
    %357 = vmatpush1.bf16.msra.mxu0 %v333
    %358 = vmatprep.subr.bf16.mxu0 0
    %359 = vmatpush1.bf16.msra.mxu0 0
    %360 = vmatprep.subr.bf16.mxu0 0
    %361 = vmatpush1.bf16.msra.mxu0 0
    %362 = vmatprep.subr.bf16.mxu0 0
    %363 = vmatpush1.bf16.msra.mxu0 0
    %364 = vmatprep.subr.bf16.mxu0 0
    %365 = vmatpush1.bf16.msra.mxu0 0
    %366 = vmatprep.subr.bf16.mxu0 0
    %367 = vmatpush1.bf16.msra.mxu0 0
    %368 = vmatprep.subr.bf16.mxu0 0
    %369 = vmatpush1.bf16.msra.mxu0 0
    %370 = vmatprep.subr.bf16.mxu0 0
    %371 = vmatpush1.bf16.msra.mxu0 0
    %372 = vmatprep.subr.bf16.mxu0 0
    %373 = vmatpush1.bf16.msra.mxu0 0
    %374 = vmatprep.mubr.bf16.mxu0 0
    %375 = vmatmul.mubr.bf16.gmra.mrb[0].mxu0 %v276
    %v376 = vpop.f32.mrb[0].mxu0
    %v377 = vadd.f32 0.0, %v376
    %v378 = vpop.f32.mrb[0].mxu0
    %v379 = vpop.f32.mrb[0].mxu0
    %v380 = vadd.f32 0.0, %v379
    %v381 = vpop.f32.mrb[0].mxu0
    %382 = vmatprep.mubr.bf16.mxu0 0
    %383 = vmatmul.mubr.bf16.gmra.mrb[0].mxu0 %v291
    %v384 = vpop.f32.mrb[0].mxu0
    %v385 = vadd.f32 0.0, %v384
    %v386 = vpop.f32.mrb[0].mxu0
    %v387 = vpop.f32.mrb[0].mxu0
    %v388 = vpop.f32.mrb[0].mxu0
    %389 = vdwg.mxu0
    %v393 = vcombine.high %v377, %v377
    %v395 = vunpack.c.l.s4 1983009808
    %v396 = vunpack.c.0.s8 %v395
    %v397 = vlaneseq
    %v398 = vshrl.u32 %v397, 7
    %v399 = vsub.s32 %v396, %v398
    %v400 = vrot.slane %v377, %v399
    %v402 = vunpack.c.l.s4 1983009808
    %v403 = vunpack.c.0.s8 %v402
    %v404 = vlaneseq
    %v405 = vshrl.u32 %v404, 7
    %v406 = vsub.s32 %v403, %v405
    %v407 = vrot.slane %v393, %v406
    %v408 = vcombine.high %v400, %v400
    %v409 = vcombine.high %v407, %v407
    %v410 = vcombine.high %v380, %v380
    %v412 = vunpack.c.l.s4 1983009808
    %v413 = vunpack.c.0.s8 %v412
    %v414 = vlaneseq
    %v415 = vshrl.u32 %v414, 7
    %v416 = vsub.s32 %v413, %v415
    %v417 = vrot.slane %v380, %v416
    %v419 = vunpack.c.l.s4 1983009808
    %v420 = vunpack.c.0.s8 %v419
    %v421 = vlaneseq
    %v422 = vshrl.u32 %v421, 7
    %v423 = vsub.s32 %v420, %v422
    %v424 = vrot.slane %v410, %v423
    %v425 = vcombine.high %v417, %v417
    %v426 = vcombine.high %v424, %v424
    %v428 = vunpack.c.l.s4 1983009808
    %v429 = vunpack.c.0.s8 %v428
    %v430 = vlaneseq
    %v431 = vshrl.u32 %v430, 7
    %v432 = vsub.s32 %v429, %v431
    %v433 = vrot.slane %v385, %v432
    %v434 = vcombine.high %v433, %v433
    %v435 = vcombine.low %v400, %v408
    %v436 = vcombine.low %v407, %v409
    %v438 = vunpack.c.l.s4 1983009808
    %v439 = vunpack.c.0.s8 %v438
    %v440 = vlaneseq
    %v441 = vshrl.u32 %v440, 7
    %v442 = vsub.s32 %v439, %v441
    %v443 = vrot.slane %v435, %v442
    %v445 = vunpack.c.l.s4 1983009808
    %v446 = vunpack.c.0.s8 %v445
    %v447 = vlaneseq
    %v448 = vshrl.u32 %v447, 7
    %v449 = vsub.s32 %v446, %v448
    %v450 = vrot.slane %v436, %v449
    %v451 = vcombine.low %v443, %v450
    %v452 = vcombine.low %v425, %v424
    %v453 = vcombine.low %v426, %v433
    %v455 = vunpack.c.l.s4 1983009808
    %v456 = vunpack.c.0.s8 %v455
    %v457 = vlaneseq
    %v458 = vshrl.u32 %v457, 7
    %v459 = vsub.s32 %v456, %v458
    %v460 = vrot.slane %v452, %v459
    %v462 = vunpack.c.l.s4 1983009808
    %v463 = vunpack.c.0.s8 %v462
    %v464 = vlaneseq
    %v465 = vshrl.u32 %v464, 7
    %v466 = vsub.s32 %v463, %v465
    %v467 = vrot.slane %v453, %v466
    %v468 = vcombine.low %v460, %v467
    %v472 = vunpack.c.l.s4 1983009808
    %v473 = vunpack.c.0.s8 %v472
    %v474 = vlaneseq
    %v475 = vshrl.u32 %v474, 7
    %v476 = vsub.s32 %v473, %v475
    %v477 = vrot.slane %v417, %v476
    %v479 = vunpack.c.l.s4 1983009808
    %v480 = vunpack.c.0.s8 %v479
    %v481 = vlaneseq
    %v482 = vshrl.u32 %v481, 7
    %v483 = vsub.s32 %v480, %v482
    %v484 = vrot.slane %v434, %v483
    %vm485 = vcmask 1046528
    %v486 = vrot.slane %v451, 1
    %v487 = vrot.slane %v477, 1
    %v488 = vsel %vm485, %v486, %v487
    %v489 = vrot.slane %v468, 1
    %v490 = vrot.slane %v484, 1
    %v491 = vsel %vm485, %v489, %v490
    %v494 = vcombine.low %v408, %v407
    %v495 = vcombine.low %v409, %v417
    %v497 = vunpack.c.l.s4 1983009808
    %v498 = vunpack.c.0.s8 %v497
    %v499 = vlaneseq
    %v500 = vshrl.u32 %v499, 7
    %v501 = vsub.s32 %v498, %v500
    %v502 = vrot.slane %v494, %v501
    %v504 = vunpack.c.l.s4 1983009808
    %v505 = vunpack.c.0.s8 %v504
    %v506 = vlaneseq
    %v507 = vshrl.u32 %v506, 7
    %v508 = vsub.s32 %v505, %v507
    %v509 = vrot.slane %v495, %v508
    %v510 = vcombine.low %v502, %v509
    %v511 = vcombine.low %v424, %v426
    %v512 = vcombine.low %v433, %v434
    %v514 = vunpack.c.l.s4 1983009808
    %v515 = vunpack.c.0.s8 %v514
    %v516 = vlaneseq
    %v517 = vshrl.u32 %v516, 7
    %v518 = vsub.s32 %v515, %v517
    %v519 = vrot.slane %v511, %v518
    %v521 = vunpack.c.l.s4 1983009808
    %v522 = vunpack.c.0.s8 %v521
    %v523 = vlaneseq
    %v524 = vshrl.u32 %v523, 7
    %v525 = vsub.s32 %v522, %v524
    %v526 = vrot.slane %v512, %v525
    %v527 = vcombine.low %v519, %v526
    %v530 = vpack.c.bf16 %v451, %v451
    %v531 = vpack.c.bf16 %v488, %v488
    %v532 = vpack.c.bf16 %v510, %v510
    %v533 = vpack.c.bf16 %v468, %v468
    %v534 = vpack.c.bf16 %v491, %v491
    %v535 = vpack.c.bf16 %v527, %v527
    %v536 = vld [vmem:[%s2] sm:$0xf]
    %v537 = vld [vmem:[%s2 + $0x4] sm:$0xf]
    %v538 = vld [vmem:[%s2 + $0x8] sm:$0xf]
    %v539 = vld [vmem:[%s2 + $0xc] sm:$0xf]
    %v540 = vld [vmem:[%s2 + $0x10] sm:$0xf]
    %v541 = vld [vmem:[%s2 + $0x14] sm:$0xf]
    %v542 = vld [vmem:[%s2 + $0x18] sm:$0xf]
    %v543 = vld [vmem:[%s2 + $0x1c] sm:$0xf]
    %v544 = vld [vmem:[%s2 + $0x20] sm:$0xf]
    %v545 = vld [vmem:[%s2 + $0x24] sm:$0xf]
    %v546 = vld [vmem:[%s2 + $0x28] sm:$0xf]
    %v547 = vld [vmem:[%s2 + $0x2c] sm:$0xf]
    %v548 = vld [vmem:[%s2 + $0x30] sm:$0xf]
    %v549 = vld [vmem:[%s2 + $0x34] sm:$0xf]
    %v550 = vld [vmem:[%s2 + $0x38] sm:$0xf]
    %v551 = vld [vmem:[%s2 + $0x3c] sm:$0xf]
    %v552 = vld [vmem:[%s2 + $0x40] sm:$0xf]
    %v553 = vld [vmem:[%s2 + $0x44] sm:$0xf]
    %v554 = vld [vmem:[%s2 + $0x48] sm:$0xf]
    %v555 = vld [vmem:[%s2 + $0x4c] sm:$0xf]
    %v556 = vld [vmem:[%s2 + $0x50] sm:$0xf]
    %v557 = vld [vmem:[%s2 + $0x54] sm:$0xf]
    %v558 = vld [vmem:[%s2 + $0x58] sm:$0xf]
    %v559 = vld [vmem:[%s2 + $0x5c] sm:$0xf]
    %v560 = vld [vmem:[%s2 + $0x60] sm:$0xf]
    %v561 = vld [vmem:[%s2 + $0x64] sm:$0xf]
    %v562 = vld [vmem:[%s2 + $0x68] sm:$0xf]
    %v563 = vld [vmem:[%s2 + $0x6c] sm:$0xf]
    %v564 = vld [vmem:[%s2 + $0x70] sm:$0xf]
    %v565 = vld [vmem:[%s2 + $0x74] sm:$0xf]
    %v566 = vld [vmem:[%s2 + $0x78] sm:$0xf]
    %v567 = vld [vmem:[%s2 + $0x7c] sm:$0xf]
    %v568 = vld [vmem:[%s2 + $0x80] sm:$0xf]
    %v569 = vld [vmem:[%s2 + $0x84] sm:$0xf]
    %v570 = vld [vmem:[%s2 + $0x88] sm:$0xf]
    %v571 = vld [vmem:[%s2 + $0x8c] sm:$0xf]
    %v572 = vld [vmem:[%s2 + $0x90] sm:$0xf]
    %v573 = vld [vmem:[%s2 + $0x94] sm:$0xf]
    %v574 = vld [vmem:[%s2 + $0x98] sm:$0xf]
    %v575 = vld [vmem:[%s2 + $0x9c] sm:$0xf]
    %v576 = vld [vmem:[%s2 + $0xa0] sm:$0xf]
    %v577 = vld [vmem:[%s2 + $0xa4] sm:$0xf]
    %v578 = vld [vmem:[%s2 + $0xa8] sm:$0xf]
    %v579 = vld [vmem:[%s2 + $0xac] sm:$0xf]
    %v580 = vld [vmem:[%s2 + $0xb0] sm:$0xf]
    %v581 = vld [vmem:[%s2 + $0xb4] sm:$0xf]
    %v582 = vld [vmem:[%s2 + $0xb8] sm:$0xf]
    %v583 = vld [vmem:[%s2 + $0xbc] sm:$0xf]
    %v584 = vlaneseq
    %v585 = vshrl.u32 %v584, 7
    %v586 = vsub.s32 0, %v585
    %v587 = vrot.slane %v92, %v586
    %v594 = vunpack.c.l.b16 %v530
    %v595 = vunpack.c.l.b16 %v531
    %v596 = vunpack.c.l.b16 %v532
    %v597 = vunpack.c.l.b16 %v533
    %v598 = vunpack.c.l.b16 %v534
    %v599 = vunpack.c.l.b16 %v535
    %v600 = vpack.c.b16 %v597, %v594
    %v601 = vpack.c.b16 %v598, %v595
    %v602 = vpack.c.b16 %v599, %v596
    %v654 = vunpack.c.l.b16 %v536
    %v655 = vunpack.c.l.b16 %v537
    %v656 = vunpack.c.l.b16 %v538
    %v657 = vunpack.c.l.b16 %v539
    %v658 = vunpack.c.l.b16 %v540
    %v659 = vunpack.c.l.b16 %v541
    %v660 = vunpack.c.l.b16 %v542
    %v661 = vunpack.c.l.b16 %v543
    %v662 = vunpack.c.l.b16 %v544
    %v663 = vunpack.c.l.b16 %v545
    %v664 = vunpack.c.l.b16 %v546
    %v665 = vunpack.c.l.b16 %v547
    %v666 = vunpack.c.l.b16 %v548
    %v667 = vunpack.c.l.b16 %v549
    %v668 = vunpack.c.l.b16 %v550
    %v669 = vunpack.c.l.b16 %v551
    %v670 = vunpack.c.l.b16 %v552
    %v671 = vunpack.c.l.b16 %v553
    %v672 = vunpack.c.l.b16 %v554
    %v673 = vunpack.c.l.b16 %v555
    %v674 = vunpack.c.l.b16 %v556
    %v675 = vunpack.c.l.b16 %v557
    %v676 = vunpack.c.l.b16 %v558
    %v677 = vunpack.c.l.b16 %v559
    %v678 = vunpack.c.l.b16 %v560
    %v679 = vunpack.c.l.b16 %v561
    %v680 = vunpack.c.l.b16 %v562
    %v681 = vunpack.c.l.b16 %v563
    %v682 = vunpack.c.l.b16 %v564
    %v683 = vunpack.c.l.b16 %v565
    %v684 = vunpack.c.l.b16 %v566
    %v685 = vunpack.c.l.b16 %v567
    %v686 = vunpack.c.l.b16 %v568
    %v687 = vunpack.c.l.b16 %v569
    %v688 = vunpack.c.l.b16 %v570
    %v689 = vunpack.c.l.b16 %v571
    %v690 = vunpack.c.l.b16 %v572
    %v691 = vunpack.c.l.b16 %v573
    %v692 = vunpack.c.l.b16 %v574
    %v693 = vunpack.c.l.b16 %v575
    %v694 = vunpack.c.l.b16 %v576
    %v695 = vunpack.c.l.b16 %v577
    %v696 = vunpack.c.l.b16 %v578
    %v697 = vunpack.c.l.b16 %v579
    %v698 = vunpack.c.l.b16 %v580
    %v699 = vunpack.c.l.b16 %v581
    %v700 = vunpack.c.l.b16 %v582
    %v701 = vunpack.c.l.b16 %v583
    %v702 = vpack.c.b16 %v655, %v654
    %v703 = vpack.c.b16 %v657, %v656
    %v704 = vpack.c.b16 %v659, %v658
    %v705 = vpack.c.b16 %v661, %v660
    %v706 = vpack.c.b16 %v663, %v662
    %v707 = vpack.c.b16 %v665, %v664
    %v708 = vpack.c.b16 %v667, %v666
    %v709 = vpack.c.b16 %v669, %v668
    %v710 = vpack.c.b16 %v671, %v670
    %v711 = vpack.c.b16 %v673, %v672
    %v712 = vpack.c.b16 %v675, %v674
    %v713 = vpack.c.b16 %v677, %v676
    %v714 = vpack.c.b16 %v679, %v678
    %v715 = vpack.c.b16 %v681, %v680
    %v716 = vpack.c.b16 %v683, %v682
    %v717 = vpack.c.b16 %v685, %v684
    %v718 = vpack.c.b16 %v687, %v686
    %v719 = vpack.c.b16 %v689, %v688
    %v720 = vpack.c.b16 %v691, %v690
    %v721 = vpack.c.b16 %v693, %v692
    %v722 = vpack.c.b16 %v695, %v694
    %v723 = vpack.c.b16 %v697, %v696
    %v724 = vpack.c.b16 %v699, %v698
    %v725 = vpack.c.b16 %v701, %v700
    %750 = vmatprep.subr.bf16.mxu0 0
    %751 = vmatpush1.bf16.msra.mxu0 %v702
    %752 = vmatprep.subr.bf16.mxu0 0
    %753 = vmatpush1.bf16.msra.mxu0 %v703
    %754 = vmatprep.subr.bf16.mxu0 0
    %755 = vmatpush1.bf16.msra.mxu0 %v704
    %756 = vmatprep.subr.bf16.mxu0 0
    %757 = vmatpush1.bf16.msra.mxu0 %v705
    %758 = vmatprep.subr.bf16.mxu0 0
    %759 = vmatpush1.bf16.msra.mxu0 %v706
    %760 = vmatprep.subr.bf16.mxu0 0
    %761 = vmatpush1.bf16.msra.mxu0 %v707
    %762 = vmatprep.subr.bf16.mxu0 0
    %763 = vmatpush1.bf16.msra.mxu0 %v708
    %764 = vmatprep.subr.bf16.mxu0 0
    %765 = vmatpush1.bf16.msra.mxu0 %v709
    %766 = vmatprep.subr.bf16.mxu0 0
    %767 = vmatpush1.bf16.msra.mxu0 %v710
    %768 = vmatprep.subr.bf16.mxu0 0
    %769 = vmatpush1.bf16.msra.mxu0 %v711
    %770 = vmatprep.subr.bf16.mxu0 0
    %771 = vmatpush1.bf16.msra.mxu0 %v712
    %772 = vmatprep.subr.bf16.mxu0 0
    %773 = vmatpush1.bf16.msra.mxu0 %v713
    %774 = vmatprep.subr.bf16.mxu0 0
    %775 = vmatpush1.bf16.msra.mxu0 %v714
    %776 = vmatprep.subr.bf16.mxu0 0
    %777 = vmatpush1.bf16.msra.mxu0 %v715
    %778 = vmatprep.subr.bf16.mxu0 0
    %779 = vmatpush1.bf16.msra.mxu0 %v716
    %780 = vmatprep.subr.bf16.mxu0 0
    %781 = vmatpush1.bf16.msra.mxu0 %v717
    %782 = vmatprep.mubr.bf16.mxu0 %v601
    %783 = vmatmul.mubr.bf16.gmra.mrb[0].mxu0 %v600
    %v784 = vpop.f32.mrb[0].mxu0
    %v785 = vadd.f32 %v587, %v784
    %v786 = vpop.f32.mrb[0].mxu0
    %v787 = vpop.f32.mrb[0].mxu0
    %v788 = vadd.f32 %v587, %v787
    %v789 = vpop.f32.mrb[0].mxu0
    %790 = vdwg.mxu0
    %791 = vmatprep.subr.bf16.mxu0 0
    %792 = vmatpush1.bf16.msra.mxu0 %v718
    %793 = vmatprep.subr.bf16.mxu0 0
    %794 = vmatpush1.bf16.msra.mxu0 %v719
    %795 = vmatprep.subr.bf16.mxu0 0
    %796 = vmatpush1.bf16.msra.mxu0 %v720
    %797 = vmatprep.subr.bf16.mxu0 0
    %798 = vmatpush1.bf16.msra.mxu0 %v721
    %799 = vmatprep.subr.bf16.mxu0 0
    %800 = vmatpush1.bf16.msra.mxu0 %v722
    %801 = vmatprep.subr.bf16.mxu0 0
    %802 = vmatpush1.bf16.msra.mxu0 %v723
    %803 = vmatprep.subr.bf16.mxu0 0
    %804 = vmatpush1.bf16.msra.mxu0 %v724
    %805 = vmatprep.subr.bf16.mxu0 0
    %806 = vmatpush1.bf16.msra.mxu0 %v725
    %807 = vmatprep.subr.bf16.mxu0 0
    %808 = vmatpush1.bf16.msra.mxu0 0
    %809 = vmatprep.subr.bf16.mxu0 0
    %810 = vmatpush1.bf16.msra.mxu0 0
    %811 = vmatprep.subr.bf16.mxu0 0
    %812 = vmatpush1.bf16.msra.mxu0 0
    %813 = vmatprep.subr.bf16.mxu0 0
    %814 = vmatpush1.bf16.msra.mxu0 0
    %815 = vmatprep.subr.bf16.mxu0 0
    %816 = vmatpush1.bf16.msra.mxu0 0
    %817 = vmatprep.subr.bf16.mxu0 0
    %818 = vmatpush1.bf16.msra.mxu0 0
    %819 = vmatprep.subr.bf16.mxu0 0
    %820 = vmatpush1.bf16.msra.mxu0 0
    %821 = vmatprep.subr.bf16.mxu0 0
    %822 = vmatpush1.bf16.msra.mxu0 0
    %823 = vmatprep.mubr.bf16.mxu0 0
    %824 = vmatmul.mubr.bf16.gmra.mrb[0].mxu0 %v602
    %v825 = vpop.f32.mrb[0].mxu0
    %v826 = vadd.f32 %v785, %v825
    %v827 = vpop.f32.mrb[0].mxu0
    %v828 = vpop.f32.mrb[0].mxu0
    %v829 = vadd.f32 %v788, %v828
    %v830 = vpop.f32.mrb[0].mxu0
    %831 = vdwg.mxu0
    %v832 = vtanh.pop %v826
    %v833 = vtanh.pop %v829
    %v834 = vld [vmem:[%s7] sm:$0xff]
    %v835 = vld [vmem:[%s7 + $0x8] sm:$0xff]
    %v836 = vld [vmem:[%s7 + $0x10] sm:$0xff]
    %v837 = vld [vmem:[%s7 + $0x18] sm:$0xff]
    %v838 = vld [vmem:[%s7 + $0x20] sm:$0xff]
    %v839 = vld [vmem:[%s7 + $0x28] sm:$0xff]
    %v840 = vld [vmem:[%s7 + $0x30] sm:$0xff]
    %v841 = vld [vmem:[%s7 + $0x38] sm:$0xff]
    %v842 = vld [vmem:[%s7 + $0x40] sm:$0xff]
    %v843 = vld [vmem:[%s7 + $0x48] sm:$0xff]
    %v844 = vld [vmem:[%s7 + $0x50] sm:$0xff]
    %v845 = vld [vmem:[%s7 + $0x58] sm:$0xff]
    %v846 = vld [vmem:[%s7 + $0x60] sm:$0xff]
    %v847 = vld [vmem:[%s7 + $0x68] sm:$0xff]
    %v848 = vld [vmem:[%s7 + $0x70] sm:$0xff]
    %v849 = vld [vmem:[%s7 + $0x78] sm:$0xff]
    %v850 = vlaneseq
    %v851 = vshrl.u32 %v850, 7
    %v852 = vsub.s32 3, %v851
    %v853 = vrot.slane %v92, %v852
    %v854 = vpack.c.bf16 %v853, %v853
    %v871 = vunpack.c.h.b16 %v834
    %v872 = vunpack.c.h.b16 %v835
    %v873 = vunpack.c.h.b16 %v836
    %v874 = vunpack.c.h.b16 %v837
    %v875 = vunpack.c.h.b16 %v838
    %v876 = vunpack.c.h.b16 %v839
    %v877 = vunpack.c.h.b16 %v840
    %v878 = vunpack.c.h.b16 %v841
    %v879 = vunpack.c.h.b16 %v842
    %v880 = vunpack.c.h.b16 %v843
    %v881 = vunpack.c.h.b16 %v844
    %v882 = vunpack.c.h.b16 %v845
    %v883 = vunpack.c.h.b16 %v846
    %v884 = vunpack.c.h.b16 %v847
    %v885 = vunpack.c.h.b16 %v848
    %v886 = vunpack.c.h.b16 %v849
    %v887 = vpack.c.b16 %v872, %v871
    %v888 = vpack.c.b16 %v874, %v873
    %v889 = vpack.c.b16 %v876, %v875
    %v890 = vpack.c.b16 %v878, %v877
    %v891 = vpack.c.b16 %v880, %v879
    %v892 = vpack.c.b16 %v882, %v881
    %v893 = vpack.c.b16 %v884, %v883
    %v894 = vpack.c.b16 %v886, %v885
    %903 = vmatprep.subr.bf16.mxu0 0
    %904 = vmatpush1.bf16.msra.mxu0 %v887
    %905 = vmatprep.subr.bf16.mxu0 0
    %906 = vmatpush1.bf16.msra.mxu0 %v888
    %907 = vmatprep.subr.bf16.mxu0 0
    %908 = vmatpush1.bf16.msra.mxu0 %v889
    %909 = vmatprep.subr.bf16.mxu0 0
    %910 = vmatpush1.bf16.msra.mxu0 %v890
    %911 = vmatprep.subr.bf16.mxu0 0
    %912 = vmatpush1.bf16.msra.mxu0 %v891
    %913 = vmatprep.subr.bf16.mxu0 0
    %914 = vmatpush1.bf16.msra.mxu0 %v892
    %915 = vmatprep.subr.bf16.mxu0 0
    %916 = vmatpush1.bf16.msra.mxu0 %v893
    %917 = vmatprep.subr.bf16.mxu0 0
    %918 = vmatpush1.bf16.msra.mxu0 %v894
    %919 = vmatprep.subr.bf16.mxu0 0
    %920 = vmatpush1.bf16.msra.mxu0 0
    %921 = vmatprep.subr.bf16.mxu0 0
    %922 = vmatpush1.bf16.msra.mxu0 0
    %923 = vmatprep.subr.bf16.mxu0 0
    %924 = vmatpush1.bf16.msra.mxu0 0
    %925 = vmatprep.subr.bf16.mxu0 0
    %926 = vmatpush1.bf16.msra.mxu0 0
    %927 = vmatprep.subr.bf16.mxu0 0
    %928 = vmatpush1.bf16.msra.mxu0 0
    %929 = vmatprep.subr.bf16.mxu0 0
    %930 = vmatpush1.bf16.msra.mxu0 0
    %931 = vmatprep.subr.bf16.mxu0 0
    %932 = vmatpush1.bf16.msra.mxu0 0
    %933 = vmatprep.subr.bf16.mxu0 0
    %934 = vmatpush1.bf16.msra.mxu0 0
    %935 = vmatprep.mubr.bf16.mxu0 0
    %936 = vmatmul.mubr.bf16.gmra.mrb[0].mxu0 %v854
    %v937 = vpop.f32.mrb[0].mxu0
    %v938 = vadd.f32 0.0, %v937
    %v939 = vpop.f32.mrb[0].mxu0
    %v940 = vpop.f32.mrb[0].mxu0
    %v941 = vpop.f32.mrb[0].mxu0
    %942 = vdwg.mxu0
    %v943 = vld [vmem:[#allocation5] sm:$0xf]
    %v944 = vld [vmem:[#allocation5 + $0x4] sm:$0xf]
    %v945 = vld [vmem:[#allocation5 + $0x8] sm:$0xf]
    %v946 = vld [vmem:[#allocation5 + $0xc] sm:$0xf]
    %v947 = vld [vmem:[#allocation5 + $0x10] sm:$0xf]
    %v948 = vld [vmem:[#allocation5 + $0x14] sm:$0xf]
    %v949 = vld [vmem:[#allocation5 + $0x18] sm:$0xf]
    %v950 = vld [vmem:[#allocation5 + $0x1c] sm:$0xf]
    %v951 = vld [vmem:[#allocation5 + $0x20] sm:$0xf]
    %v952 = vld [vmem:[#allocation5 + $0x24] sm:$0xf]
    %v953 = vld [vmem:[#allocation5 + $0x28] sm:$0xf]
    %v954 = vld [vmem:[#allocation5 + $0x2c] sm:$0xf]
    %v955 = vld [vmem:[#allocation5 + $0x30] sm:$0xf]
    %v956 = vld [vmem:[#allocation5 + $0x34] sm:$0xf]
    %v957 = vld [vmem:[#allocation5 + $0x38] sm:$0xf]
    %v958 = vld [vmem:[#allocation5 + $0x3c] sm:$0xf]
    %v959 = vlaneseq
    %v960 = vshrl.u32 %v959, 7
    %v961 = vsub.s32 1, %v960
    %v962 = vrot.slane %v92, %v961
    %v979 = vunpack.c.l.b16 %v943
    %v980 = vunpack.c.l.b16 %v944
    %v981 = vunpack.c.l.b16 %v945
    %v982 = vunpack.c.l.b16 %v946
    %v983 = vunpack.c.l.b16 %v947
    %v984 = vunpack.c.l.b16 %v948
    %v985 = vunpack.c.l.b16 %v949
    %v986 = vunpack.c.l.b16 %v950
    %v987 = vunpack.c.l.b16 %v951
    %v988 = vunpack.c.l.b16 %v952
    %v989 = vunpack.c.l.b16 %v953
    %v990 = vunpack.c.l.b16 %v954
    %v991 = vunpack.c.l.b16 %v955
    %v992 = vunpack.c.l.b16 %v956
    %v993 = vunpack.c.l.b16 %v957
    %v994 = vunpack.c.l.b16 %v958
    %v995 = vpack.c.b16 %v980, %v979
    %v996 = vpack.c.b16 %v982, %v981
    %v997 = vpack.c.b16 %v984, %v983
    %v998 = vpack.c.b16 %v986, %v985
    %v999 = vpack.c.b16 %v988, %v987
    %v1000 = vpack.c.b16 %v990, %v989
    %v1001 = vpack.c.b16 %v992, %v991
    %v1002 = vpack.c.b16 %v994, %v993
    %1011 = vmatprep.subr.bf16.mxu0 0
    %1012 = vmatpush1.bf16.msra.mxu0 %v995
    %1013 = vmatprep.subr.bf16.mxu0 0
    %1014 = vmatpush1.bf16.msra.mxu0 %v996
    %1015 = vmatprep.subr.bf16.mxu0 0
    %1016 = vmatpush1.bf16.msra.mxu0 %v997
    %1017 = vmatprep.subr.bf16.mxu0 0
    %1018 = vmatpush1.bf16.msra.mxu0 %v998
    %1019 = vmatprep.subr.bf16.mxu0 0
    %1020 = vmatpush1.bf16.msra.mxu0 %v999
    %1021 = vmatprep.subr.bf16.mxu0 0
    %1022 = vmatpush1.bf16.msra.mxu0 %v1000
    %1023 = vmatprep.subr.bf16.mxu0 0
    %1024 = vmatpush1.bf16.msra.mxu0 %v1001
    %1025 = vmatprep.subr.bf16.mxu0 0
    %1026 = vmatpush1.bf16.msra.mxu0 %v1002
    %1027 = vmatprep.subr.bf16.mxu0 0
    %1028 = vmatpush1.bf16.msra.mxu0 0
    %1029 = vmatprep.subr.bf16.mxu0 0
    %1030 = vmatpush1.bf16.msra.mxu0 0
    %1031 = vmatprep.subr.bf16.mxu0 0
    %1032 = vmatpush1.bf16.msra.mxu0 0
    %1033 = vmatprep.subr.bf16.mxu0 0
    %1034 = vmatpush1.bf16.msra.mxu0 0
    %1035 = vmatprep.subr.bf16.mxu0 0
    %1036 = vmatpush1.bf16.msra.mxu0 0
    %1037 = vmatprep.subr.bf16.mxu0 0
    %1038 = vmatpush1.bf16.msra.mxu0 0
    %1039 = vmatprep.subr.bf16.mxu0 0
    %1040 = vmatpush1.bf16.msra.mxu0 0
    %1041 = vmatprep.subr.bf16.mxu0 0
    %1042 = vmatpush1.bf16.msra.mxu0 0
    %1043 = vmatprep.mubr.bf16.mxu0 0
    %1044 = vmatmul.mubr.bf16.gmra.mrb[0].mxu0 %v854
    %v1045 = vpop.f32.mrb[0].mxu0
    %v1046 = vadd.f32 %v962, %v1045
    %v1047 = vpop.f32.mrb[0].mxu0
    %v1048 = vpop.f32.mrb[0].mxu0
    %v1049 = vpop.f32.mrb[0].mxu0
    %1050 = vdwg.mxu0
    %v1051 = vpack.c.bf16 %v832, %v832
    %v1052 = vpack.c.bf16 %v833, %v833
    %v1055 = vunpack.c.l.b16 %v1051
    %v1056 = vunpack.c.l.b16 %v1052
    %v1057 = vrot.slane %v1055, 7
    %v1058 = vrot.slane %v1056, 6
    %vm1059 = vcmask 1041409
    %v1060 = vsel %vm1059, %v1058, %v1057
    %v1061 = vpack.c.b16 %v1060, %v1060
    %1063 = vmatprep.subr.bf16.mxu0 0
    %1064 = vmatpush1.bf16.msra.mxu0 %v887
    %1065 = vmatprep.subr.bf16.mxu0 0
    %1066 = vmatpush1.bf16.msra.mxu0 %v888
    %1067 = vmatprep.subr.bf16.mxu0 0
    %1068 = vmatpush1.bf16.msra.mxu0 %v889
    %1069 = vmatprep.subr.bf16.mxu0 0
    %1070 = vmatpush1.bf16.msra.mxu0 %v890
    %1071 = vmatprep.subr.bf16.mxu0 0
    %1072 = vmatpush1.bf16.msra.mxu0 %v891
    %1073 = vmatprep.subr.bf16.mxu0 0
    %1074 = vmatpush1.bf16.msra.mxu0 %v892
    %1075 = vmatprep.subr.bf16.mxu0 0
    %1076 = vmatpush1.bf16.msra.mxu0 %v893
    %1077 = vmatprep.subr.bf16.mxu0 0
    %1078 = vmatpush1.bf16.msra.mxu0 %v894
    %1079 = vmatprep.subr.bf16.mxu0 0
    %1080 = vmatpush1.bf16.msra.mxu0 0
    %1081 = vmatprep.subr.bf16.mxu0 0
    %1082 = vmatpush1.bf16.msra.mxu0 0
    %1083 = vmatprep.subr.bf16.mxu0 0
    %1084 = vmatpush1.bf16.msra.mxu0 0
    %1085 = vmatprep.subr.bf16.mxu0 0
    %1086 = vmatpush1.bf16.msra.mxu0 0
    %1087 = vmatprep.subr.bf16.mxu0 0
    %1088 = vmatpush1.bf16.msra.mxu0 0
    %1089 = vmatprep.subr.bf16.mxu0 0
    %1090 = vmatpush1.bf16.msra.mxu0 0
    %1091 = vmatprep.subr.bf16.mxu0 0
    %1092 = vmatpush1.bf16.msra.mxu0 0
    %1093 = vmatprep.subr.bf16.mxu0 0
    %1094 = vmatpush1.bf16.msra.mxu0 0
    %1095 = vmatprep.mubr.bf16.mxu0 0
    %1096 = vmatmul.mubr.bf16.gmra.mrb[0].mxu0 %v1061
    %v1097 = vpop.f32.mrb[0].mxu0
    %v1098 = vadd.f32 0.0, %v1097
    %v1099 = vpop.f32.mrb[0].mxu0
    %v1100 = vpop.f32.mrb[0].mxu0
    %v1101 = vpop.f32.mrb[0].mxu0
    %1102 = vdwg.mxu0
    %v1103 = vld [vmem:[#allocation7] sm:$0xf]
    %v1104 = vld [vmem:[#allocation7 + $0x4] sm:$0xf]
    %v1105 = vld [vmem:[#allocation7 + $0x8] sm:$0xf]
    %v1106 = vld [vmem:[#allocation7 + $0xc] sm:$0xf]
    %v1107 = vld [vmem:[#allocation7 + $0x10] sm:$0xf]
    %v1108 = vld [vmem:[#allocation7 + $0x14] sm:$0xf]
    %v1109 = vld [vmem:[#allocation7 + $0x18] sm:$0xf]
    %v1110 = vld [vmem:[#allocation7 + $0x1c] sm:$0xf]
    %v1111 = vld [vmem:[#allocation7 + $0x20] sm:$0xf]
    %v1112 = vld [vmem:[#allocation7 + $0x24] sm:$0xf]
    %v1113 = vld [vmem:[#allocation7 + $0x28] sm:$0xf]
    %v1114 = vld [vmem:[#allocation7 + $0x2c] sm:$0xf]
    %v1115 = vld [vmem:[#allocation7 + $0x30] sm:$0xf]
    %v1116 = vld [vmem:[#allocation7 + $0x34] sm:$0xf]
    %v1117 = vld [vmem:[#allocation7 + $0x38] sm:$0xf]
    %v1118 = vld [vmem:[#allocation7 + $0x3c] sm:$0xf]
    %v1119 = vpack.c.b16 %v1056, %v1055
    %v1137 = vunpack.c.l.b16 %v1103
    %v1138 = vunpack.c.l.b16 %v1104
    %v1139 = vunpack.c.l.b16 %v1105
    %v1140 = vunpack.c.l.b16 %v1106
    %v1141 = vunpack.c.l.b16 %v1107
    %v1142 = vunpack.c.l.b16 %v1108
    %v1143 = vunpack.c.l.b16 %v1109
    %v1144 = vunpack.c.l.b16 %v1110
    %v1145 = vunpack.c.l.b16 %v1111
    %v1146 = vunpack.c.l.b16 %v1112
    %v1147 = vunpack.c.l.b16 %v1113
    %v1148 = vunpack.c.l.b16 %v1114
    %v1149 = vunpack.c.l.b16 %v1115
    %v1150 = vunpack.c.l.b16 %v1116
    %v1151 = vunpack.c.l.b16 %v1117
    %v1152 = vunpack.c.l.b16 %v1118
    %v1153 = vpack.c.b16 %v1138, %v1137
    %v1154 = vpack.c.b16 %v1140, %v1139
    %v1155 = vpack.c.b16 %v1142, %v1141
    %v1156 = vpack.c.b16 %v1144, %v1143
    %v1157 = vpack.c.b16 %v1146, %v1145
    %v1158 = vpack.c.b16 %v1148, %v1147
    %v1159 = vpack.c.b16 %v1150, %v1149
    %v1160 = vpack.c.b16 %v1152, %v1151
    %1169 = vmatprep.subr.bf16.mxu0 0
    %1170 = vmatpush1.bf16.msra.mxu0 %v1153
    %1171 = vmatprep.subr.bf16.mxu0 0
    %1172 = vmatpush1.bf16.msra.mxu0 %v1154
    %1173 = vmatprep.subr.bf16.mxu0 0
    %1174 = vmatpush1.bf16.msra.mxu0 %v1155
    %1175 = vmatprep.subr.bf16.mxu0 0
    %1176 = vmatpush1.bf16.msra.mxu0 %v1156
    %1177 = vmatprep.subr.bf16.mxu0 0
    %1178 = vmatpush1.bf16.msra.mxu0 %v1157
    %1179 = vmatprep.subr.bf16.mxu0 0
    %1180 = vmatpush1.bf16.msra.mxu0 %v1158
    %1181 = vmatprep.subr.bf16.mxu0 0
    %1182 = vmatpush1.bf16.msra.mxu0 %v1159
    %1183 = vmatprep.subr.bf16.mxu0 0
    %1184 = vmatpush1.bf16.msra.mxu0 %v1160
    %1185 = vmatprep.subr.bf16.mxu0 0
    %1186 = vmatpush1.bf16.msra.mxu0 0
    %1187 = vmatprep.subr.bf16.mxu0 0
    %1188 = vmatpush1.bf16.msra.mxu0 0
    %1189 = vmatprep.subr.bf16.mxu0 0
    %1190 = vmatpush1.bf16.msra.mxu0 0
    %1191 = vmatprep.subr.bf16.mxu0 0
    %1192 = vmatpush1.bf16.msra.mxu0 0
    %1193 = vmatprep.subr.bf16.mxu0 0
    %1194 = vmatpush1.bf16.msra.mxu0 0
    %1195 = vmatprep.subr.bf16.mxu0 0
    %1196 = vmatpush1.bf16.msra.mxu0 0
    %1197 = vmatprep.subr.bf16.mxu0 0
    %1198 = vmatpush1.bf16.msra.mxu0 0
    %1199 = vmatprep.subr.bf16.mxu0 0
    %1200 = vmatpush1.bf16.msra.mxu0 0
    %1201 = vmatprep.mubr.bf16.mxu0 0
    %1202 = vmatmul.mubr.bf16.gmra.mrb[0].mxu0 %v1119
    %v1203 = vpop.f32.mrb[0].mxu0
    %v1204 = vadd.f32 0.0, %v1203
    %v1205 = vpop.f32.mrb[0].mxu0
    %v1206 = vpop.f32.mrb[0].mxu0
    %v1207 = vadd.f32 0.0, %v1206
    %v1208 = vpop.f32.mrb[0].mxu0
    %1209 = vdwg.mxu0
    %v1212 = vrot.slane %v1204, 6
    %v1213 = vrot.slane %v1207, 6
    %vm1216 = vcmask 1041408
    %v1217 = vsel %vm1216, 0.0, %v1212
    %v1218 = vsel %vm1216, 0.0, %v1213
    %v1219 = vadd.f32 %v938, %v1098
    %vm1220 = vcmask 74752
    %v1221 = vsel %vm1220, %v1219, -inf
    %1222 = vmax.xlane.f32.xlu0 %v1221
    %v1223 = vpop.xlane.xlu0 %1222
    %v1224 = vsub.f32 %v1219, %v1223
    %v1225 = vmul.f32 %v1224, 1.442695
    %v1226 = vpow.pop %v1225
    %v1227 = vsel %vm1220, %v1226, 0.0
    %1228 = vadd.xlane.f32.xlu0 %v1227
    %v1229 = vpop.xlane.xlu0 %1228
    %v1230 = vrcp.pop %v1229
    %v1231 = vmul.f32 %v1226, %v1230
    %v1232 = vlaneseq
    %v1233 = vshrl.u32 %v1232, 7
    %v1234 = vsub.s32 0, %v1233
    %v1235 = vrot.slane %v1231, %v1234
    %1237 = vbcast.lane.b32.xlu0 %v1235, 256
    %v1238 = vpop.permute.xlu0 %1237
    %s1240 = sor.u32 256, 8
    %1241 = vbcast.lane.b32.xlu0 %v1235, %s1240
    %v1242 = vpop.permute.xlu0 %1241
    %v1243 = vlaneseq
    %v1244 = vshrl.u32 %v1243, 7
    %v1245 = vsub.s32 1, %v1244
    %v1246 = vrot.slane %v1231, %v1245
    %1248 = vbcast.lane.b32.xlu0 %v1246, 256
    %v1249 = vpop.permute.xlu0 %1248
    %s1251 = sor.u32 256, 8
    %1252 = vbcast.lane.b32.xlu0 %v1246, %s1251
    %v1253 = vpop.permute.xlu0 %1252
    %v1254 = vmul.f32 %v1238, %v1217
    %v1255 = vmul.f32 %v1242, %v1212
    %v1256 = vmul.f32 %v1249, %v1218
    %v1257 = vmul.f32 %v1253, %v1213
    %v1258 = vsel %vm1216, %v1255, 0.0
    %v1259 = vadd.f32 %v1254, %v1258
    %v1260 = vrot.slane %v1259, 4
    %v1261 = vadd.f32 %v1259, %v1260
    %v1262 = vrot.slane %v1261, 2
    %v1263 = vadd.f32 %v1261, %v1262
    %v1264 = vrot.slane %v1263, 1
    %v1265 = vadd.f32 %v1263, %v1264
    %v1266 = vsel %vm1216, %v1257, 0.0
    %v1267 = vadd.f32 %v1256, %v1266
    %v1268 = vrot.slane %v1267, 4
    %v1269 = vadd.f32 %v1267, %v1268
    %v1270 = vrot.slane %v1269, 2
    %v1271 = vadd.f32 %v1269, %v1270
    %v1272 = vrot.slane %v1271, 1
    %v1273 = vadd.f32 %v1271, %v1272
    %v1276 = vsel %vm1059, %v1273, %v1265
    %v1278 = vadd.f32 %v1046, %v1276
    %v1279 = vmax.f32 %v1278, 0.0
    %v1282 = vrot.slane %v832, 7
    %v1283 = vrot.slane %v833, 6
    %v1284 = vsel %vm1059, %v1283, %v1282
    %v1286 = vpack.c.bf16 %v1279, %v1279
    %v1287 = vpack.c.bf16 %v1284, %v1284
    %v1288 = vld [vmem:[#allocation8] sm:$0xff]
    %v1289 = vld [vmem:[#allocation8 + $0x8] sm:$0xff]
    %v1290 = vld [vmem:[#allocation8 + $0x10] sm:$0xff]
    %v1291 = vld [vmem:[#allocation8 + $0x18] sm:$0xff]
    %v1292 = vld [vmem:[#allocation8 + $0x20] sm:$0xff]
    %v1293 = vld [vmem:[#allocation8 + $0x28] sm:$0xff]
    %v1294 = vld [vmem:[#allocation8 + $0x30] sm:$0xff]
    %v1295 = vld [vmem:[#allocation8 + $0x38] sm:$0xff]
    %v1296 = vld [vmem:[#allocation8 + $0x40] sm:$0xff]
    %v1297 = vld [vmem:[#allocation8 + $0x48] sm:$0xff]
    %v1298 = vld [vmem:[#allocation8 + $0x50] sm:$0xff]
    %v1299 = vld [vmem:[#allocation8 + $0x58] sm:$0xff]
    %v1300 = vld [vmem:[#allocation8 + $0x60] sm:$0xff]
    %v1301 = vld [vmem:[#allocation8 + $0x68] sm:$0xff]
    %v1302 = vld [vmem:[#allocation8 + $0x70] sm:$0xff]
    %v1303 = vld [vmem:[#allocation8 + $0x78] sm:$0xff]
    %v1304 = vld [vmem:[#allocation8 + $0x80] sm:$0xff]
    %v1305 = vld [vmem:[#allocation8 + $0x88] sm:$0xff]
    %v1306 = vld [vmem:[#allocation8 + $0x90] sm:$0xff]
    %v1307 = vld [vmem:[#allocation8 + $0x98] sm:$0xff]
    %v1308 = vld [vmem:[#allocation8 + $0xa0] sm:$0xff]
    %v1309 = vld [vmem:[#allocation8 + $0xa8] sm:$0xff]
    %v1310 = vld [vmem:[#allocation8 + $0xb0] sm:$0xff]
    %v1311 = vld [vmem:[#allocation8 + $0xb8] sm:$0xff]
    %v1312 = vld [vmem:[#allocation8 + $0xc0] sm:$0xff]
    %v1313 = vld [vmem:[#allocation8 + $0xc8] sm:$0xff]
    %v1314 = vld [vmem:[#allocation8 + $0xd0] sm:$0xff]
    %v1315 = vld [vmem:[#allocation8 + $0xd8] sm:$0xff]
    %v1316 = vld [vmem:[#allocation8 + $0xe0] sm:$0xff]
    %v1317 = vld [vmem:[#allocation8 + $0xe8] sm:$0xff]
    %v1318 = vld [vmem:[#allocation8 + $0xf0] sm:$0xff]
    %v1319 = vld [vmem:[#allocation8 + $0xf8] sm:$0xff]
    %v1320 = vld [vmem:[#allocation8 + $0x100] sm:$0xff]
    %v1321 = vld [vmem:[#allocation8 + $0x108] sm:$0xff]
    %v1322 = vld [vmem:[#allocation8 + $0x110] sm:$0xff]
    %v1323 = vld [vmem:[#allocation8 + $0x118] sm:$0xff]
    %v1324 = vld [vmem:[#allocation8 + $0x120] sm:$0xff]
    %v1325 = vld [vmem:[#allocation8 + $0x128] sm:$0xff]
    %v1326 = vld [vmem:[#allocation8 + $0x130] sm:$0xff]
    %v1327 = vld [vmem:[#allocation8 + $0x138] sm:$0xff]
    %v1328 = vld [vmem:[#allocation8 + $0x140] sm:$0xff]
    %v1329 = vld [vmem:[#allocation8 + $0x148] sm:$0xff]
    %v1330 = vld [vmem:[#allocation8 + $0x150] sm:$0xff]
    %v1331 = vld [vmem:[#allocation8 + $0x158] sm:$0xff]
    %v1332 = vld [vmem:[#allocation8 + $0x160] sm:$0xff]
    %v1333 = vld [vmem:[#allocation8 + $0x168] sm:$0xff]
    %v1334 = vld [vmem:[#allocation8 + $0x170] sm:$0xff]
    %v1335 = vld [vmem:[#allocation8 + $0x178] sm:$0xff]
    %v1336 = vld [vmem:[#allocation8 + $0x180] sm:$0xff]
    %v1337 = vld [vmem:[#allocation8 + $0x188] sm:$0xff]
    %v1338 = vld [vmem:[#allocation8 + $0x190] sm:$0xff]
    %v1339 = vld [vmem:[#allocation8 + $0x198] sm:$0xff]
    %v1340 = vld [vmem:[#allocation8 + $0x1a0] sm:$0xff]
    %v1341 = vld [vmem:[#allocation8 + $0x1a8] sm:$0xff]
    %v1342 = vld [vmem:[#allocation8 + $0x1b0] sm:$0xff]
    %v1343 = vld [vmem:[#allocation8 + $0x1b8] sm:$0xff]
    %v1344 = vld [vmem:[#allocation8 + $0x1c0] sm:$0xff]
    %v1345 = vld [vmem:[#allocation8 + $0x1c8] sm:$0xff]
    %v1346 = vld [vmem:[#allocation8 + $0x1d0] sm:$0xff]
    %v1347 = vld [vmem:[#allocation8 + $0x1d8] sm:$0xff]
    %v1348 = vld [vmem:[#allocation8 + $0x1e0] sm:$0xff]
    %v1349 = vld [vmem:[#allocation8 + $0x1e8] sm:$0xff]
    %v1350 = vld [vmem:[#allocation8 + $0x1f0] sm:$0xff]
    %v1351 = vld [vmem:[#allocation8 + $0x1f8] sm:$0xff]
    %v1352 = vld [vmem:[%s6] sm:$0xf]
    %v1354 = vlaneseq
    %v1355 = vshrl.u32 %v1354, 7
    %v1356 = vsub.s32 0, %v1355
    %v1357 = vrot.slane %v1352, %v1356
    %v1358 = vlaneseq
    %v1359 = vshrl.u32 %v1358, 7
    %v1360 = vsub.s32 1, %v1359
    %v1361 = vrot.slane %v1352, %v1360
    %v1362 = vlaneseq
    %v1363 = vshrl.u32 %v1362, 7
    %v1364 = vsub.s32 2, %v1363
    %v1365 = vrot.slane %v1352, %v1364
    %v1366 = vlaneseq
    %v1367 = vshrl.u32 %v1366, 7
    %v1368 = vsub.s32 3, %v1367
    %v1369 = vrot.slane %v1352, %v1368
    %v1438 = vunpack.c.l.b16 %v1288
    %v1439 = vunpack.c.h.b16 %v1288
    %v1440 = vunpack.c.l.b16 %v1289
    %v1441 = vunpack.c.h.b16 %v1289
    %v1442 = vunpack.c.l.b16 %v1290
    %v1443 = vunpack.c.h.b16 %v1290
    %v1444 = vunpack.c.l.b16 %v1291
    %v1445 = vunpack.c.h.b16 %v1291
    %v1446 = vunpack.c.l.b16 %v1292
    %v1447 = vunpack.c.h.b16 %v1292
    %v1448 = vunpack.c.l.b16 %v1293
    %v1449 = vunpack.c.h.b16 %v1293
    %v1450 = vunpack.c.l.b16 %v1294
    %v1451 = vunpack.c.h.b16 %v1294
    %v1452 = vunpack.c.l.b16 %v1295
    %v1453 = vunpack.c.h.b16 %v1295
    %v1454 = vunpack.c.l.b16 %v1296
    %v1455 = vunpack.c.h.b16 %v1296
    %v1456 = vunpack.c.l.b16 %v1297
    %v1457 = vunpack.c.h.b16 %v1297
    %v1458 = vunpack.c.l.b16 %v1298
    %v1459 = vunpack.c.h.b16 %v1298
    %v1460 = vunpack.c.l.b16 %v1299
    %v1461 = vunpack.c.h.b16 %v1299
    %v1462 = vunpack.c.l.b16 %v1300
    %v1463 = vunpack.c.h.b16 %v1300
    %v1464 = vunpack.c.l.b16 %v1301
    %v1465 = vunpack.c.h.b16 %v1301
    %v1466 = vunpack.c.l.b16 %v1302
    %v1467 = vunpack.c.h.b16 %v1302
    %v1468 = vunpack.c.l.b16 %v1303
    %v1469 = vunpack.c.h.b16 %v1303
    %v1470 = vunpack.c.l.b16 %v1304
    %v1471 = vunpack.c.h.b16 %v1304
    %v1472 = vunpack.c.l.b16 %v1305
    %v1473 = vunpack.c.h.b16 %v1305
    %v1474 = vunpack.c.l.b16 %v1306
    %v1475 = vunpack.c.h.b16 %v1306
    %v1476 = vunpack.c.l.b16 %v1307
    %v1477 = vunpack.c.h.b16 %v1307
    %v1478 = vunpack.c.l.b16 %v1308
    %v1479 = vunpack.c.h.b16 %v1308
    %v1480 = vunpack.c.l.b16 %v1309
    %v1481 = vunpack.c.h.b16 %v1309
    %v1482 = vunpack.c.l.b16 %v1310
    %v1483 = vunpack.c.h.b16 %v1310
    %v1484 = vunpack.c.l.b16 %v1311
    %v1485 = vunpack.c.h.b16 %v1311
    %v1486 = vunpack.c.l.b16 %v1312
    %v1487 = vunpack.c.h.b16 %v1312
    %v1488 = vunpack.c.l.b16 %v1313
    %v1489 = vunpack.c.h.b16 %v1313
    %v1490 = vunpack.c.l.b16 %v1314
    %v1491 = vunpack.c.h.b16 %v1314
    %v1492 = vunpack.c.l.b16 %v1315
    %v1493 = vunpack.c.h.b16 %v1315
    %v1494 = vunpack.c.l.b16 %v1316
    %v1495 = vunpack.c.h.b16 %v1316
    %v1496 = vunpack.c.l.b16 %v1317
    %v1497 = vunpack.c.h.b16 %v1317
    %v1498 = vunpack.c.l.b16 %v1318
    %v1499 = vunpack.c.h.b16 %v1318
    %v1500 = vunpack.c.l.b16 %v1319
    %v1501 = vunpack.c.h.b16 %v1319
    %v1502 = vunpack.c.l.b16 %v1320
    %v1503 = vunpack.c.h.b16 %v1320
    %v1504 = vunpack.c.l.b16 %v1321
    %v1505 = vunpack.c.h.b16 %v1321
    %v1506 = vunpack.c.l.b16 %v1322
    %v1507 = vunpack.c.h.b16 %v1322
    %v1508 = vunpack.c.l.b16 %v1323
    %v1509 = vunpack.c.h.b16 %v1323
    %v1510 = vunpack.c.l.b16 %v1324
    %v1511 = vunpack.c.h.b16 %v1324
    %v1512 = vunpack.c.l.b16 %v1325
    %v1513 = vunpack.c.h.b16 %v1325
    %v1514 = vunpack.c.l.b16 %v1326
    %v1515 = vunpack.c.h.b16 %v1326
    %v1516 = vunpack.c.l.b16 %v1327
    %v1517 = vunpack.c.h.b16 %v1327
    %v1518 = vunpack.c.l.b16 %v1328
    %v1519 = vunpack.c.h.b16 %v1328
    %v1520 = vunpack.c.l.b16 %v1329
    %v1521 = vunpack.c.h.b16 %v1329
    %v1522 = vunpack.c.l.b16 %v1330
    %v1523 = vunpack.c.h.b16 %v1330
    %v1524 = vunpack.c.l.b16 %v1331
    %v1525 = vunpack.c.h.b16 %v1331
    %v1526 = vunpack.c.l.b16 %v1332
    %v1527 = vunpack.c.h.b16 %v1332
    %v1528 = vunpack.c.l.b16 %v1333
    %v1529 = vunpack.c.h.b16 %v1333
    %v1530 = vunpack.c.l.b16 %v1334
    %v1531 = vunpack.c.h.b16 %v1334
    %v1532 = vunpack.c.l.b16 %v1335
    %v1533 = vunpack.c.h.b16 %v1335
    %v1534 = vunpack.c.l.b16 %v1336
    %v1535 = vunpack.c.h.b16 %v1336
    %v1536 = vunpack.c.l.b16 %v1337
    %v1537 = vunpack.c.h.b16 %v1337
    %v1538 = vunpack.c.l.b16 %v1338
    %v1539 = vunpack.c.h.b16 %v1338
    %v1540 = vunpack.c.l.b16 %v1339
    %v1541 = vunpack.c.h.b16 %v1339
    %v1542 = vunpack.c.l.b16 %v1340
    %v1543 = vunpack.c.h.b16 %v1340
    %v1544 = vunpack.c.l.b16 %v1341
    %v1545 = vunpack.c.h.b16 %v1341
    %v1546 = vunpack.c.l.b16 %v1342
    %v1547 = vunpack.c.h.b16 %v1342
    %v1548 = vunpack.c.l.b16 %v1343
    %v1549 = vunpack.c.h.b16 %v1343
    %v1550 = vunpack.c.l.b16 %v1344
    %v1551 = vunpack.c.h.b16 %v1344
    %v1552 = vunpack.c.l.b16 %v1345
    %v1553 = vunpack.c.h.b16 %v1345
    %v1554 = vunpack.c.l.b16 %v1346
    %v1555 = vunpack.c.h.b16 %v1346
    %v1556 = vunpack.c.l.b16 %v1347
    %v1557 = vunpack.c.h.b16 %v1347
    %v1558 = vunpack.c.l.b16 %v1348
    %v1559 = vunpack.c.h.b16 %v1348
    %v1560 = vunpack.c.l.b16 %v1349
    %v1561 = vunpack.c.h.b16 %v1349
    %v1562 = vunpack.c.l.b16 %v1350
    %v1563 = vunpack.c.h.b16 %v1350
    %v1564 = vunpack.c.l.b16 %v1351
    %v1565 = vunpack.c.h.b16 %v1351
    %v1566 = vpack.c.b16 %v1442, %v1438
    %v1567 = vpack.c.b16 %v1443, %v1439
    %v1568 = vpack.c.b16 %v1444, %v1440
    %v1569 = vpack.c.b16 %v1445, %v1441
    %v1570 = vpack.c.b16 %v1450, %v1446
    %v1571 = vpack.c.b16 %v1451, %v1447
    %v1572 = vpack.c.b16 %v1452, %v1448
    %v1573 = vpack.c.b16 %v1453, %v1449
    %v1574 = vpack.c.b16 %v1458, %v1454
    %v1575 = vpack.c.b16 %v1459, %v1455
    %v1576 = vpack.c.b16 %v1460, %v1456
    %v1577 = vpack.c.b16 %v1461, %v1457
    %v1578 = vpack.c.b16 %v1466, %v1462
    %v1579 = vpack.c.b16 %v1467, %v1463
    %v1580 = vpack.c.b16 %v1468, %v1464
    %v1581 = vpack.c.b16 %v1469, %v1465
    %v1582 = vpack.c.b16 %v1474, %v1470
    %v1583 = vpack.c.b16 %v1475, %v1471
    %v1584 = vpack.c.b16 %v1476, %v1472
    %v1585 = vpack.c.b16 %v1477, %v1473
    %v1586 = vpack.c.b16 %v1482, %v1478
    %v1587 = vpack.c.b16 %v1483, %v1479
    %v1588 = vpack.c.b16 %v1484, %v1480
    %v1589 = vpack.c.b16 %v1485, %v1481
    %v1590 = vpack.c.b16 %v1490, %v1486
    %v1591 = vpack.c.b16 %v1491, %v1487
    %v1592 = vpack.c.b16 %v1492, %v1488
    %v1593 = vpack.c.b16 %v1493, %v1489
    %v1594 = vpack.c.b16 %v1498, %v1494
    %v1595 = vpack.c.b16 %v1499, %v1495
    %v1596 = vpack.c.b16 %v1500, %v1496
    %v1597 = vpack.c.b16 %v1501, %v1497
    %v1598 = vpack.c.b16 %v1506, %v1502
    %v1599 = vpack.c.b16 %v1507, %v1503
    %v1600 = vpack.c.b16 %v1508, %v1504
    %v1601 = vpack.c.b16 %v1509, %v1505
    %v1602 = vpack.c.b16 %v1514, %v1510
    %v1603 = vpack.c.b16 %v1515, %v1511
    %v1604 = vpack.c.b16 %v1516, %v1512
    %v1605 = vpack.c.b16 %v1517, %v1513
    %v1606 = vpack.c.b16 %v1522, %v1518
    %v1607 = vpack.c.b16 %v1523, %v1519
    %v1608 = vpack.c.b16 %v1524, %v1520
    %v1609 = vpack.c.b16 %v1525, %v1521
    %v1610 = vpack.c.b16 %v1530, %v1526
    %v1611 = vpack.c.b16 %v1531, %v1527
    %v1612 = vpack.c.b16 %v1532, %v1528
    %v1613 = vpack.c.b16 %v1533, %v1529
    %v1614 = vpack.c.b16 %v1538, %v1534
    %v1615 = vpack.c.b16 %v1539, %v1535
    %v1616 = vpack.c.b16 %v1540, %v1536
    %v1617 = vpack.c.b16 %v1541, %v1537
    %v1618 = vpack.c.b16 %v1546, %v1542
    %v1619 = vpack.c.b16 %v1547, %v1543
    %v1620 = vpack.c.b16 %v1548, %v1544
    %v1621 = vpack.c.b16 %v1549, %v1545
    %v1622 = vpack.c.b16 %v1554, %v1550
    %v1623 = vpack.c.b16 %v1555, %v1551
    %v1624 = vpack.c.b16 %v1556, %v1552
    %v1625 = vpack.c.b16 %v1557, %v1553
    %v1626 = vpack.c.b16 %v1562, %v1558
    %v1627 = vpack.c.b16 %v1563, %v1559
    %v1628 = vpack.c.b16 %v1564, %v1560
    %v1629 = vpack.c.b16 %v1565, %v1561
    %1694 = vmatprep.subr.bf16.mxu0 %v1567
    %1695 = vmatpush1.bf16.msra.mxu0 %v1566
    %1696 = vmatprep.subr.bf16.mxu0 %v1571
    %1697 = vmatpush1.bf16.msra.mxu0 %v1570
    %1698 = vmatprep.subr.bf16.mxu0 %v1575
    %1699 = vmatpush1.bf16.msra.mxu0 %v1574
    %1700 = vmatprep.subr.bf16.mxu0 %v1579
    %1701 = vmatpush1.bf16.msra.mxu0 %v1578
    %1702 = vmatprep.subr.bf16.mxu0 %v1583
    %1703 = vmatpush1.bf16.msra.mxu0 %v1582
    %1704 = vmatprep.subr.bf16.mxu0 %v1587
    %1705 = vmatpush1.bf16.msra.mxu0 %v1586
    %1706 = vmatprep.subr.bf16.mxu0 %v1591
    %1707 = vmatpush1.bf16.msra.mxu0 %v1590
    %1708 = vmatprep.subr.bf16.mxu0 %v1595
    %1709 = vmatpush1.bf16.msra.mxu0 %v1594
    %1710 = vmatprep.subr.bf16.mxu0 %v1599
    %1711 = vmatpush1.bf16.msra.mxu0 %v1598
    %1712 = vmatprep.subr.bf16.mxu0 %v1603
    %1713 = vmatpush1.bf16.msra.mxu0 %v1602
    %1714 = vmatprep.subr.bf16.mxu0 %v1607
    %1715 = vmatpush1.bf16.msra.mxu0 %v1606
    %1716 = vmatprep.subr.bf16.mxu0 %v1611
    %1717 = vmatpush1.bf16.msra.mxu0 %v1610
    %1718 = vmatprep.subr.bf16.mxu0 %v1615
    %1719 = vmatpush1.bf16.msra.mxu0 %v1614
    %1720 = vmatprep.subr.bf16.mxu0 %v1619
    %1721 = vmatpush1.bf16.msra.mxu0 %v1618
    %1722 = vmatprep.subr.bf16.mxu0 %v1623
    %1723 = vmatpush1.bf16.msra.mxu0 %v1622
    %1724 = vmatprep.subr.bf16.mxu0 %v1627
    %1725 = vmatpush1.bf16.msra.mxu0 %v1626
    %1726 = vmatprep.mubr.bf16.mxu0 %v1287
    %1727 = vmatmul.mubr.bf16.gmra.mrb[0].mxu0 %v1286
    %v1728 = vpop.f32.mrb[0].mxu0
    %v1729 = vadd.f32 %v1357, %v1728
    %v1730 = vpop.f32.mrb[0].mxu0
    %v1731 = vadd.f32 %v1361, %v1730
    %v1732 = vpop.f32.mrb[0].mxu0
    %v1733 = vpop.f32.mrb[0].mxu0
    %1734 = vdwg.mxu0
    %1735 = vmatprep.subr.bf16.mxu0 %v1569
    %1736 = vmatpush1.bf16.msra.mxu0 %v1568
    %1737 = vmatprep.subr.bf16.mxu0 %v1573
    %1738 = vmatpush1.bf16.msra.mxu0 %v1572
    %1739 = vmatprep.subr.bf16.mxu0 %v1577
    %1740 = vmatpush1.bf16.msra.mxu0 %v1576
    %1741 = vmatprep.subr.bf16.mxu0 %v1581
    %1742 = vmatpush1.bf16.msra.mxu0 %v1580
    %1743 = vmatprep.subr.bf16.mxu0 %v1585
    %1744 = vmatpush1.bf16.msra.mxu0 %v1584
    %1745 = vmatprep.subr.bf16.mxu0 %v1589
    %1746 = vmatpush1.bf16.msra.mxu0 %v1588
    %1747 = vmatprep.subr.bf16.mxu0 %v1593
    %1748 = vmatpush1.bf16.msra.mxu0 %v1592
    %1749 = vmatprep.subr.bf16.mxu0 %v1597
    %1750 = vmatpush1.bf16.msra.mxu0 %v1596
    %1751 = vmatprep.subr.bf16.mxu0 %v1601
    %1752 = vmatpush1.bf16.msra.mxu0 %v1600
    %1753 = vmatprep.subr.bf16.mxu0 %v1605
    %1754 = vmatpush1.bf16.msra.mxu0 %v1604
    %1755 = vmatprep.subr.bf16.mxu0 %v1609
    %1756 = vmatpush1.bf16.msra.mxu0 %v1608
    %1757 = vmatprep.subr.bf16.mxu0 %v1613
    %1758 = vmatpush1.bf16.msra.mxu0 %v1612
    %1759 = vmatprep.subr.bf16.mxu0 %v1617
    %1760 = vmatpush1.bf16.msra.mxu0 %v1616
    %1761 = vmatprep.subr.bf16.mxu0 %v1621
    %1762 = vmatpush1.bf16.msra.mxu0 %v1620
    %1763 = vmatprep.subr.bf16.mxu0 %v1625
    %1764 = vmatpush1.bf16.msra.mxu0 %v1624
    %1765 = vmatprep.subr.bf16.mxu0 %v1629
    %1766 = vmatpush1.bf16.msra.mxu0 %v1628
    %1767 = vmatprep.mubr.bf16.mxu0 %v1287
    %1768 = vmatmul.mubr.bf16.gmra.mrb[0].mxu0 %v1286
    %v1769 = vpop.f32.mrb[0].mxu0
    %v1770 = vadd.f32 %v1365, %v1769
    %v1771 = vpop.f32.mrb[0].mxu0
    %v1772 = vadd.f32 %v1369, %v1771
    %v1773 = vpop.f32.mrb[0].mxu0
    %v1774 = vpop.f32.mrb[0].mxu0
    %1775 = vdwg.mxu0
    %v1776 = vxor.u32 %v1729, 2147483648
    %v1777 = vmul.f32 %v1776, 1.442695
    %v1778 = vpow.pop %v1777
    %v1779 = vadd.f32 %v1778, 1.0
    %v1780 = vrcp.pop %v1779
    %v1781 = vmul.f32 1.0, %v1780
    %v1782 = vxor.u32 %v1731, 2147483648
    %v1783 = vmul.f32 %v1782, 1.442695
    %v1784 = vpow.pop %v1783
    %v1785 = vadd.f32 %v1784, 1.0
    %v1786 = vrcp.pop %v1785
    %v1787 = vmul.f32 1.0, %v1786
    %v1788 = vmul.f32 %v1781, %v1772
    %v1789 = vadd.f32 %v1770, %v1788
    %v1790 = vtanh.pop %v1789
    %v1791 = vsub.f32 1.0, %v1787
    %v1792 = vmul.f32 %v1791, %v1790
    %v1793 = vmul.f32 %v1787, %v1284
    %v1794 = vadd.f32 %v1792, %v1793
    %v1795 = vpack.c.bf16 %v1794, %v1794
    %s1796 = scalar_lea.vmem [#allocation8], 512
    %v1797 = vld [vmem:[%s1796] sm:$0xff]
    %v1798 = vld [vmem:[%s1796 + $0x8] sm:$0xff]
    %v1799 = vld [vmem:[%s1796 + $0x10] sm:$0xff]
    %v1800 = vld [vmem:[%s1796 + $0x18] sm:$0xff]
    %v1801 = vld [vmem:[%s1796 + $0x20] sm:$0xff]
    %v1802 = vld [vmem:[%s1796 + $0x28] sm:$0xff]
    %v1803 = vld [vmem:[%s1796 + $0x30] sm:$0xff]
    %v1804 = vld [vmem:[%s1796 + $0x38] sm:$0xff]
    %v1805 = vld [vmem:[%s1796 + $0x40] sm:$0xff]
    %v1806 = vld [vmem:[%s1796 + $0x48] sm:$0xff]
    %v1807 = vld [vmem:[%s1796 + $0x50] sm:$0xff]
    %v1808 = vld [vmem:[%s1796 + $0x58] sm:$0xff]
    %v1809 = vld [vmem:[%s1796 + $0x60] sm:$0xff]
    %v1810 = vld [vmem:[%s1796 + $0x68] sm:$0xff]
    %v1811 = vld [vmem:[%s1796 + $0x70] sm:$0xff]
    %v1812 = vld [vmem:[%s1796 + $0x78] sm:$0xff]
    %v1813 = vld [vmem:[%s1796 + $0x80] sm:$0xff]
    %v1814 = vld [vmem:[%s1796 + $0x88] sm:$0xff]
    %v1815 = vld [vmem:[%s1796 + $0x90] sm:$0xff]
    %v1816 = vld [vmem:[%s1796 + $0x98] sm:$0xff]
    %v1817 = vld [vmem:[%s1796 + $0xa0] sm:$0xff]
    %v1818 = vld [vmem:[%s1796 + $0xa8] sm:$0xff]
    %v1819 = vld [vmem:[%s1796 + $0xb0] sm:$0xff]
    %v1820 = vld [vmem:[%s1796 + $0xb8] sm:$0xff]
    %v1821 = vld [vmem:[%s1796 + $0xc0] sm:$0xff]
    %v1822 = vld [vmem:[%s1796 + $0xc8] sm:$0xff]
    %v1823 = vld [vmem:[%s1796 + $0xd0] sm:$0xff]
    %v1824 = vld [vmem:[%s1796 + $0xd8] sm:$0xff]
    %v1825 = vld [vmem:[%s1796 + $0xe0] sm:$0xff]
    %v1826 = vld [vmem:[%s1796 + $0xe8] sm:$0xff]
    %v1827 = vld [vmem:[%s1796 + $0xf0] sm:$0xff]
    %v1828 = vld [vmem:[%s1796 + $0xf8] sm:$0xff]
    %v1829 = vld [vmem:[%s1796 + $0x100] sm:$0xff]
    %v1830 = vld [vmem:[%s1796 + $0x108] sm:$0xff]
    %v1831 = vld [vmem:[%s1796 + $0x110] sm:$0xff]
    %v1832 = vld [vmem:[%s1796 + $0x118] sm:$0xff]
    %v1833 = vld [vmem:[%s1796 + $0x120] sm:$0xff]
    %v1834 = vld [vmem:[%s1796 + $0x128] sm:$0xff]
    %v1835 = vld [vmem:[%s1796 + $0x130] sm:$0xff]
    %v1836 = vld [vmem:[%s1796 + $0x138] sm:$0xff]
    %v1837 = vld [vmem:[%s1796 + $0x140] sm:$0xff]
    %v1838 = vld [vmem:[%s1796 + $0x148] sm:$0xff]
    %v1839 = vld [vmem:[%s1796 + $0x150] sm:$0xff]
    %v1840 = vld [vmem:[%s1796 + $0x158] sm:$0xff]
    %v1841 = vld [vmem:[%s1796 + $0x160] sm:$0xff]
    %v1842 = vld [vmem:[%s1796 + $0x168] sm:$0xff]
    %v1843 = vld [vmem:[%s1796 + $0x170] sm:$0xff]
    %v1844 = vld [vmem:[%s1796 + $0x178] sm:$0xff]
    %v1845 = vld [vmem:[%s1796 + $0x180] sm:$0xff]
    %v1846 = vld [vmem:[%s1796 + $0x188] sm:$0xff]
    %v1847 = vld [vmem:[%s1796 + $0x190] sm:$0xff]
    %v1848 = vld [vmem:[%s1796 + $0x198] sm:$0xff]
    %v1849 = vld [vmem:[%s1796 + $0x1a0] sm:$0xff]
    %v1850 = vld [vmem:[%s1796 + $0x1a8] sm:$0xff]
    %v1851 = vld [vmem:[%s1796 + $0x1b0] sm:$0xff]
    %v1852 = vld [vmem:[%s1796 + $0x1b8] sm:$0xff]
    %v1853 = vld [vmem:[%s1796 + $0x1c0] sm:$0xff]
    %v1854 = vld [vmem:[%s1796 + $0x1c8] sm:$0xff]
    %v1855 = vld [vmem:[%s1796 + $0x1d0] sm:$0xff]
    %v1856 = vld [vmem:[%s1796 + $0x1d8] sm:$0xff]
    %v1857 = vld [vmem:[%s1796 + $0x1e0] sm:$0xff]
    %v1858 = vld [vmem:[%s1796 + $0x1e8] sm:$0xff]
    %v1859 = vld [vmem:[%s1796 + $0x1f0] sm:$0xff]
    %v1860 = vld [vmem:[%s1796 + $0x1f8] sm:$0xff]
    %s1861 = scalar_lea.vmem %s6, 4
    %v1862 = vld [vmem:[%s1861] sm:$0xf]
    %v1864 = vlaneseq
    %v1865 = vshrl.u32 %v1864, 7
    %v1866 = vsub.s32 0, %v1865
    %v1867 = vrot.slane %v1862, %v1866
    %v1868 = vlaneseq
    %v1869 = vshrl.u32 %v1868, 7
    %v1870 = vsub.s32 1, %v1869
    %v1871 = vrot.slane %v1862, %v1870
    %v1872 = vlaneseq
    %v1873 = vshrl.u32 %v1872, 7
    %v1874 = vsub.s32 2, %v1873
    %v1875 = vrot.slane %v1862, %v1874
    %v1876 = vlaneseq
    %v1877 = vshrl.u32 %v1876, 7
    %v1878 = vsub.s32 3, %v1877
    %v1879 = vrot.slane %v1862, %v1878
    %v1948 = vunpack.c.l.b16 %v1797
    %v1949 = vunpack.c.h.b16 %v1797
    %v1950 = vunpack.c.l.b16 %v1798
    %v1951 = vunpack.c.h.b16 %v1798
    %v1952 = vunpack.c.l.b16 %v1799
    %v1953 = vunpack.c.h.b16 %v1799
    %v1954 = vunpack.c.l.b16 %v1800
    %v1955 = vunpack.c.h.b16 %v1800
    %v1956 = vunpack.c.l.b16 %v1801
    %v1957 = vunpack.c.h.b16 %v1801
    %v1958 = vunpack.c.l.b16 %v1802
    %v1959 = vunpack.c.h.b16 %v1802
    %v1960 = vunpack.c.l.b16 %v1803
    %v1961 = vunpack.c.h.b16 %v1803
    %v1962 = vunpack.c.l.b16 %v1804
    %v1963 = vunpack.c.h.b16 %v1804
    %v1964 = vunpack.c.l.b16 %v1805
    %v1965 = vunpack.c.h.b16 %v1805
    %v1966 = vunpack.c.l.b16 %v1806
    %v1967 = vunpack.c.h.b16 %v1806
    %v1968 = vunpack.c.l.b16 %v1807
    %v1969 = vunpack.c.h.b16 %v1807
    %v1970 = vunpack.c.l.b16 %v1808
    %v1971 = vunpack.c.h.b16 %v1808
    %v1972 = vunpack.c.l.b16 %v1809
    %v1973 = vunpack.c.h.b16 %v1809
    %v1974 = vunpack.c.l.b16 %v1810
    %v1975 = vunpack.c.h.b16 %v1810
    %v1976 = vunpack.c.l.b16 %v1811
    %v1977 = vunpack.c.h.b16 %v1811
    %v1978 = vunpack.c.l.b16 %v1812
    %v1979 = vunpack.c.h.b16 %v1812
    %v1980 = vunpack.c.l.b16 %v1813
    %v1981 = vunpack.c.h.b16 %v1813
    %v1982 = vunpack.c.l.b16 %v1814
    %v1983 = vunpack.c.h.b16 %v1814
    %v1984 = vunpack.c.l.b16 %v1815
    %v1985 = vunpack.c.h.b16 %v1815
    %v1986 = vunpack.c.l.b16 %v1816
    %v1987 = vunpack.c.h.b16 %v1816
    %v1988 = vunpack.c.l.b16 %v1817
    %v1989 = vunpack.c.h.b16 %v1817
    %v1990 = vunpack.c.l.b16 %v1818
    %v1991 = vunpack.c.h.b16 %v1818
    %v1992 = vunpack.c.l.b16 %v1819
    %v1993 = vunpack.c.h.b16 %v1819
    %v1994 = vunpack.c.l.b16 %v1820
    %v1995 = vunpack.c.h.b16 %v1820
    %v1996 = vunpack.c.l.b16 %v1821
    %v1997 = vunpack.c.h.b16 %v1821
    %v1998 = vunpack.c.l.b16 %v1822
    %v1999 = vunpack.c.h.b16 %v1822
    %v2000 = vunpack.c.l.b16 %v1823
    %v2001 = vunpack.c.h.b16 %v1823
    %v2002 = vunpack.c.l.b16 %v1824
    %v2003 = vunpack.c.h.b16 %v1824
    %v2004 = vunpack.c.l.b16 %v1825
    %v2005 = vunpack.c.h.b16 %v1825
    %v2006 = vunpack.c.l.b16 %v1826
    %v2007 = vunpack.c.h.b16 %v1826
    %v2008 = vunpack.c.l.b16 %v1827
    %v2009 = vunpack.c.h.b16 %v1827
    %v2010 = vunpack.c.l.b16 %v1828
    %v2011 = vunpack.c.h.b16 %v1828
    %v2012 = vunpack.c.l.b16 %v1829
    %v2013 = vunpack.c.h.b16 %v1829
    %v2014 = vunpack.c.l.b16 %v1830
    %v2015 = vunpack.c.h.b16 %v1830
    %v2016 = vunpack.c.l.b16 %v1831
    %v2017 = vunpack.c.h.b16 %v1831
    %v2018 = vunpack.c.l.b16 %v1832
    %v2019 = vunpack.c.h.b16 %v1832
    %v2020 = vunpack.c.l.b16 %v1833
    %v2021 = vunpack.c.h.b16 %v1833
    %v2022 = vunpack.c.l.b16 %v1834
    %v2023 = vunpack.c.h.b16 %v1834
    %v2024 = vunpack.c.l.b16 %v1835
    %v2025 = vunpack.c.h.b16 %v1835
    %v2026 = vunpack.c.l.b16 %v1836
    %v2027 = vunpack.c.h.b16 %v1836
    %v2028 = vunpack.c.l.b16 %v1837
    %v2029 = vunpack.c.h.b16 %v1837
    %v2030 = vunpack.c.l.b16 %v1838
    %v2031 = vunpack.c.h.b16 %v1838
    %v2032 = vunpack.c.l.b16 %v1839
    %v2033 = vunpack.c.h.b16 %v1839
    %v2034 = vunpack.c.l.b16 %v1840
    %v2035 = vunpack.c.h.b16 %v1840
    %v2036 = vunpack.c.l.b16 %v1841
    %v2037 = vunpack.c.h.b16 %v1841
    %v2038 = vunpack.c.l.b16 %v1842
    %v2039 = vunpack.c.h.b16 %v1842
    %v2040 = vunpack.c.l.b16 %v1843
    %v2041 = vunpack.c.h.b16 %v1843
    %v2042 = vunpack.c.l.b16 %v1844
    %v2043 = vunpack.c.h.b16 %v1844
    %v2044 = vunpack.c.l.b16 %v1845
    %v2045 = vunpack.c.h.b16 %v1845
    %v2046 = vunpack.c.l.b16 %v1846
    %v2047 = vunpack.c.h.b16 %v1846
    %v2048 = vunpack.c.l.b16 %v1847
    %v2049 = vunpack.c.h.b16 %v1847
    %v2050 = vunpack.c.l.b16 %v1848
    %v2051 = vunpack.c.h.b16 %v1848
    %v2052 = vunpack.c.l.b16 %v1849
    %v2053 = vunpack.c.h.b16 %v1849
    %v2054 = vunpack.c.l.b16 %v1850
    %v2055 = vunpack.c.h.b16 %v1850
    %v2056 = vunpack.c.l.b16 %v1851
    %v2057 = vunpack.c.h.b16 %v1851
    %v2058 = vunpack.c.l.b16 %v1852
    %v2059 = vunpack.c.h.b16 %v1852
    %v2060 = vunpack.c.l.b16 %v1853
    %v2061 = vunpack.c.h.b16 %v1853
    %v2062 = vunpack.c.l.b16 %v1854
    %v2063 = vunpack.c.h.b16 %v1854
    %v2064 = vunpack.c.l.b16 %v1855
    %v2065 = vunpack.c.h.b16 %v1855
    %v2066 = vunpack.c.l.b16 %v1856
    %v2067 = vunpack.c.h.b16 %v1856
    %v2068 = vunpack.c.l.b16 %v1857
    %v2069 = vunpack.c.h.b16 %v1857
    %v2070 = vunpack.c.l.b16 %v1858
    %v2071 = vunpack.c.h.b16 %v1858
    %v2072 = vunpack.c.l.b16 %v1859
    %v2073 = vunpack.c.h.b16 %v1859
    %v2074 = vunpack.c.l.b16 %v1860
    %v2075 = vunpack.c.h.b16 %v1860
    %v2076 = vpack.c.b16 %v1952, %v1948
    %v2077 = vpack.c.b16 %v1953, %v1949
    %v2078 = vpack.c.b16 %v1954, %v1950
    %v2079 = vpack.c.b16 %v1955, %v1951
    %v2080 = vpack.c.b16 %v1960, %v1956
    %v2081 = vpack.c.b16 %v1961, %v1957
    %v2082 = vpack.c.b16 %v1962, %v1958
    %v2083 = vpack.c.b16 %v1963, %v1959
    %v2084 = vpack.c.b16 %v1968, %v1964
    %v2085 = vpack.c.b16 %v1969, %v1965
    %v2086 = vpack.c.b16 %v1970, %v1966
    %v2087 = vpack.c.b16 %v1971, %v1967
    %v2088 = vpack.c.b16 %v1976, %v1972
    %v2089 = vpack.c.b16 %v1977, %v1973
    %v2090 = vpack.c.b16 %v1978, %v1974
    %v2091 = vpack.c.b16 %v1979, %v1975
    %v2092 = vpack.c.b16 %v1984, %v1980
    %v2093 = vpack.c.b16 %v1985, %v1981
    %v2094 = vpack.c.b16 %v1986, %v1982
    %v2095 = vpack.c.b16 %v1987, %v1983
    %v2096 = vpack.c.b16 %v1992, %v1988
    %v2097 = vpack.c.b16 %v1993, %v1989
    %v2098 = vpack.c.b16 %v1994, %v1990
    %v2099 = vpack.c.b16 %v1995, %v1991
    %v2100 = vpack.c.b16 %v2000, %v1996
    %v2101 = vpack.c.b16 %v2001, %v1997
    %v2102 = vpack.c.b16 %v2002, %v1998
    %v2103 = vpack.c.b16 %v2003, %v1999
    %v2104 = vpack.c.b16 %v2008, %v2004
    %v2105 = vpack.c.b16 %v2009, %v2005
    %v2106 = vpack.c.b16 %v2010, %v2006
    %v2107 = vpack.c.b16 %v2011, %v2007
    %v2108 = vpack.c.b16 %v2016, %v2012
    %v2109 = vpack.c.b16 %v2017, %v2013
    %v2110 = vpack.c.b16 %v2018, %v2014
    %v2111 = vpack.c.b16 %v2019, %v2015
    %v2112 = vpack.c.b16 %v2024, %v2020
    %v2113 = vpack.c.b16 %v2025, %v2021
    %v2114 = vpack.c.b16 %v2026, %v2022
    %v2115 = vpack.c.b16 %v2027, %v2023
    %v2116 = vpack.c.b16 %v2032, %v2028
    %v2117 = vpack.c.b16 %v2033, %v2029
    %v2118 = vpack.c.b16 %v2034, %v2030
    %v2119 = vpack.c.b16 %v2035, %v2031
    %v2120 = vpack.c.b16 %v2040, %v2036
    %v2121 = vpack.c.b16 %v2041, %v2037
    %v2122 = vpack.c.b16 %v2042, %v2038
    %v2123 = vpack.c.b16 %v2043, %v2039
    %v2124 = vpack.c.b16 %v2048, %v2044
    %v2125 = vpack.c.b16 %v2049, %v2045
    %v2126 = vpack.c.b16 %v2050, %v2046
    %v2127 = vpack.c.b16 %v2051, %v2047
    %v2128 = vpack.c.b16 %v2056, %v2052
    %v2129 = vpack.c.b16 %v2057, %v2053
    %v2130 = vpack.c.b16 %v2058, %v2054
    %v2131 = vpack.c.b16 %v2059, %v2055
    %v2132 = vpack.c.b16 %v2064, %v2060
    %v2133 = vpack.c.b16 %v2065, %v2061
    %v2134 = vpack.c.b16 %v2066, %v2062
    %v2135 = vpack.c.b16 %v2067, %v2063
    %v2136 = vpack.c.b16 %v2072, %v2068
    %v2137 = vpack.c.b16 %v2073, %v2069
    %v2138 = vpack.c.b16 %v2074, %v2070
    %v2139 = vpack.c.b16 %v2075, %v2071
    %2204 = vmatprep.subr.bf16.mxu0 %v2077
    %2205 = vmatpush1.bf16.msra.mxu0 %v2076
    %2206 = vmatprep.subr.bf16.mxu0 %v2081
    %2207 = vmatpush1.bf16.msra.mxu0 %v2080
    %2208 = vmatprep.subr.bf16.mxu0 %v2085
    %2209 = vmatpush1.bf16.msra.mxu0 %v2084
    %2210 = vmatprep.subr.bf16.mxu0 %v2089
    %2211 = vmatpush1.bf16.msra.mxu0 %v2088
    %2212 = vmatprep.subr.bf16.mxu0 %v2093
    %2213 = vmatpush1.bf16.msra.mxu0 %v2092
    %2214 = vmatprep.subr.bf16.mxu0 %v2097
    %2215 = vmatpush1.bf16.msra.mxu0 %v2096
    %2216 = vmatprep.subr.bf16.mxu0 %v2101
    %2217 = vmatpush1.bf16.msra.mxu0 %v2100
    %2218 = vmatprep.subr.bf16.mxu0 %v2105
    %2219 = vmatpush1.bf16.msra.mxu0 %v2104
    %2220 = vmatprep.subr.bf16.mxu0 %v2109
    %2221 = vmatpush1.bf16.msra.mxu0 %v2108
    %2222 = vmatprep.subr.bf16.mxu0 %v2113
    %2223 = vmatpush1.bf16.msra.mxu0 %v2112
    %2224 = vmatprep.subr.bf16.mxu0 %v2117
    %2225 = vmatpush1.bf16.msra.mxu0 %v2116
    %2226 = vmatprep.subr.bf16.mxu0 %v2121
    %2227 = vmatpush1.bf16.msra.mxu0 %v2120
    %2228 = vmatprep.subr.bf16.mxu0 %v2125
    %2229 = vmatpush1.bf16.msra.mxu0 %v2124
    %2230 = vmatprep.subr.bf16.mxu0 %v2129
    %2231 = vmatpush1.bf16.msra.mxu0 %v2128
    %2232 = vmatprep.subr.bf16.mxu0 %v2133
    %2233 = vmatpush1.bf16.msra.mxu0 %v2132
    %2234 = vmatprep.subr.bf16.mxu0 %v2137
    %2235 = vmatpush1.bf16.msra.mxu0 %v2136
    %2236 = vmatprep.mubr.bf16.mxu0 %v1287
    %2237 = vmatmul.mubr.bf16.gmra.mrb[0].mxu0 %v1795
    %v2238 = vpop.f32.mrb[0].mxu0
    %v2239 = vadd.f32 %v1867, %v2238
    %v2240 = vpop.f32.mrb[0].mxu0
    %v2241 = vadd.f32 %v1871, %v2240
    %v2242 = vpop.f32.mrb[0].mxu0
    %v2243 = vpop.f32.mrb[0].mxu0
    %2244 = vdwg.mxu0
    %2245 = vmatprep.subr.bf16.mxu0 %v2079
    %2246 = vmatpush1.bf16.msra.mxu0 %v2078
    %2247 = vmatprep.subr.bf16.mxu0 %v2083
    %2248 = vmatpush1.bf16.msra.mxu0 %v2082
    %2249 = vmatprep.subr.bf16.mxu0 %v2087
    %2250 = vmatpush1.bf16.msra.mxu0 %v2086
    %2251 = vmatprep.subr.bf16.mxu0 %v2091
    %2252 = vmatpush1.bf16.msra.mxu0 %v2090
    %2253 = vmatprep.subr.bf16.mxu0 %v2095
    %2254 = vmatpush1.bf16.msra.mxu0 %v2094
    %2255 = vmatprep.subr.bf16.mxu0 %v2099
    %2256 = vmatpush1.bf16.msra.mxu0 %v2098
    %2257 = vmatprep.subr.bf16.mxu0 %v2103
    %2258 = vmatpush1.bf16.msra.mxu0 %v2102
    %2259 = vmatprep.subr.bf16.mxu0 %v2107
    %2260 = vmatpush1.bf16.msra.mxu0 %v2106
    %2261 = vmatprep.subr.bf16.mxu0 %v2111
    %2262 = vmatpush1.bf16.msra.mxu0 %v2110
    %2263 = vmatprep.subr.bf16.mxu0 %v2115
    %2264 = vmatpush1.bf16.msra.mxu0 %v2114
    %2265 = vmatprep.subr.bf16.mxu0 %v2119
    %2266 = vmatpush1.bf16.msra.mxu0 %v2118
    %2267 = vmatprep.subr.bf16.mxu0 %v2123
    %2268 = vmatpush1.bf16.msra.mxu0 %v2122
    %2269 = vmatprep.subr.bf16.mxu0 %v2127
    %2270 = vmatpush1.bf16.msra.mxu0 %v2126
    %2271 = vmatprep.subr.bf16.mxu0 %v2131
    %2272 = vmatpush1.bf16.msra.mxu0 %v2130
    %2273 = vmatprep.subr.bf16.mxu0 %v2135
    %2274 = vmatpush1.bf16.msra.mxu0 %v2134
    %2275 = vmatprep.subr.bf16.mxu0 %v2139
    %2276 = vmatpush1.bf16.msra.mxu0 %v2138
    %2277 = vmatprep.mubr.bf16.mxu0 %v1287
    %2278 = vmatmul.mubr.bf16.gmra.mrb[0].mxu0 %v1795
    %v2279 = vpop.f32.mrb[0].mxu0
    %v2280 = vadd.f32 %v1875, %v2279
    %v2281 = vpop.f32.mrb[0].mxu0
    %v2282 = vadd.f32 %v1879, %v2281
    %v2283 = vpop.f32.mrb[0].mxu0
    %v2284 = vpop.f32.mrb[0].mxu0
    %2285 = vdwg.mxu0
    %v2286 = vxor.u32 %v2239, 2147483648
    %v2287 = vmul.f32 %v2286, 1.442695
    %v2288 = vpow.pop %v2287
    %v2289 = vadd.f32 %v2288, 1.0
    %v2290 = vrcp.pop %v2289
    %v2291 = vmul.f32 1.0, %v2290
    %v2292 = vxor.u32 %v2241, 2147483648
    %v2293 = vmul.f32 %v2292, 1.442695
    %v2294 = vpow.pop %v2293
    %v2295 = vadd.f32 %v2294, 1.0
    %v2296 = vrcp.pop %v2295
    %v2297 = vmul.f32 1.0, %v2296
    %v2298 = vmul.f32 %v2291, %v2282
    %v2299 = vadd.f32 %v2280, %v2298
    %v2300 = vtanh.pop %v2299
    %v2301 = vsub.f32 1.0, %v2297
    %v2302 = vmul.f32 %v2301, %v2300
    %v2303 = vmul.f32 %v2297, %v1284
    %v2304 = vadd.f32 %v2302, %v2303
    %v2305 = vpack.c.bf16 %v2304, %v2304
    %v2306 = vunpack.c.l.b16 %v834
    %v2307 = vunpack.c.l.b16 %v835
    %v2308 = vunpack.c.l.b16 %v836
    %v2309 = vunpack.c.l.b16 %v837
    %v2310 = vunpack.c.l.b16 %v838
    %v2311 = vunpack.c.l.b16 %v839
    %v2312 = vunpack.c.l.b16 %v840
    %v2313 = vunpack.c.l.b16 %v841
    %v2314 = vunpack.c.l.b16 %v842
    %v2315 = vunpack.c.l.b16 %v843
    %v2316 = vunpack.c.l.b16 %v844
    %v2317 = vunpack.c.l.b16 %v845
    %v2318 = vunpack.c.l.b16 %v846
    %v2319 = vunpack.c.l.b16 %v847
    %v2320 = vunpack.c.l.b16 %v848
    %v2321 = vunpack.c.l.b16 %v849
    %v2322 = vpack.c.b16 %v2307, %v2306
    %v2323 = vpack.c.b16 %v2309, %v2308
    %v2324 = vpack.c.b16 %v2311, %v2310
    %v2325 = vpack.c.b16 %v2313, %v2312
    %v2326 = vpack.c.b16 %v2315, %v2314
    %v2327 = vpack.c.b16 %v2317, %v2316
    %v2328 = vpack.c.b16 %v2319, %v2318
    %v2329 = vpack.c.b16 %v2321, %v2320
    %2338 = vmatprep.subr.bf16.mxu0 %v887
    %2339 = vmatpush1.bf16.msra.mxu0 %v2322
    %2340 = vmatprep.subr.bf16.mxu0 %v888
    %2341 = vmatpush1.bf16.msra.mxu0 %v2323
    %2342 = vmatprep.subr.bf16.mxu0 %v889
    %2343 = vmatpush1.bf16.msra.mxu0 %v2324
    %2344 = vmatprep.subr.bf16.mxu0 %v890
    %2345 = vmatpush1.bf16.msra.mxu0 %v2325
    %2346 = vmatprep.subr.bf16.mxu0 %v891
    %2347 = vmatpush1.bf16.msra.mxu0 %v2326
    %2348 = vmatprep.subr.bf16.mxu0 %v892
    %2349 = vmatpush1.bf16.msra.mxu0 %v2327
    %2350 = vmatprep.subr.bf16.mxu0 %v893
    %2351 = vmatpush1.bf16.msra.mxu0 %v2328
    %2352 = vmatprep.subr.bf16.mxu0 %v894
    %2353 = vmatpush1.bf16.msra.mxu0 %v2329
    %2354 = vmatprep.subr.bf16.mxu0 0
    %2355 = vmatpush1.bf16.msra.mxu0 0
    %2356 = vmatprep.subr.bf16.mxu0 0
    %2357 = vmatpush1.bf16.msra.mxu0 0
    %2358 = vmatprep.subr.bf16.mxu0 0
    %2359 = vmatpush1.bf16.msra.mxu0 0
    %2360 = vmatprep.subr.bf16.mxu0 0
    %2361 = vmatpush1.bf16.msra.mxu0 0
    %2362 = vmatprep.subr.bf16.mxu0 0
    %2363 = vmatpush1.bf16.msra.mxu0 0
    %2364 = vmatprep.subr.bf16.mxu0 0
    %2365 = vmatpush1.bf16.msra.mxu0 0
    %2366 = vmatprep.subr.bf16.mxu0 0
    %2367 = vmatpush1.bf16.msra.mxu0 0
    %2368 = vmatprep.subr.bf16.mxu0 0
    %2369 = vmatpush1.bf16.msra.mxu0 0
    %2370 = vmatprep.mubr.bf16.mxu0 0
    %2371 = vmatmul.mubr.bf16.gmra.mrb[0].mxu0 %v2305
    %v2372 = vpop.f32.mrb[0].mxu0
    %v2373 = vadd.f32 0.0, %v2372
    %v2374 = vpop.f32.mrb[0].mxu0
    %v2375 = vadd.f32 0.0, %v2374
    %v2376 = vpop.f32.mrb[0].mxu0
    %v2377 = vpop.f32.mrb[0].mxu0
    %2378 = vdwg.mxu0
    %v2379 = vlaneseq
    %v2380 = vshrl.u32 %v2379, 7
    %v2381 = vsub.s32 2, %v2380
    %v2382 = vrot.slane %v92, %v2381
    %v2383 = vadd.f32 %v2373, %v2382
    %v2384 = vxor.u32 %v2383, 2147483648
    %v2385 = vmul.f32 %v2384, 1.442695
    %v2386 = vpow.pop %v2385
    %v2387 = vadd.f32 %v2386, 1.0
    %v2388 = vrcp.pop %v2387
    %v2389 = vmul.f32 1.0, %v2388
    %v2392 = vrot.slane %v126, 1
    %v2393 = vsel %vm1059, %v128, %v2392
    %v2395 = vmul.f32 %v2389, %v2393
    %v2396 = vsel %vm1216, %v2395, 0.0
    %2397 = vadd.xlane.f32.xlu0 %v2396
    %v2398 = vpop.xlane.xlu0 %2397
    %v2399 = vadd.f32 %v938, %v2375
    %v2400 = vsel %vm1220, %v2399, -inf
    %2401 = vmax.xlane.f32.xlu0 %v2400
    %v2402 = vpop.xlane.xlu0 %2401
    %v2403 = vsub.f32 %v2399, %v2402
    %v2404 = vmul.f32 %v2403, 1.442695
    %v2405 = vpow.pop %v2404
    %v2406 = vsel %vm1220, %v2405, 0.0
    %2407 = vadd.xlane.f32.xlu0 %v2406
    %v2408 = vpop.xlane.xlu0 %2407
    %v2409 = vrcp.pop %v2408
    %v2410 = vmul.f32 %v2405, %v2409
    %v2411 = vlaneseq
    %v2412 = vshrl.u32 %v2411, 7
    %v2413 = vsub.s32 0, %v2412
    %v2414 = vrot.slane %v2410, %v2413
    %2416 = vbcast.lane.b32.xlu0 %v2414, 256
    %v2417 = vpop.permute.xlu0 %2416
    %s2419 = sor.u32 256, 8
    %2420 = vbcast.lane.b32.xlu0 %v2414, %s2419
    %v2421 = vpop.permute.xlu0 %2420
    %v2422 = vlaneseq
    %v2423 = vshrl.u32 %v2422, 7
    %v2424 = vsub.s32 1, %v2423
    %v2425 = vrot.slane %v2410, %v2424
    %2427 = vbcast.lane.b32.xlu0 %v2425, 256
    %v2428 = vpop.permute.xlu0 %2427
    %s2430 = sor.u32 256, 8
    %2431 = vbcast.lane.b32.xlu0 %v2425, %s2430
    %v2432 = vpop.permute.xlu0 %2431
    %v2433 = vmul.f32 %v2417, %v1217
    %v2434 = vmul.f32 %v2421, %v1212
    %v2435 = vmul.f32 %v2428, %v1218
    %v2436 = vmul.f32 %v2432, %v1213
    %v2437 = vsel %vm1216, %v2434, 0.0
    %v2438 = vadd.f32 %v2433, %v2437
    %v2439 = vrot.slane %v2438, 4
    %v2440 = vadd.f32 %v2438, %v2439
    %v2441 = vrot.slane %v2440, 2
    %v2442 = vadd.f32 %v2440, %v2441
    %v2443 = vrot.slane %v2442, 1
    %v2444 = vadd.f32 %v2442, %v2443
    %v2445 = vsel %vm1216, %v2436, 0.0
    %v2446 = vadd.f32 %v2435, %v2445
    %v2447 = vrot.slane %v2446, 4
    %v2448 = vadd.f32 %v2446, %v2447
    %v2449 = vrot.slane %v2448, 2
    %v2450 = vadd.f32 %v2448, %v2449
    %v2451 = vrot.slane %v2450, 1
    %v2452 = vadd.f32 %v2450, %v2451
    %v2455 = vsel %vm1059, %v2452, %v2444
    %v2457 = vadd.f32 %v1046, %v2455
    %v2458 = vmax.f32 %v2457, 0.0
    %v2459 = vpack.c.bf16 %v2458, %v2458
    %2460 = vmatprep.subr.bf16.mxu0 %v1567
    %2461 = vmatpush1.bf16.msra.mxu0 %v1566
    %2462 = vmatprep.subr.bf16.mxu0 %v1571
    %2463 = vmatpush1.bf16.msra.mxu0 %v1570
    %2464 = vmatprep.subr.bf16.mxu0 %v1575
    %2465 = vmatpush1.bf16.msra.mxu0 %v1574
    %2466 = vmatprep.subr.bf16.mxu0 %v1579
    %2467 = vmatpush1.bf16.msra.mxu0 %v1578
    %2468 = vmatprep.subr.bf16.mxu0 %v1583
    %2469 = vmatpush1.bf16.msra.mxu0 %v1582
    %2470 = vmatprep.subr.bf16.mxu0 %v1587
    %2471 = vmatpush1.bf16.msra.mxu0 %v1586
    %2472 = vmatprep.subr.bf16.mxu0 %v1591
    %2473 = vmatpush1.bf16.msra.mxu0 %v1590
    %2474 = vmatprep.subr.bf16.mxu0 %v1595
    %2475 = vmatpush1.bf16.msra.mxu0 %v1594
    %2476 = vmatprep.subr.bf16.mxu0 %v1599
    %2477 = vmatpush1.bf16.msra.mxu0 %v1598
    %2478 = vmatprep.subr.bf16.mxu0 %v1603
    %2479 = vmatpush1.bf16.msra.mxu0 %v1602
    %2480 = vmatprep.subr.bf16.mxu0 %v1607
    %2481 = vmatpush1.bf16.msra.mxu0 %v1606
    %2482 = vmatprep.subr.bf16.mxu0 %v1611
    %2483 = vmatpush1.bf16.msra.mxu0 %v1610
    %2484 = vmatprep.subr.bf16.mxu0 %v1615
    %2485 = vmatpush1.bf16.msra.mxu0 %v1614
    %2486 = vmatprep.subr.bf16.mxu0 %v1619
    %2487 = vmatpush1.bf16.msra.mxu0 %v1618
    %2488 = vmatprep.subr.bf16.mxu0 %v1623
    %2489 = vmatpush1.bf16.msra.mxu0 %v1622
    %2490 = vmatprep.subr.bf16.mxu0 %v1627
    %2491 = vmatpush1.bf16.msra.mxu0 %v1626
    %2492 = vmatprep.mubr.bf16.mxu0 %v1795
    %2493 = vmatmul.mubr.bf16.gmra.mrb[0].mxu0 %v2459
    %v2494 = vpop.f32.mrb[0].mxu0
    %v2495 = vadd.f32 %v1357, %v2494
    %v2496 = vpop.f32.mrb[0].mxu0
    %v2497 = vadd.f32 %v1361, %v2496
    %v2498 = vpop.f32.mrb[0].mxu0
    %v2499 = vpop.f32.mrb[0].mxu0
    %2500 = vdwg.mxu0
    %2501 = vmatprep.subr.bf16.mxu0 %v1569
    %2502 = vmatpush1.bf16.msra.mxu0 %v1568
    %2503 = vmatprep.subr.bf16.mxu0 %v1573
    %2504 = vmatpush1.bf16.msra.mxu0 %v1572
    %2505 = vmatprep.subr.bf16.mxu0 %v1577
    %2506 = vmatpush1.bf16.msra.mxu0 %v1576
    %2507 = vmatprep.subr.bf16.mxu0 %v1581
    %2508 = vmatpush1.bf16.msra.mxu0 %v1580
    %2509 = vmatprep.subr.bf16.mxu0 %v1585
    %2510 = vmatpush1.bf16.msra.mxu0 %v1584
    %2511 = vmatprep.subr.bf16.mxu0 %v1589
    %2512 = vmatpush1.bf16.msra.mxu0 %v1588
    %2513 = vmatprep.subr.bf16.mxu0 %v1593
    %2514 = vmatpush1.bf16.msra.mxu0 %v1592
    %2515 = vmatprep.subr.bf16.mxu0 %v1597
    %2516 = vmatpush1.bf16.msra.mxu0 %v1596
    %2517 = vmatprep.subr.bf16.mxu0 %v1601
    %2518 = vmatpush1.bf16.msra.mxu0 %v1600
    %2519 = vmatprep.subr.bf16.mxu0 %v1605
    %2520 = vmatpush1.bf16.msra.mxu0 %v1604
    %2521 = vmatprep.subr.bf16.mxu0 %v1609
    %2522 = vmatpush1.bf16.msra.mxu0 %v1608
    %2523 = vmatprep.subr.bf16.mxu0 %v1613
    %2524 = vmatpush1.bf16.msra.mxu0 %v1612
    %2525 = vmatprep.subr.bf16.mxu0 %v1617
    %2526 = vmatpush1.bf16.msra.mxu0 %v1616
    %2527 = vmatprep.subr.bf16.mxu0 %v1621
    %2528 = vmatpush1.bf16.msra.mxu0 %v1620
    %2529 = vmatprep.subr.bf16.mxu0 %v1625
    %2530 = vmatpush1.bf16.msra.mxu0 %v1624
    %2531 = vmatprep.subr.bf16.mxu0 %v1629
    %2532 = vmatpush1.bf16.msra.mxu0 %v1628
    %2533 = vmatprep.mubr.bf16.mxu0 %v1795
    %2534 = vmatmul.mubr.bf16.gmra.mrb[0].mxu0 %v2459
    %v2535 = vpop.f32.mrb[0].mxu0
    %v2536 = vadd.f32 %v1365, %v2535
    %v2537 = vpop.f32.mrb[0].mxu0
    %v2538 = vadd.f32 %v1369, %v2537
    %v2539 = vpop.f32.mrb[0].mxu0
    %v2540 = vpop.f32.mrb[0].mxu0
    %2541 = vdwg.mxu0
    %v2542 = vxor.u32 %v2495, 2147483648
    %v2543 = vmul.f32 %v2542, 1.442695
    %v2544 = vpow.pop %v2543
    %v2545 = vadd.f32 %v2544, 1.0
    %v2546 = vrcp.pop %v2545
    %v2547 = vmul.f32 1.0, %v2546
    %v2548 = vxor.u32 %v2497, 2147483648
    %v2549 = vmul.f32 %v2548, 1.442695
    %v2550 = vpow.pop %v2549
    %v2551 = vadd.f32 %v2550, 1.0
    %v2552 = vrcp.pop %v2551
    %v2553 = vmul.f32 1.0, %v2552
    %v2554 = vmul.f32 %v2547, %v2538
    %v2555 = vadd.f32 %v2536, %v2554
    %v2556 = vtanh.pop %v2555
    %v2557 = vsub.f32 1.0, %v2553
    %v2558 = vmul.f32 %v2557, %v2556
    %v2559 = vmul.f32 %v2553, %v1794
    %v2560 = vadd.f32 %v2558, %v2559
    %v2561 = vpack.c.bf16 %v2560, %v2560
    %2562 = vmatprep.subr.bf16.mxu0 %v2077
    %2563 = vmatpush1.bf16.msra.mxu0 %v2076
    %2564 = vmatprep.subr.bf16.mxu0 %v2081
    %2565 = vmatpush1.bf16.msra.mxu0 %v2080
    %2566 = vmatprep.subr.bf16.mxu0 %v2085
    %2567 = vmatpush1.bf16.msra.mxu0 %v2084
    %2568 = vmatprep.subr.bf16.mxu0 %v2089
    %2569 = vmatpush1.bf16.msra.mxu0 %v2088
    %2570 = vmatprep.subr.bf16.mxu0 %v2093
    %2571 = vmatpush1.bf16.msra.mxu0 %v2092
    %2572 = vmatprep.subr.bf16.mxu0 %v2097
    %2573 = vmatpush1.bf16.msra.mxu0 %v2096
    %2574 = vmatprep.subr.bf16.mxu0 %v2101
    %2575 = vmatpush1.bf16.msra.mxu0 %v2100
    %2576 = vmatprep.subr.bf16.mxu0 %v2105
    %2577 = vmatpush1.bf16.msra.mxu0 %v2104
    %2578 = vmatprep.subr.bf16.mxu0 %v2109
    %2579 = vmatpush1.bf16.msra.mxu0 %v2108
    %2580 = vmatprep.subr.bf16.mxu0 %v2113
    %2581 = vmatpush1.bf16.msra.mxu0 %v2112
    %2582 = vmatprep.subr.bf16.mxu0 %v2117
    %2583 = vmatpush1.bf16.msra.mxu0 %v2116
    %2584 = vmatprep.subr.bf16.mxu0 %v2121
    %2585 = vmatpush1.bf16.msra.mxu0 %v2120
    %2586 = vmatprep.subr.bf16.mxu0 %v2125
    %2587 = vmatpush1.bf16.msra.mxu0 %v2124
    %2588 = vmatprep.subr.bf16.mxu0 %v2129
    %2589 = vmatpush1.bf16.msra.mxu0 %v2128
    %2590 = vmatprep.subr.bf16.mxu0 %v2133
    %2591 = vmatpush1.bf16.msra.mxu0 %v2132
    %2592 = vmatprep.subr.bf16.mxu0 %v2137
    %2593 = vmatpush1.bf16.msra.mxu0 %v2136
    %2594 = vmatprep.mubr.bf16.mxu0 %v2305
    %2595 = vmatmul.mubr.bf16.gmra.mrb[0].mxu0 %v2561
    %v2596 = vpop.f32.mrb[0].mxu0
    %v2597 = vadd.f32 %v1867, %v2596
    %v2598 = vpop.f32.mrb[0].mxu0
    %v2599 = vadd.f32 %v1871, %v2598
    %v2600 = vpop.f32.mrb[0].mxu0
    %v2601 = vpop.f32.mrb[0].mxu0
    %2602 = vdwg.mxu0
    %2603 = vmatprep.subr.bf16.mxu0 %v2079
    %2604 = vmatpush1.bf16.msra.mxu0 %v2078
    %2605 = vmatprep.subr.bf16.mxu0 %v2083
    %2606 = vmatpush1.bf16.msra.mxu0 %v2082
    %2607 = vmatprep.subr.bf16.mxu0 %v2087
    %2608 = vmatpush1.bf16.msra.mxu0 %v2086
    %2609 = vmatprep.subr.bf16.mxu0 %v2091
    %2610 = vmatpush1.bf16.msra.mxu0 %v2090
    %2611 = vmatprep.subr.bf16.mxu0 %v2095
    %2612 = vmatpush1.bf16.msra.mxu0 %v2094
    %2613 = vmatprep.subr.bf16.mxu0 %v2099
    %2614 = vmatpush1.bf16.msra.mxu0 %v2098
    %2615 = vmatprep.subr.bf16.mxu0 %v2103
    %2616 = vmatpush1.bf16.msra.mxu0 %v2102
    %2617 = vmatprep.subr.bf16.mxu0 %v2107
    %2618 = vmatpush1.bf16.msra.mxu0 %v2106
    %2619 = vmatprep.subr.bf16.mxu0 %v2111
    %2620 = vmatpush1.bf16.msra.mxu0 %v2110
    %2621 = vmatprep.subr.bf16.mxu0 %v2115
    %2622 = vmatpush1.bf16.msra.mxu0 %v2114
    %2623 = vmatprep.subr.bf16.mxu0 %v2119
    %2624 = vmatpush1.bf16.msra.mxu0 %v2118
    %2625 = vmatprep.subr.bf16.mxu0 %v2123
    %2626 = vmatpush1.bf16.msra.mxu0 %v2122
    %2627 = vmatprep.subr.bf16.mxu0 %v2127
    %2628 = vmatpush1.bf16.msra.mxu0 %v2126
    %2629 = vmatprep.subr.bf16.mxu0 %v2131
    %2630 = vmatpush1.bf16.msra.mxu0 %v2130
    %2631 = vmatprep.subr.bf16.mxu0 %v2135
    %2632 = vmatpush1.bf16.msra.mxu0 %v2134
    %2633 = vmatprep.subr.bf16.mxu0 %v2139
    %2634 = vmatpush1.bf16.msra.mxu0 %v2138
    %2635 = vmatprep.mubr.bf16.mxu0 %v2305
    %2636 = vmatmul.mubr.bf16.gmra.mrb[0].mxu0 %v2561
    %v2637 = vpop.f32.mrb[0].mxu0
    %v2638 = vadd.f32 %v1875, %v2637
    %v2639 = vpop.f32.mrb[0].mxu0
    %v2640 = vadd.f32 %v1879, %v2639
    %v2641 = vpop.f32.mrb[0].mxu0
    %v2642 = vpop.f32.mrb[0].mxu0
    %2643 = vdwg.mxu0
    %v2644 = vxor.u32 %v2597, 2147483648
    %v2645 = vmul.f32 %v2644, 1.442695
    %v2646 = vpow.pop %v2645
    %v2647 = vadd.f32 %v2646, 1.0
    %v2648 = vrcp.pop %v2647
    %v2649 = vmul.f32 1.0, %v2648
    %v2650 = vxor.u32 %v2599, 2147483648
    %v2651 = vmul.f32 %v2650, 1.442695
    %v2652 = vpow.pop %v2651
    %v2653 = vadd.f32 %v2652, 1.0
    %v2654 = vrcp.pop %v2653
    %v2655 = vmul.f32 1.0, %v2654
    %v2656 = vmul.f32 %v2649, %v2640
    %v2657 = vadd.f32 %v2638, %v2656
    %v2658 = vtanh.pop %v2657
    %v2659 = vsub.f32 1.0, %v2655
    %v2660 = vmul.f32 %v2659, %v2658
    %v2661 = vmul.f32 %v2655, %v2304
    %v2662 = vadd.f32 %v2660, %v2661
    %v2663 = vpack.c.bf16 %v2662, %v2662
    %2664 = vmatprep.subr.bf16.mxu0 %v887
    %2665 = vmatpush1.bf16.msra.mxu0 %v2322
    %2666 = vmatprep.subr.bf16.mxu0 %v888
    %2667 = vmatpush1.bf16.msra.mxu0 %v2323
    %2668 = vmatprep.subr.bf16.mxu0 %v889
    %2669 = vmatpush1.bf16.msra.mxu0 %v2324
    %2670 = vmatprep.subr.bf16.mxu0 %v890
    %2671 = vmatpush1.bf16.msra.mxu0 %v2325
    %2672 = vmatprep.subr.bf16.mxu0 %v891
    %2673 = vmatpush1.bf16.msra.mxu0 %v2326
    %2674 = vmatprep.subr.bf16.mxu0 %v892
    %2675 = vmatpush1.bf16.msra.mxu0 %v2327
    %2676 = vmatprep.subr.bf16.mxu0 %v893
    %2677 = vmatpush1.bf16.msra.mxu0 %v2328
    %2678 = vmatprep.subr.bf16.mxu0 %v894
    %2679 = vmatpush1.bf16.msra.mxu0 %v2329
    %2680 = vmatprep.subr.bf16.mxu0 0
    %2681 = vmatpush1.bf16.msra.mxu0 0
    %2682 = vmatprep.subr.bf16.mxu0 0
    %2683 = vmatpush1.bf16.msra.mxu0 0
    %2684 = vmatprep.subr.bf16.mxu0 0
    %2685 = vmatpush1.bf16.msra.mxu0 0
    %2686 = vmatprep.subr.bf16.mxu0 0
    %2687 = vmatpush1.bf16.msra.mxu0 0
    %2688 = vmatprep.subr.bf16.mxu0 0
    %2689 = vmatpush1.bf16.msra.mxu0 0
    %2690 = vmatprep.subr.bf16.mxu0 0
    %2691 = vmatpush1.bf16.msra.mxu0 0
    %2692 = vmatprep.subr.bf16.mxu0 0
    %2693 = vmatpush1.bf16.msra.mxu0 0
    %2694 = vmatprep.subr.bf16.mxu0 0
    %2695 = vmatpush1.bf16.msra.mxu0 0
    %2696 = vmatprep.mubr.bf16.mxu0 0
    %2697 = vmatmul.mubr.bf16.gmra.mrb[0].mxu0 %v2663
    %v2698 = vpop.f32.mrb[0].mxu0
    %v2699 = vadd.f32 0.0, %v2698
    %v2700 = vpop.f32.mrb[0].mxu0
    %v2701 = vadd.f32 0.0, %v2700
    %v2702 = vpop.f32.mrb[0].mxu0
    %v2703 = vpop.f32.mrb[0].mxu0
    %2704 = vdwg.mxu0
    %v2705 = vadd.f32 %v2699, %v2382
    %v2706 = vxor.u32 %v2705, 2147483648
    %v2707 = vmul.f32 %v2706, 1.442695
    %v2708 = vpow.pop %v2707
    %v2709 = vadd.f32 %v2708, 1.0
    %v2710 = vrcp.pop %v2709
    %v2711 = vmul.f32 1.0, %v2710
    %v2712 = vrot.slane %v126, 2
    %v2713 = vrot.slane %v128, 1
    %v2714 = vsel %vm1059, %v2713, %v2712
    %v2716 = vmul.f32 %v2711, %v2714
    %v2717 = vsel %vm1216, %v2716, 0.0
    %2718 = vadd.xlane.f32.xlu0 %v2717
    %v2719 = vpop.xlane.xlu0 %2718
    %v2720 = vadd.f32 %v938, %v2701
    %v2721 = vsel %vm1220, %v2720, -inf
    %2722 = vmax.xlane.f32.xlu0 %v2721
    %v2723 = vpop.xlane.xlu0 %2722
    %v2724 = vsub.f32 %v2720, %v2723
    %v2725 = vmul.f32 %v2724, 1.442695
    %v2726 = vpow.pop %v2725
    %v2727 = vsel %vm1220, %v2726, 0.0
    %2728 = vadd.xlane.f32.xlu0 %v2727
    %v2729 = vpop.xlane.xlu0 %2728
    %v2730 = vrcp.pop %v2729
    %v2731 = vmul.f32 %v2726, %v2730
    %v2732 = vlaneseq
    %v2733 = vshrl.u32 %v2732, 7
    %v2734 = vsub.s32 0, %v2733
    %v2735 = vrot.slane %v2731, %v2734
    %2737 = vbcast.lane.b32.xlu0 %v2735, 256
    %v2738 = vpop.permute.xlu0 %2737
    %s2740 = sor.u32 256, 8
    %2741 = vbcast.lane.b32.xlu0 %v2735, %s2740
    %v2742 = vpop.permute.xlu0 %2741
    %v2743 = vlaneseq
    %v2744 = vshrl.u32 %v2743, 7
    %v2745 = vsub.s32 1, %v2744
    %v2746 = vrot.slane %v2731, %v2745
    %2748 = vbcast.lane.b32.xlu0 %v2746, 256
    %v2749 = vpop.permute.xlu0 %2748
    %s2751 = sor.u32 256, 8
    %2752 = vbcast.lane.b32.xlu0 %v2746, %s2751
    %v2753 = vpop.permute.xlu0 %2752
    %v2754 = vmul.f32 %v2738, %v1217
    %v2755 = vmul.f32 %v2742, %v1212
    %v2756 = vmul.f32 %v2749, %v1218
    %v2757 = vmul.f32 %v2753, %v1213
    %v2758 = vsel %vm1216, %v2755, 0.0
    %v2759 = vadd.f32 %v2754, %v2758
    %v2760 = vrot.slane %v2759, 4
    %v2761 = vadd.f32 %v2759, %v2760
    %v2762 = vrot.slane %v2761, 2
    %v2763 = vadd.f32 %v2761, %v2762
    %v2764 = vrot.slane %v2763, 1
    %v2765 = vadd.f32 %v2763, %v2764
    %v2766 = vsel %vm1216, %v2757, 0.0
    %v2767 = vadd.f32 %v2756, %v2766
    %v2768 = vrot.slane %v2767, 4
    %v2769 = vadd.f32 %v2767, %v2768
    %v2770 = vrot.slane %v2769, 2
    %v2771 = vadd.f32 %v2769, %v2770
    %v2772 = vrot.slane %v2771, 1
    %v2773 = vadd.f32 %v2771, %v2772
    %v2776 = vsel %vm1059, %v2773, %v2765
    %v2778 = vadd.f32 %v1046, %v2776
    %v2779 = vmax.f32 %v2778, 0.0
    %v2780 = vpack.c.bf16 %v2779, %v2779
    %2781 = vmatprep.subr.bf16.mxu0 %v1567
    %2782 = vmatpush1.bf16.msra.mxu0 %v1566
    %2783 = vmatprep.subr.bf16.mxu0 %v1571
    %2784 = vmatpush1.bf16.msra.mxu0 %v1570
    %2785 = vmatprep.subr.bf16.mxu0 %v1575
    %2786 = vmatpush1.bf16.msra.mxu0 %v1574
    %2787 = vmatprep.subr.bf16.mxu0 %v1579
    %2788 = vmatpush1.bf16.msra.mxu0 %v1578
    %2789 = vmatprep.subr.bf16.mxu0 %v1583
    %2790 = vmatpush1.bf16.msra.mxu0 %v1582
    %2791 = vmatprep.subr.bf16.mxu0 %v1587
    %2792 = vmatpush1.bf16.msra.mxu0 %v1586
    %2793 = vmatprep.subr.bf16.mxu0 %v1591
    %2794 = vmatpush1.bf16.msra.mxu0 %v1590
    %2795 = vmatprep.subr.bf16.mxu0 %v1595
    %2796 = vmatpush1.bf16.msra.mxu0 %v1594
    %2797 = vmatprep.subr.bf16.mxu0 %v1599
    %2798 = vmatpush1.bf16.msra.mxu0 %v1598
    %2799 = vmatprep.subr.bf16.mxu0 %v1603
    %2800 = vmatpush1.bf16.msra.mxu0 %v1602
    %2801 = vmatprep.subr.bf16.mxu0 %v1607
    %2802 = vmatpush1.bf16.msra.mxu0 %v1606
    %2803 = vmatprep.subr.bf16.mxu0 %v1611
    %2804 = vmatpush1.bf16.msra.mxu0 %v1610
    %2805 = vmatprep.subr.bf16.mxu0 %v1615
    %2806 = vmatpush1.bf16.msra.mxu0 %v1614
    %2807 = vmatprep.subr.bf16.mxu0 %v1619
    %2808 = vmatpush1.bf16.msra.mxu0 %v1618
    %2809 = vmatprep.subr.bf16.mxu0 %v1623
    %2810 = vmatpush1.bf16.msra.mxu0 %v1622
    %2811 = vmatprep.subr.bf16.mxu0 %v1627
    %2812 = vmatpush1.bf16.msra.mxu0 %v1626
    %2813 = vmatprep.mubr.bf16.mxu0 %v2561
    %2814 = vmatmul.mubr.bf16.gmra.mrb[0].mxu0 %v2780
    %v2815 = vpop.f32.mrb[0].mxu0
    %v2816 = vadd.f32 %v1357, %v2815
    %v2817 = vpop.f32.mrb[0].mxu0
    %v2818 = vadd.f32 %v1361, %v2817
    %v2819 = vpop.f32.mrb[0].mxu0
    %v2820 = vpop.f32.mrb[0].mxu0
    %2821 = vdwg.mxu0
    %2822 = vmatprep.subr.bf16.mxu0 %v1569
    %2823 = vmatpush1.bf16.msra.mxu0 %v1568
    %2824 = vmatprep.subr.bf16.mxu0 %v1573
    %2825 = vmatpush1.bf16.msra.mxu0 %v1572
    %2826 = vmatprep.subr.bf16.mxu0 %v1577
    %2827 = vmatpush1.bf16.msra.mxu0 %v1576
    %2828 = vmatprep.subr.bf16.mxu0 %v1581
    %2829 = vmatpush1.bf16.msra.mxu0 %v1580
    %2830 = vmatprep.subr.bf16.mxu0 %v1585
    %2831 = vmatpush1.bf16.msra.mxu0 %v1584
    %2832 = vmatprep.subr.bf16.mxu0 %v1589
    %2833 = vmatpush1.bf16.msra.mxu0 %v1588
    %2834 = vmatprep.subr.bf16.mxu0 %v1593
    %2835 = vmatpush1.bf16.msra.mxu0 %v1592
    %2836 = vmatprep.subr.bf16.mxu0 %v1597
    %2837 = vmatpush1.bf16.msra.mxu0 %v1596
    %2838 = vmatprep.subr.bf16.mxu0 %v1601
    %2839 = vmatpush1.bf16.msra.mxu0 %v1600
    %2840 = vmatprep.subr.bf16.mxu0 %v1605
    %2841 = vmatpush1.bf16.msra.mxu0 %v1604
    %2842 = vmatprep.subr.bf16.mxu0 %v1609
    %2843 = vmatpush1.bf16.msra.mxu0 %v1608
    %2844 = vmatprep.subr.bf16.mxu0 %v1613
    %2845 = vmatpush1.bf16.msra.mxu0 %v1612
    %2846 = vmatprep.subr.bf16.mxu0 %v1617
    %2847 = vmatpush1.bf16.msra.mxu0 %v1616
    %2848 = vmatprep.subr.bf16.mxu0 %v1621
    %2849 = vmatpush1.bf16.msra.mxu0 %v1620
    %2850 = vmatprep.subr.bf16.mxu0 %v1625
    %2851 = vmatpush1.bf16.msra.mxu0 %v1624
    %2852 = vmatprep.subr.bf16.mxu0 %v1629
    %2853 = vmatpush1.bf16.msra.mxu0 %v1628
    %2854 = vmatprep.mubr.bf16.mxu0 %v2561
    %2855 = vmatmul.mubr.bf16.gmra.mrb[0].mxu0 %v2780
    %v2856 = vpop.f32.mrb[0].mxu0
    %v2857 = vadd.f32 %v1365, %v2856
    %v2858 = vpop.f32.mrb[0].mxu0
    %v2859 = vadd.f32 %v1369, %v2858
    %v2860 = vpop.f32.mrb[0].mxu0
    %v2861 = vpop.f32.mrb[0].mxu0
    %2862 = vdwg.mxu0
    %v2863 = vxor.u32 %v2816, 2147483648
    %v2864 = vmul.f32 %v2863, 1.442695
    %v2865 = vpow.pop %v2864
    %v2866 = vadd.f32 %v2865, 1.0
    %v2867 = vrcp.pop %v2866
    %v2868 = vmul.f32 1.0, %v2867
    %v2869 = vxor.u32 %v2818, 2147483648
    %v2870 = vmul.f32 %v2869, 1.442695
    %v2871 = vpow.pop %v2870
    %v2872 = vadd.f32 %v2871, 1.0
    %v2873 = vrcp.pop %v2872
    %v2874 = vmul.f32 1.0, %v2873
    %v2875 = vmul.f32 %v2868, %v2859
    %v2876 = vadd.f32 %v2857, %v2875
    %v2877 = vtanh.pop %v2876
    %v2878 = vsub.f32 1.0, %v2874
    %v2879 = vmul.f32 %v2878, %v2877
    %v2880 = vmul.f32 %v2874, %v2560
    %v2881 = vadd.f32 %v2879, %v2880
    %v2882 = vpack.c.bf16 %v2881, %v2881
    %2883 = vmatprep.subr.bf16.mxu0 %v2077
    %2884 = vmatpush1.bf16.msra.mxu0 %v2076
    %2885 = vmatprep.subr.bf16.mxu0 %v2081
    %2886 = vmatpush1.bf16.msra.mxu0 %v2080
    %2887 = vmatprep.subr.bf16.mxu0 %v2085
    %2888 = vmatpush1.bf16.msra.mxu0 %v2084
    %2889 = vmatprep.subr.bf16.mxu0 %v2089
    %2890 = vmatpush1.bf16.msra.mxu0 %v2088
    %2891 = vmatprep.subr.bf16.mxu0 %v2093
    %2892 = vmatpush1.bf16.msra.mxu0 %v2092
    %2893 = vmatprep.subr.bf16.mxu0 %v2097
    %2894 = vmatpush1.bf16.msra.mxu0 %v2096
    %2895 = vmatprep.subr.bf16.mxu0 %v2101
    %2896 = vmatpush1.bf16.msra.mxu0 %v2100
    %2897 = vmatprep.subr.bf16.mxu0 %v2105
    %2898 = vmatpush1.bf16.msra.mxu0 %v2104
    %2899 = vmatprep.subr.bf16.mxu0 %v2109
    %2900 = vmatpush1.bf16.msra.mxu0 %v2108
    %2901 = vmatprep.subr.bf16.mxu0 %v2113
    %2902 = vmatpush1.bf16.msra.mxu0 %v2112
    %2903 = vmatprep.subr.bf16.mxu0 %v2117
    %2904 = vmatpush1.bf16.msra.mxu0 %v2116
    %2905 = vmatprep.subr.bf16.mxu0 %v2121
    %2906 = vmatpush1.bf16.msra.mxu0 %v2120
    %2907 = vmatprep.subr.bf16.mxu0 %v2125
    %2908 = vmatpush1.bf16.msra.mxu0 %v2124
    %2909 = vmatprep.subr.bf16.mxu0 %v2129
    %2910 = vmatpush1.bf16.msra.mxu0 %v2128
    %2911 = vmatprep.subr.bf16.mxu0 %v2133
    %2912 = vmatpush1.bf16.msra.mxu0 %v2132
    %2913 = vmatprep.subr.bf16.mxu0 %v2137
    %2914 = vmatpush1.bf16.msra.mxu0 %v2136
    %2915 = vmatprep.mubr.bf16.mxu0 %v2663
    %2916 = vmatmul.mubr.bf16.gmra.mrb[0].mxu0 %v2882
    %v2917 = vpop.f32.mrb[0].mxu0
    %v2918 = vadd.f32 %v1867, %v2917
    %v2919 = vpop.f32.mrb[0].mxu0
    %v2920 = vadd.f32 %v1871, %v2919
    %v2921 = vpop.f32.mrb[0].mxu0
    %v2922 = vpop.f32.mrb[0].mxu0
    %2923 = vdwg.mxu0
    %2924 = vmatprep.subr.bf16.mxu0 %v2079
    %2925 = vmatpush1.bf16.msra.mxu0 %v2078
    %2926 = vmatprep.subr.bf16.mxu0 %v2083
    %2927 = vmatpush1.bf16.msra.mxu0 %v2082
    %2928 = vmatprep.subr.bf16.mxu0 %v2087
    %2929 = vmatpush1.bf16.msra.mxu0 %v2086
    %2930 = vmatprep.subr.bf16.mxu0 %v2091
    %2931 = vmatpush1.bf16.msra.mxu0 %v2090
    %2932 = vmatprep.subr.bf16.mxu0 %v2095
    %2933 = vmatpush1.bf16.msra.mxu0 %v2094
    %2934 = vmatprep.subr.bf16.mxu0 %v2099
    %2935 = vmatpush1.bf16.msra.mxu0 %v2098
    %2936 = vmatprep.subr.bf16.mxu0 %v2103
    %2937 = vmatpush1.bf16.msra.mxu0 %v2102
    %2938 = vmatprep.subr.bf16.mxu0 %v2107
    %2939 = vmatpush1.bf16.msra.mxu0 %v2106
    %2940 = vmatprep.subr.bf16.mxu0 %v2111
    %2941 = vmatpush1.bf16.msra.mxu0 %v2110
    %2942 = vmatprep.subr.bf16.mxu0 %v2115
    %2943 = vmatpush1.bf16.msra.mxu0 %v2114
    %2944 = vmatprep.subr.bf16.mxu0 %v2119
    %2945 = vmatpush1.bf16.msra.mxu0 %v2118
    %2946 = vmatprep.subr.bf16.mxu0 %v2123
    %2947 = vmatpush1.bf16.msra.mxu0 %v2122
    %2948 = vmatprep.subr.bf16.mxu0 %v2127
    %2949 = vmatpush1.bf16.msra.mxu0 %v2126
    %2950 = vmatprep.subr.bf16.mxu0 %v2131
    %2951 = vmatpush1.bf16.msra.mxu0 %v2130
    %2952 = vmatprep.subr.bf16.mxu0 %v2135
    %2953 = vmatpush1.bf16.msra.mxu0 %v2134
    %2954 = vmatprep.subr.bf16.mxu0 %v2139
    %2955 = vmatpush1.bf16.msra.mxu0 %v2138
    %2956 = vmatprep.mubr.bf16.mxu0 %v2663
    %2957 = vmatmul.mubr.bf16.gmra.mrb[0].mxu0 %v2882
    %v2958 = vpop.f32.mrb[0].mxu0
    %v2959 = vadd.f32 %v1875, %v2958
    %v2960 = vpop.f32.mrb[0].mxu0
    %v2961 = vadd.f32 %v1879, %v2960
    %v2962 = vpop.f32.mrb[0].mxu0
    %v2963 = vpop.f32.mrb[0].mxu0
    %2964 = vdwg.mxu0
    %v2965 = vxor.u32 %v2918, 2147483648
    %v2966 = vmul.f32 %v2965, 1.442695
    %v2967 = vpow.pop %v2966
    %v2968 = vadd.f32 %v2967, 1.0
    %v2969 = vrcp.pop %v2968
    %v2970 = vmul.f32 1.0, %v2969
    %v2971 = vxor.u32 %v2920, 2147483648
    %v2972 = vmul.f32 %v2971, 1.442695
    %v2973 = vpow.pop %v2972
    %v2974 = vadd.f32 %v2973, 1.0
    %v2975 = vrcp.pop %v2974
    %v2976 = vmul.f32 1.0, %v2975
    %v2977 = vmul.f32 %v2970, %v2961
    %v2978 = vadd.f32 %v2959, %v2977
    %v2979 = vtanh.pop %v2978
    %v2980 = vsub.f32 1.0, %v2976
    %v2981 = vmul.f32 %v2980, %v2979
    %v2982 = vmul.f32 %v2976, %v2662
    %v2983 = vadd.f32 %v2981, %v2982
    %v2984 = vpack.c.bf16 %v2983, %v2983
    %2985 = vmatprep.subr.bf16.mxu0 %v887
    %2986 = vmatpush1.bf16.msra.mxu0 %v2322
    %2987 = vmatprep.subr.bf16.mxu0 %v888
    %2988 = vmatpush1.bf16.msra.mxu0 %v2323
    %2989 = vmatprep.subr.bf16.mxu0 %v889
    %2990 = vmatpush1.bf16.msra.mxu0 %v2324
    %2991 = vmatprep.subr.bf16.mxu0 %v890
    %2992 = vmatpush1.bf16.msra.mxu0 %v2325
    %2993 = vmatprep.subr.bf16.mxu0 %v891
    %2994 = vmatpush1.bf16.msra.mxu0 %v2326
    %2995 = vmatprep.subr.bf16.mxu0 %v892
    %2996 = vmatpush1.bf16.msra.mxu0 %v2327
    %2997 = vmatprep.subr.bf16.mxu0 %v893
    %2998 = vmatpush1.bf16.msra.mxu0 %v2328
    %2999 = vmatprep.subr.bf16.mxu0 %v894
    %3000 = vmatpush1.bf16.msra.mxu0 %v2329
    %3001 = vmatprep.subr.bf16.mxu0 0
    %3002 = vmatpush1.bf16.msra.mxu0 0
    %3003 = vmatprep.subr.bf16.mxu0 0
    %3004 = vmatpush1.bf16.msra.mxu0 0
    %3005 = vmatprep.subr.bf16.mxu0 0
    %3006 = vmatpush1.bf16.msra.mxu0 0
    %3007 = vmatprep.subr.bf16.mxu0 0
    %3008 = vmatpush1.bf16.msra.mxu0 0
    %3009 = vmatprep.subr.bf16.mxu0 0
    %3010 = vmatpush1.bf16.msra.mxu0 0
    %3011 = vmatprep.subr.bf16.mxu0 0
    %3012 = vmatpush1.bf16.msra.mxu0 0
    %3013 = vmatprep.subr.bf16.mxu0 0
    %3014 = vmatpush1.bf16.msra.mxu0 0
    %3015 = vmatprep.subr.bf16.mxu0 0
    %3016 = vmatpush1.bf16.msra.mxu0 0
    %3017 = vmatprep.mubr.bf16.mxu0 0
    %3018 = vmatmul.mubr.bf16.gmra.mrb[0].mxu0 %v2984
    %v3019 = vpop.f32.mrb[0].mxu0
    %v3020 = vadd.f32 0.0, %v3019
    %v3021 = vpop.f32.mrb[0].mxu0
    %v3022 = vadd.f32 0.0, %v3021
    %v3023 = vpop.f32.mrb[0].mxu0
    %v3024 = vpop.f32.mrb[0].mxu0
    %3025 = vdwg.mxu0
    %v3026 = vadd.f32 %v3020, %v2382
    %v3027 = vxor.u32 %v3026, 2147483648
    %v3028 = vmul.f32 %v3027, 1.442695
    %v3029 = vpow.pop %v3028
    %v3030 = vadd.f32 %v3029, 1.0
    %v3031 = vrcp.pop %v3030
    %v3032 = vmul.f32 1.0, %v3031
    %v3033 = vrot.slane %v126, 3
    %v3034 = vrot.slane %v128, 2
    %v3035 = vsel %vm1059, %v3034, %v3033
    %v3037 = vmul.f32 %v3032, %v3035
    %v3038 = vsel %vm1216, %v3037, 0.0
    %3039 = vadd.xlane.f32.xlu0 %v3038
    %v3040 = vpop.xlane.xlu0 %3039
    %v3041 = vadd.f32 %v938, %v3022
    %v3042 = vsel %vm1220, %v3041, -inf
    %3043 = vmax.xlane.f32.xlu0 %v3042
    %v3044 = vpop.xlane.xlu0 %3043
    %v3045 = vsub.f32 %v3041, %v3044
    %v3046 = vmul.f32 %v3045, 1.442695
    %v3047 = vpow.pop %v3046
    %v3048 = vsel %vm1220, %v3047, 0.0
    %3049 = vadd.xlane.f32.xlu0 %v3048
    %v3050 = vpop.xlane.xlu0 %3049
    %v3051 = vrcp.pop %v3050
    %v3052 = vmul.f32 %v3047, %v3051
    %v3053 = vlaneseq
    %v3054 = vshrl.u32 %v3053, 7
    %v3055 = vsub.s32 0, %v3054
    %v3056 = vrot.slane %v3052, %v3055
    %3058 = vbcast.lane.b32.xlu0 %v3056, 256
    %v3059 = vpop.permute.xlu0 %3058
    %s3061 = sor.u32 256, 8
    %3062 = vbcast.lane.b32.xlu0 %v3056, %s3061
    %v3063 = vpop.permute.xlu0 %3062
    %v3064 = vlaneseq
    %v3065 = vshrl.u32 %v3064, 7
    %v3066 = vsub.s32 1, %v3065
    %v3067 = vrot.slane %v3052, %v3066
    %3069 = vbcast.lane.b32.xlu0 %v3067, 256
    %v3070 = vpop.permute.xlu0 %3069
    %s3072 = sor.u32 256, 8
    %3073 = vbcast.lane.b32.xlu0 %v3067, %s3072
    %v3074 = vpop.permute.xlu0 %3073
    %v3075 = vmul.f32 %v3059, %v1217
    %v3076 = vmul.f32 %v3063, %v1212
    %v3077 = vmul.f32 %v3070, %v1218
    %v3078 = vmul.f32 %v3074, %v1213
    %v3079 = vsel %vm1216, %v3076, 0.0
    %v3080 = vadd.f32 %v3075, %v3079
    %v3081 = vrot.slane %v3080, 4
    %v3082 = vadd.f32 %v3080, %v3081
    %v3083 = vrot.slane %v3082, 2
    %v3084 = vadd.f32 %v3082, %v3083
    %v3085 = vrot.slane %v3084, 1
    %v3086 = vadd.f32 %v3084, %v3085
    %v3087 = vsel %vm1216, %v3078, 0.0
    %v3088 = vadd.f32 %v3077, %v3087
    %v3089 = vrot.slane %v3088, 4
    %v3090 = vadd.f32 %v3088, %v3089
    %v3091 = vrot.slane %v3090, 2
    %v3092 = vadd.f32 %v3090, %v3091
    %v3093 = vrot.slane %v3092, 1
    %v3094 = vadd.f32 %v3092, %v3093
    %v3097 = vsel %vm1059, %v3094, %v3086
    %v3099 = vadd.f32 %v1046, %v3097
    %v3100 = vmax.f32 %v3099, 0.0
    %v3101 = vpack.c.bf16 %v3100, %v3100
    %3102 = vmatprep.subr.bf16.mxu0 %v1567
    %3103 = vmatpush1.bf16.msra.mxu0 %v1566
    %3104 = vmatprep.subr.bf16.mxu0 %v1571
    %3105 = vmatpush1.bf16.msra.mxu0 %v1570
    %3106 = vmatprep.subr.bf16.mxu0 %v1575
    %3107 = vmatpush1.bf16.msra.mxu0 %v1574
    %3108 = vmatprep.subr.bf16.mxu0 %v1579
    %3109 = vmatpush1.bf16.msra.mxu0 %v1578
    %3110 = vmatprep.subr.bf16.mxu0 %v1583
    %3111 = vmatpush1.bf16.msra.mxu0 %v1582
    %3112 = vmatprep.subr.bf16.mxu0 %v1587
    %3113 = vmatpush1.bf16.msra.mxu0 %v1586
    %3114 = vmatprep.subr.bf16.mxu0 %v1591
    %3115 = vmatpush1.bf16.msra.mxu0 %v1590
    %3116 = vmatprep.subr.bf16.mxu0 %v1595
    %3117 = vmatpush1.bf16.msra.mxu0 %v1594
    %3118 = vmatprep.subr.bf16.mxu0 %v1599
    %3119 = vmatpush1.bf16.msra.mxu0 %v1598
    %3120 = vmatprep.subr.bf16.mxu0 %v1603
    %3121 = vmatpush1.bf16.msra.mxu0 %v1602
    %3122 = vmatprep.subr.bf16.mxu0 %v1607
    %3123 = vmatpush1.bf16.msra.mxu0 %v1606
    %3124 = vmatprep.subr.bf16.mxu0 %v1611
    %3125 = vmatpush1.bf16.msra.mxu0 %v1610
    %3126 = vmatprep.subr.bf16.mxu0 %v1615
    %3127 = vmatpush1.bf16.msra.mxu0 %v1614
    %3128 = vmatprep.subr.bf16.mxu0 %v1619
    %3129 = vmatpush1.bf16.msra.mxu0 %v1618
    %3130 = vmatprep.subr.bf16.mxu0 %v1623
    %3131 = vmatpush1.bf16.msra.mxu0 %v1622
    %3132 = vmatprep.subr.bf16.mxu0 %v1627
    %3133 = vmatpush1.bf16.msra.mxu0 %v1626
    %3134 = vmatprep.mubr.bf16.mxu0 %v2882
    %3135 = vmatmul.mubr.bf16.gmra.mrb[0].mxu0 %v3101
    %v3136 = vpop.f32.mrb[0].mxu0
    %v3137 = vadd.f32 %v1357, %v3136
    %v3138 = vpop.f32.mrb[0].mxu0
    %v3139 = vadd.f32 %v1361, %v3138
    %v3140 = vpop.f32.mrb[0].mxu0
    %v3141 = vpop.f32.mrb[0].mxu0
    %3142 = vdwg.mxu0
    %3143 = vmatprep.subr.bf16.mxu0 %v1569
    %3144 = vmatpush1.bf16.msra.mxu0 %v1568
    %3145 = vmatprep.subr.bf16.mxu0 %v1573
    %3146 = vmatpush1.bf16.msra.mxu0 %v1572
    %3147 = vmatprep.subr.bf16.mxu0 %v1577
    %3148 = vmatpush1.bf16.msra.mxu0 %v1576
    %3149 = vmatprep.subr.bf16.mxu0 %v1581
    %3150 = vmatpush1.bf16.msra.mxu0 %v1580
    %3151 = vmatprep.subr.bf16.mxu0 %v1585
    %3152 = vmatpush1.bf16.msra.mxu0 %v1584
    %3153 = vmatprep.subr.bf16.mxu0 %v1589
    %3154 = vmatpush1.bf16.msra.mxu0 %v1588
    %3155 = vmatprep.subr.bf16.mxu0 %v1593
    %3156 = vmatpush1.bf16.msra.mxu0 %v1592
    %3157 = vmatprep.subr.bf16.mxu0 %v1597
    %3158 = vmatpush1.bf16.msra.mxu0 %v1596
    %3159 = vmatprep.subr.bf16.mxu0 %v1601
    %3160 = vmatpush1.bf16.msra.mxu0 %v1600
    %3161 = vmatprep.subr.bf16.mxu0 %v1605
    %3162 = vmatpush1.bf16.msra.mxu0 %v1604
    %3163 = vmatprep.subr.bf16.mxu0 %v1609
    %3164 = vmatpush1.bf16.msra.mxu0 %v1608
    %3165 = vmatprep.subr.bf16.mxu0 %v1613
    %3166 = vmatpush1.bf16.msra.mxu0 %v1612
    %3167 = vmatprep.subr.bf16.mxu0 %v1617
    %3168 = vmatpush1.bf16.msra.mxu0 %v1616
    %3169 = vmatprep.subr.bf16.mxu0 %v1621
    %3170 = vmatpush1.bf16.msra.mxu0 %v1620
    %3171 = vmatprep.subr.bf16.mxu0 %v1625
    %3172 = vmatpush1.bf16.msra.mxu0 %v1624
    %3173 = vmatprep.subr.bf16.mxu0 %v1629
    %3174 = vmatpush1.bf16.msra.mxu0 %v1628
    %3175 = vmatprep.mubr.bf16.mxu0 %v2882
    %3176 = vmatmul.mubr.bf16.gmra.mrb[0].mxu0 %v3101
    %v3177 = vpop.f32.mrb[0].mxu0
    %v3178 = vadd.f32 %v1365, %v3177
    %v3179 = vpop.f32.mrb[0].mxu0
    %v3180 = vadd.f32 %v1369, %v3179
    %v3181 = vpop.f32.mrb[0].mxu0
    %v3182 = vpop.f32.mrb[0].mxu0
    %3183 = vdwg.mxu0
    %v3184 = vxor.u32 %v3137, 2147483648
    %v3185 = vmul.f32 %v3184, 1.442695
    %v3186 = vpow.pop %v3185
    %v3187 = vadd.f32 %v3186, 1.0
    %v3188 = vrcp.pop %v3187
    %v3189 = vmul.f32 1.0, %v3188
    %v3190 = vxor.u32 %v3139, 2147483648
    %v3191 = vmul.f32 %v3190, 1.442695
    %v3192 = vpow.pop %v3191
    %v3193 = vadd.f32 %v3192, 1.0
    %v3194 = vrcp.pop %v3193
    %v3195 = vmul.f32 1.0, %v3194
    %v3196 = vmul.f32 %v3189, %v3180
    %v3197 = vadd.f32 %v3178, %v3196
    %v3198 = vtanh.pop %v3197
    %v3199 = vsub.f32 1.0, %v3195
    %v3200 = vmul.f32 %v3199, %v3198
    %v3201 = vmul.f32 %v3195, %v2881
    %v3202 = vadd.f32 %v3200, %v3201
    %v3203 = vpack.c.bf16 %v3202, %v3202
    %3204 = vmatprep.subr.bf16.mxu0 %v2077
    %3205 = vmatpush1.bf16.msra.mxu0 %v2076
    %3206 = vmatprep.subr.bf16.mxu0 %v2081
    %3207 = vmatpush1.bf16.msra.mxu0 %v2080
    %3208 = vmatprep.subr.bf16.mxu0 %v2085
    %3209 = vmatpush1.bf16.msra.mxu0 %v2084
    %3210 = vmatprep.subr.bf16.mxu0 %v2089
    %3211 = vmatpush1.bf16.msra.mxu0 %v2088
    %3212 = vmatprep.subr.bf16.mxu0 %v2093
    %3213 = vmatpush1.bf16.msra.mxu0 %v2092
    %3214 = vmatprep.subr.bf16.mxu0 %v2097
    %3215 = vmatpush1.bf16.msra.mxu0 %v2096
    %3216 = vmatprep.subr.bf16.mxu0 %v2101
    %3217 = vmatpush1.bf16.msra.mxu0 %v2100
    %3218 = vmatprep.subr.bf16.mxu0 %v2105
    %3219 = vmatpush1.bf16.msra.mxu0 %v2104
    %3220 = vmatprep.subr.bf16.mxu0 %v2109
    %3221 = vmatpush1.bf16.msra.mxu0 %v2108
    %3222 = vmatprep.subr.bf16.mxu0 %v2113
    %3223 = vmatpush1.bf16.msra.mxu0 %v2112
    %3224 = vmatprep.subr.bf16.mxu0 %v2117
    %3225 = vmatpush1.bf16.msra.mxu0 %v2116
    %3226 = vmatprep.subr.bf16.mxu0 %v2121
    %3227 = vmatpush1.bf16.msra.mxu0 %v2120
    %3228 = vmatprep.subr.bf16.mxu0 %v2125
    %3229 = vmatpush1.bf16.msra.mxu0 %v2124
    %3230 = vmatprep.subr.bf16.mxu0 %v2129
    %3231 = vmatpush1.bf16.msra.mxu0 %v2128
    %3232 = vmatprep.subr.bf16.mxu0 %v2133
    %3233 = vmatpush1.bf16.msra.mxu0 %v2132
    %3234 = vmatprep.subr.bf16.mxu0 %v2137
    %3235 = vmatpush1.bf16.msra.mxu0 %v2136
    %3236 = vmatprep.mubr.bf16.mxu0 %v2984
    %3237 = vmatmul.mubr.bf16.gmra.mrb[0].mxu0 %v3203
    %v3238 = vpop.f32.mrb[0].mxu0
    %v3239 = vadd.f32 %v1867, %v3238
    %v3240 = vpop.f32.mrb[0].mxu0
    %v3241 = vadd.f32 %v1871, %v3240
    %v3242 = vpop.f32.mrb[0].mxu0
    %v3243 = vpop.f32.mrb[0].mxu0
    %3244 = vdwg.mxu0
    %3245 = vmatprep.subr.bf16.mxu0 %v2079
    %3246 = vmatpush1.bf16.msra.mxu0 %v2078
    %3247 = vmatprep.subr.bf16.mxu0 %v2083
    %3248 = vmatpush1.bf16.msra.mxu0 %v2082
    %3249 = vmatprep.subr.bf16.mxu0 %v2087
    %3250 = vmatpush1.bf16.msra.mxu0 %v2086
    %3251 = vmatprep.subr.bf16.mxu0 %v2091
    %3252 = vmatpush1.bf16.msra.mxu0 %v2090
    %3253 = vmatprep.subr.bf16.mxu0 %v2095
    %3254 = vmatpush1.bf16.msra.mxu0 %v2094
    %3255 = vmatprep.subr.bf16.mxu0 %v2099
    %3256 = vmatpush1.bf16.msra.mxu0 %v2098
    %3257 = vmatprep.subr.bf16.mxu0 %v2103
    %3258 = vmatpush1.bf16.msra.mxu0 %v2102
    %3259 = vmatprep.subr.bf16.mxu0 %v2107
    %3260 = vmatpush1.bf16.msra.mxu0 %v2106
    %3261 = vmatprep.subr.bf16.mxu0 %v2111
    %3262 = vmatpush1.bf16.msra.mxu0 %v2110
    %3263 = vmatprep.subr.bf16.mxu0 %v2115
    %3264 = vmatpush1.bf16.msra.mxu0 %v2114
    %3265 = vmatprep.subr.bf16.mxu0 %v2119
    %3266 = vmatpush1.bf16.msra.mxu0 %v2118
    %3267 = vmatprep.subr.bf16.mxu0 %v2123
    %3268 = vmatpush1.bf16.msra.mxu0 %v2122
    %3269 = vmatprep.subr.bf16.mxu0 %v2127
    %3270 = vmatpush1.bf16.msra.mxu0 %v2126
    %3271 = vmatprep.subr.bf16.mxu0 %v2131
    %3272 = vmatpush1.bf16.msra.mxu0 %v2130
    %3273 = vmatprep.subr.bf16.mxu0 %v2135
    %3274 = vmatpush1.bf16.msra.mxu0 %v2134
    %3275 = vmatprep.subr.bf16.mxu0 %v2139
    %3276 = vmatpush1.bf16.msra.mxu0 %v2138
    %3277 = vmatprep.mubr.bf16.mxu0 %v2984
    %3278 = vmatmul.mubr.bf16.gmra.mrb[0].mxu0 %v3203
    %v3279 = vpop.f32.mrb[0].mxu0
    %v3280 = vadd.f32 %v1875, %v3279
    %v3281 = vpop.f32.mrb[0].mxu0
    %v3282 = vadd.f32 %v1879, %v3281
    %v3283 = vpop.f32.mrb[0].mxu0
    %v3284 = vpop.f32.mrb[0].mxu0
    %3285 = vdwg.mxu0
    %v3286 = vxor.u32 %v3239, 2147483648
    %v3287 = vmul.f32 %v3286, 1.442695
    %v3288 = vpow.pop %v3287
    %v3289 = vadd.f32 %v3288, 1.0
    %v3290 = vrcp.pop %v3289
    %v3291 = vmul.f32 1.0, %v3290
    %v3292 = vxor.u32 %v3241, 2147483648
    %v3293 = vmul.f32 %v3292, 1.442695
    %v3294 = vpow.pop %v3293
    %v3295 = vadd.f32 %v3294, 1.0
    %v3296 = vrcp.pop %v3295
    %v3297 = vmul.f32 1.0, %v3296
    %v3298 = vmul.f32 %v3291, %v3282
    %v3299 = vadd.f32 %v3280, %v3298
    %v3300 = vtanh.pop %v3299
    %v3301 = vsub.f32 1.0, %v3297
    %v3302 = vmul.f32 %v3301, %v3300
    %v3303 = vmul.f32 %v3297, %v2983
    %v3304 = vadd.f32 %v3302, %v3303
    %v3305 = vpack.c.bf16 %v3304, %v3304
    %3306 = vmatprep.subr.bf16.mxu0 %v887
    %3307 = vmatpush1.bf16.msra.mxu0 %v2322
    %3308 = vmatprep.subr.bf16.mxu0 %v888
    %3309 = vmatpush1.bf16.msra.mxu0 %v2323
    %3310 = vmatprep.subr.bf16.mxu0 %v889
    %3311 = vmatpush1.bf16.msra.mxu0 %v2324
    %3312 = vmatprep.subr.bf16.mxu0 %v890
    %3313 = vmatpush1.bf16.msra.mxu0 %v2325
    %3314 = vmatprep.subr.bf16.mxu0 %v891
    %3315 = vmatpush1.bf16.msra.mxu0 %v2326
    %3316 = vmatprep.subr.bf16.mxu0 %v892
    %3317 = vmatpush1.bf16.msra.mxu0 %v2327
    %3318 = vmatprep.subr.bf16.mxu0 %v893
    %3319 = vmatpush1.bf16.msra.mxu0 %v2328
    %3320 = vmatprep.subr.bf16.mxu0 %v894
    %3321 = vmatpush1.bf16.msra.mxu0 %v2329
    %3322 = vmatprep.subr.bf16.mxu0 0
    %3323 = vmatpush1.bf16.msra.mxu0 0
    %3324 = vmatprep.subr.bf16.mxu0 0
    %3325 = vmatpush1.bf16.msra.mxu0 0
    %3326 = vmatprep.subr.bf16.mxu0 0
    %3327 = vmatpush1.bf16.msra.mxu0 0
    %3328 = vmatprep.subr.bf16.mxu0 0
    %3329 = vmatpush1.bf16.msra.mxu0 0
    %3330 = vmatprep.subr.bf16.mxu0 0
    %3331 = vmatpush1.bf16.msra.mxu0 0
    %3332 = vmatprep.subr.bf16.mxu0 0
    %3333 = vmatpush1.bf16.msra.mxu0 0
    %3334 = vmatprep.subr.bf16.mxu0 0
    %3335 = vmatpush1.bf16.msra.mxu0 0
    %3336 = vmatprep.subr.bf16.mxu0 0
    %3337 = vmatpush1.bf16.msra.mxu0 0
    %3338 = vmatprep.mubr.bf16.mxu0 0
    %3339 = vmatmul.mubr.bf16.gmra.mrb[0].mxu0 %v3305
    %v3340 = vpop.f32.mrb[0].mxu0
    %v3341 = vadd.f32 0.0, %v3340
    %v3342 = vpop.f32.mrb[0].mxu0
    %v3343 = vadd.f32 0.0, %v3342
    %v3344 = vpop.f32.mrb[0].mxu0
    %v3345 = vpop.f32.mrb[0].mxu0
    %3346 = vdwg.mxu0
    %v3347 = vadd.f32 %v3341, %v2382
    %v3348 = vxor.u32 %v3347, 2147483648
    %v3349 = vmul.f32 %v3348, 1.442695
    %v3350 = vpow.pop %v3349
    %v3351 = vadd.f32 %v3350, 1.0
    %v3352 = vrcp.pop %v3351
    %v3353 = vmul.f32 1.0, %v3352
    %v3354 = vrot.slane %v126, 4
    %v3355 = vrot.slane %v128, 3
    %v3356 = vsel %vm1059, %v3355, %v3354
    %v3358 = vmul.f32 %v3353, %v3356
    %v3359 = vsel %vm1216, %v3358, 0.0
    %3360 = vadd.xlane.f32.xlu0 %v3359
    %v3361 = vpop.xlane.xlu0 %3360
    %v3362 = vadd.f32 %v938, %v3343
    %v3363 = vsel %vm1220, %v3362, -inf
    %3364 = vmax.xlane.f32.xlu0 %v3363
    %v3365 = vpop.xlane.xlu0 %3364
    %v3366 = vsub.f32 %v3362, %v3365
    %v3367 = vmul.f32 %v3366, 1.442695
    %v3368 = vpow.pop %v3367
    %v3369 = vsel %vm1220, %v3368, 0.0
    %3370 = vadd.xlane.f32.xlu0 %v3369
    %v3371 = vpop.xlane.xlu0 %3370
    %v3372 = vrcp.pop %v3371
    %v3373 = vmul.f32 %v3368, %v3372
    %v3374 = vlaneseq
    %v3375 = vshrl.u32 %v3374, 7
    %v3376 = vsub.s32 0, %v3375
    %v3377 = vrot.slane %v3373, %v3376
    %3379 = vbcast.lane.b32.xlu0 %v3377, 256
    %v3380 = vpop.permute.xlu0 %3379
    %s3382 = sor.u32 256, 8
    %3383 = vbcast.lane.b32.xlu0 %v3377, %s3382
    %v3384 = vpop.permute.xlu0 %3383
    %v3385 = vlaneseq
    %v3386 = vshrl.u32 %v3385, 7
    %v3387 = vsub.s32 1, %v3386
    %v3388 = vrot.slane %v3373, %v3387
    %3390 = vbcast.lane.b32.xlu0 %v3388, 256
    %v3391 = vpop.permute.xlu0 %3390
    %s3393 = sor.u32 256, 8
    %3394 = vbcast.lane.b32.xlu0 %v3388, %s3393
    %v3395 = vpop.permute.xlu0 %3394
    %v3396 = vmul.f32 %v3380, %v1217
    %v3397 = vmul.f32 %v3384, %v1212
    %v3398 = vmul.f32 %v3391, %v1218
    %v3399 = vmul.f32 %v3395, %v1213
    %v3400 = vsel %vm1216, %v3397, 0.0
    %v3401 = vadd.f32 %v3396, %v3400
    %v3402 = vrot.slane %v3401, 4
    %v3403 = vadd.f32 %v3401, %v3402
    %v3404 = vrot.slane %v3403, 2
    %v3405 = vadd.f32 %v3403, %v3404
    %v3406 = vrot.slane %v3405, 1
    %v3407 = vadd.f32 %v3405, %v3406
    %v3408 = vsel %vm1216, %v3399, 0.0
    %v3409 = vadd.f32 %v3398, %v3408
    %v3410 = vrot.slane %v3409, 4
    %v3411 = vadd.f32 %v3409, %v3410
    %v3412 = vrot.slane %v3411, 2
    %v3413 = vadd.f32 %v3411, %v3412
    %v3414 = vrot.slane %v3413, 1
    %v3415 = vadd.f32 %v3413, %v3414
    %v3418 = vsel %vm1059, %v3415, %v3407
    %v3420 = vadd.f32 %v1046, %v3418
    %v3421 = vmax.f32 %v3420, 0.0
    %v3422 = vpack.c.bf16 %v3421, %v3421
    %3423 = vmatprep.subr.bf16.mxu0 %v1567
    %3424 = vmatpush1.bf16.msra.mxu0 %v1566
    %3425 = vmatprep.subr.bf16.mxu0 %v1571
    %3426 = vmatpush1.bf16.msra.mxu0 %v1570
    %3427 = vmatprep.subr.bf16.mxu0 %v1575
    %3428 = vmatpush1.bf16.msra.mxu0 %v1574
    %3429 = vmatprep.subr.bf16.mxu0 %v1579
    %3430 = vmatpush1.bf16.msra.mxu0 %v1578
    %3431 = vmatprep.subr.bf16.mxu0 %v1583
    %3432 = vmatpush1.bf16.msra.mxu0 %v1582
    %3433 = vmatprep.subr.bf16.mxu0 %v1587
    %3434 = vmatpush1.bf16.msra.mxu0 %v1586
    %3435 = vmatprep.subr.bf16.mxu0 %v1591
    %3436 = vmatpush1.bf16.msra.mxu0 %v1590
    %3437 = vmatprep.subr.bf16.mxu0 %v1595
    %3438 = vmatpush1.bf16.msra.mxu0 %v1594
    %3439 = vmatprep.subr.bf16.mxu0 %v1599
    %3440 = vmatpush1.bf16.msra.mxu0 %v1598
    %3441 = vmatprep.subr.bf16.mxu0 %v1603
    %3442 = vmatpush1.bf16.msra.mxu0 %v1602
    %3443 = vmatprep.subr.bf16.mxu0 %v1607
    %3444 = vmatpush1.bf16.msra.mxu0 %v1606
    %3445 = vmatprep.subr.bf16.mxu0 %v1611
    %3446 = vmatpush1.bf16.msra.mxu0 %v1610
    %3447 = vmatprep.subr.bf16.mxu0 %v1615
    %3448 = vmatpush1.bf16.msra.mxu0 %v1614
    %3449 = vmatprep.subr.bf16.mxu0 %v1619
    %3450 = vmatpush1.bf16.msra.mxu0 %v1618
    %3451 = vmatprep.subr.bf16.mxu0 %v1623
    %3452 = vmatpush1.bf16.msra.mxu0 %v1622
    %3453 = vmatprep.subr.bf16.mxu0 %v1627
    %3454 = vmatpush1.bf16.msra.mxu0 %v1626
    %3455 = vmatprep.mubr.bf16.mxu0 %v3203
    %3456 = vmatmul.mubr.bf16.gmra.mrb[0].mxu0 %v3422
    %v3457 = vpop.f32.mrb[0].mxu0
    %v3458 = vadd.f32 %v1357, %v3457
    %v3459 = vpop.f32.mrb[0].mxu0
    %v3460 = vadd.f32 %v1361, %v3459
    %v3461 = vpop.f32.mrb[0].mxu0
    %v3462 = vpop.f32.mrb[0].mxu0
    %3463 = vdwg.mxu0
    %3464 = vmatprep.subr.bf16.mxu0 %v1569
    %3465 = vmatpush1.bf16.msra.mxu0 %v1568
    %3466 = vmatprep.subr.bf16.mxu0 %v1573
    %3467 = vmatpush1.bf16.msra.mxu0 %v1572
    %3468 = vmatprep.subr.bf16.mxu0 %v1577
    %3469 = vmatpush1.bf16.msra.mxu0 %v1576
    %3470 = vmatprep.subr.bf16.mxu0 %v1581
    %3471 = vmatpush1.bf16.msra.mxu0 %v1580
    %3472 = vmatprep.subr.bf16.mxu0 %v1585
    %3473 = vmatpush1.bf16.msra.mxu0 %v1584
    %3474 = vmatprep.subr.bf16.mxu0 %v1589
    %3475 = vmatpush1.bf16.msra.mxu0 %v1588
    %3476 = vmatprep.subr.bf16.mxu0 %v1593
    %3477 = vmatpush1.bf16.msra.mxu0 %v1592
    %3478 = vmatprep.subr.bf16.mxu0 %v1597
    %3479 = vmatpush1.bf16.msra.mxu0 %v1596
    %3480 = vmatprep.subr.bf16.mxu0 %v1601
    %3481 = vmatpush1.bf16.msra.mxu0 %v1600
    %3482 = vmatprep.subr.bf16.mxu0 %v1605
    %3483 = vmatpush1.bf16.msra.mxu0 %v1604
    %3484 = vmatprep.subr.bf16.mxu0 %v1609
    %3485 = vmatpush1.bf16.msra.mxu0 %v1608
    %3486 = vmatprep.subr.bf16.mxu0 %v1613
    %3487 = vmatpush1.bf16.msra.mxu0 %v1612
    %3488 = vmatprep.subr.bf16.mxu0 %v1617
    %3489 = vmatpush1.bf16.msra.mxu0 %v1616
    %3490 = vmatprep.subr.bf16.mxu0 %v1621
    %3491 = vmatpush1.bf16.msra.mxu0 %v1620
    %3492 = vmatprep.subr.bf16.mxu0 %v1625
    %3493 = vmatpush1.bf16.msra.mxu0 %v1624
    %3494 = vmatprep.subr.bf16.mxu0 %v1629
    %3495 = vmatpush1.bf16.msra.mxu0 %v1628
    %3496 = vmatprep.mubr.bf16.mxu0 %v3203
    %3497 = vmatmul.mubr.bf16.gmra.mrb[0].mxu0 %v3422
    %v3498 = vpop.f32.mrb[0].mxu0
    %v3499 = vadd.f32 %v1365, %v3498
    %v3500 = vpop.f32.mrb[0].mxu0
    %v3501 = vadd.f32 %v1369, %v3500
    %v3502 = vpop.f32.mrb[0].mxu0
    %v3503 = vpop.f32.mrb[0].mxu0
    %3504 = vdwg.mxu0
    %v3505 = vxor.u32 %v3458, 2147483648
    %v3506 = vmul.f32 %v3505, 1.442695
    %v3507 = vpow.pop %v3506
    %v3508 = vadd.f32 %v3507, 1.0
    %v3509 = vrcp.pop %v3508
    %v3510 = vmul.f32 1.0, %v3509
    %v3511 = vxor.u32 %v3460, 2147483648
    %v3512 = vmul.f32 %v3511, 1.442695
    %v3513 = vpow.pop %v3512
    %v3514 = vadd.f32 %v3513, 1.0
    %v3515 = vrcp.pop %v3514
    %v3516 = vmul.f32 1.0, %v3515
    %v3517 = vmul.f32 %v3510, %v3501
    %v3518 = vadd.f32 %v3499, %v3517
    %v3519 = vtanh.pop %v3518
    %v3520 = vsub.f32 1.0, %v3516
    %v3521 = vmul.f32 %v3520, %v3519
    %v3522 = vmul.f32 %v3516, %v3202
    %v3523 = vadd.f32 %v3521, %v3522
    %v3524 = vpack.c.bf16 %v3523, %v3523
    %3525 = vmatprep.subr.bf16.mxu0 %v2077
    %3526 = vmatpush1.bf16.msra.mxu0 %v2076
    %3527 = vmatprep.subr.bf16.mxu0 %v2081
    %3528 = vmatpush1.bf16.msra.mxu0 %v2080
    %3529 = vmatprep.subr.bf16.mxu0 %v2085
    %3530 = vmatpush1.bf16.msra.mxu0 %v2084
    %3531 = vmatprep.subr.bf16.mxu0 %v2089
    %3532 = vmatpush1.bf16.msra.mxu0 %v2088
    %3533 = vmatprep.subr.bf16.mxu0 %v2093
    %3534 = vmatpush1.bf16.msra.mxu0 %v2092
    %3535 = vmatprep.subr.bf16.mxu0 %v2097
    %3536 = vmatpush1.bf16.msra.mxu0 %v2096
    %3537 = vmatprep.subr.bf16.mxu0 %v2101
    %3538 = vmatpush1.bf16.msra.mxu0 %v2100
    %3539 = vmatprep.subr.bf16.mxu0 %v2105
    %3540 = vmatpush1.bf16.msra.mxu0 %v2104
    %3541 = vmatprep.subr.bf16.mxu0 %v2109
    %3542 = vmatpush1.bf16.msra.mxu0 %v2108
    %3543 = vmatprep.subr.bf16.mxu0 %v2113
    %3544 = vmatpush1.bf16.msra.mxu0 %v2112
    %3545 = vmatprep.subr.bf16.mxu0 %v2117
    %3546 = vmatpush1.bf16.msra.mxu0 %v2116
    %3547 = vmatprep.subr.bf16.mxu0 %v2121
    %3548 = vmatpush1.bf16.msra.mxu0 %v2120
    %3549 = vmatprep.subr.bf16.mxu0 %v2125
    %3550 = vmatpush1.bf16.msra.mxu0 %v2124
    %3551 = vmatprep.subr.bf16.mxu0 %v2129
    %3552 = vmatpush1.bf16.msra.mxu0 %v2128
    %3553 = vmatprep.subr.bf16.mxu0 %v2133
    %3554 = vmatpush1.bf16.msra.mxu0 %v2132
    %3555 = vmatprep.subr.bf16.mxu0 %v2137
    %3556 = vmatpush1.bf16.msra.mxu0 %v2136
    %3557 = vmatprep.mubr.bf16.mxu0 %v3305
    %3558 = vmatmul.mubr.bf16.gmra.mrb[0].mxu0 %v3524
    %v3559 = vpop.f32.mrb[0].mxu0
    %v3560 = vadd.f32 %v1867, %v3559
    %v3561 = vpop.f32.mrb[0].mxu0
    %v3562 = vadd.f32 %v1871, %v3561
    %v3563 = vpop.f32.mrb[0].mxu0
    %v3564 = vpop.f32.mrb[0].mxu0
    %3565 = vdwg.mxu0
    %3566 = vmatprep.subr.bf16.mxu0 %v2079
    %3567 = vmatpush1.bf16.msra.mxu0 %v2078
    %3568 = vmatprep.subr.bf16.mxu0 %v2083
    %3569 = vmatpush1.bf16.msra.mxu0 %v2082
    %3570 = vmatprep.subr.bf16.mxu0 %v2087
    %3571 = vmatpush1.bf16.msra.mxu0 %v2086
    %3572 = vmatprep.subr.bf16.mxu0 %v2091
    %3573 = vmatpush1.bf16.msra.mxu0 %v2090
    %3574 = vmatprep.subr.bf16.mxu0 %v2095
    %3575 = vmatpush1.bf16.msra.mxu0 %v2094
    %3576 = vmatprep.subr.bf16.mxu0 %v2099
    %3577 = vmatpush1.bf16.msra.mxu0 %v2098
    %3578 = vmatprep.subr.bf16.mxu0 %v2103
    %3579 = vmatpush1.bf16.msra.mxu0 %v2102
    %3580 = vmatprep.subr.bf16.mxu0 %v2107
    %3581 = vmatpush1.bf16.msra.mxu0 %v2106
    %3582 = vmatprep.subr.bf16.mxu0 %v2111
    %3583 = vmatpush1.bf16.msra.mxu0 %v2110
    %3584 = vmatprep.subr.bf16.mxu0 %v2115
    %3585 = vmatpush1.bf16.msra.mxu0 %v2114
    %3586 = vmatprep.subr.bf16.mxu0 %v2119
    %3587 = vmatpush1.bf16.msra.mxu0 %v2118
    %3588 = vmatprep.subr.bf16.mxu0 %v2123
    %3589 = vmatpush1.bf16.msra.mxu0 %v2122
    %3590 = vmatprep.subr.bf16.mxu0 %v2127
    %3591 = vmatpush1.bf16.msra.mxu0 %v2126
    %3592 = vmatprep.subr.bf16.mxu0 %v2131
    %3593 = vmatpush1.bf16.msra.mxu0 %v2130
    %3594 = vmatprep.subr.bf16.mxu0 %v2135
    %3595 = vmatpush1.bf16.msra.mxu0 %v2134
    %3596 = vmatprep.subr.bf16.mxu0 %v2139
    %3597 = vmatpush1.bf16.msra.mxu0 %v2138
    %3598 = vmatprep.mubr.bf16.mxu0 %v3305
    %3599 = vmatmul.mubr.bf16.gmra.mrb[0].mxu0 %v3524
    %v3600 = vpop.f32.mrb[0].mxu0
    %v3601 = vadd.f32 %v1875, %v3600
    %v3602 = vpop.f32.mrb[0].mxu0
    %v3603 = vadd.f32 %v1879, %v3602
    %v3604 = vpop.f32.mrb[0].mxu0
    %v3605 = vpop.f32.mrb[0].mxu0
    %3606 = vdwg.mxu0
    %v3607 = vxor.u32 %v3560, 2147483648
    %v3608 = vmul.f32 %v3607, 1.442695
    %v3609 = vpow.pop %v3608
    %v3610 = vadd.f32 %v3609, 1.0
    %v3611 = vrcp.pop %v3610
    %v3612 = vmul.f32 1.0, %v3611
    %v3613 = vxor.u32 %v3562, 2147483648
    %v3614 = vmul.f32 %v3613, 1.442695
    %v3615 = vpow.pop %v3614
    %v3616 = vadd.f32 %v3615, 1.0
    %v3617 = vrcp.pop %v3616
    %v3618 = vmul.f32 1.0, %v3617
    %v3619 = vmul.f32 %v3612, %v3603
    %v3620 = vadd.f32 %v3601, %v3619
    %v3621 = vtanh.pop %v3620
    %v3622 = vsub.f32 1.0, %v3618
    %v3623 = vmul.f32 %v3622, %v3621
    %v3624 = vmul.f32 %v3618, %v3304
    %v3625 = vadd.f32 %v3623, %v3624
    %v3626 = vpack.c.bf16 %v3625, %v3625
    %3627 = vmatprep.subr.bf16.mxu0 %v887
    %3628 = vmatpush1.bf16.msra.mxu0 %v2322
    %3629 = vmatprep.subr.bf16.mxu0 %v888
    %3630 = vmatpush1.bf16.msra.mxu0 %v2323
    %3631 = vmatprep.subr.bf16.mxu0 %v889
    %3632 = vmatpush1.bf16.msra.mxu0 %v2324
    %3633 = vmatprep.subr.bf16.mxu0 %v890
    %3634 = vmatpush1.bf16.msra.mxu0 %v2325
    %3635 = vmatprep.subr.bf16.mxu0 %v891
    %3636 = vmatpush1.bf16.msra.mxu0 %v2326
    %3637 = vmatprep.subr.bf16.mxu0 %v892
    %3638 = vmatpush1.bf16.msra.mxu0 %v2327
    %3639 = vmatprep.subr.bf16.mxu0 %v893
    %3640 = vmatpush1.bf16.msra.mxu0 %v2328
    %3641 = vmatprep.subr.bf16.mxu0 %v894
    %3642 = vmatpush1.bf16.msra.mxu0 %v2329
    %3643 = vmatprep.subr.bf16.mxu0 0
    %3644 = vmatpush1.bf16.msra.mxu0 0
    %3645 = vmatprep.subr.bf16.mxu0 0
    %3646 = vmatpush1.bf16.msra.mxu0 0
    %3647 = vmatprep.subr.bf16.mxu0 0
    %3648 = vmatpush1.bf16.msra.mxu0 0
    %3649 = vmatprep.subr.bf16.mxu0 0
    %3650 = vmatpush1.bf16.msra.mxu0 0
    %3651 = vmatprep.subr.bf16.mxu0 0
    %3652 = vmatpush1.bf16.msra.mxu0 0
    %3653 = vmatprep.subr.bf16.mxu0 0
    %3654 = vmatpush1.bf16.msra.mxu0 0
    %3655 = vmatprep.subr.bf16.mxu0 0
    %3656 = vmatpush1.bf16.msra.mxu0 0
    %3657 = vmatprep.subr.bf16.mxu0 0
    %3658 = vmatpush1.bf16.msra.mxu0 0
    %3659 = vmatprep.mubr.bf16.mxu0 0
    %3660 = vmatmul.mubr.bf16.gmra.mrb[0].mxu0 %v3626
    %v3661 = vpop.f32.mrb[0].mxu0
    %v3662 = vadd.f32 0.0, %v3661
    %v3663 = vpop.f32.mrb[0].mxu0
    %v3664 = vadd.f32 0.0, %v3663
    %v3665 = vpop.f32.mrb[0].mxu0
    %v3666 = vpop.f32.mrb[0].mxu0
    %3667 = vdwg.mxu0
    %v3668 = vadd.f32 %v3662, %v2382
    %v3669 = vxor.u32 %v3668, 2147483648
    %v3670 = vmul.f32 %v3669, 1.442695
    %v3671 = vpow.pop %v3670
    %v3672 = vadd.f32 %v3671, 1.0
    %v3673 = vrcp.pop %v3672
    %v3674 = vmul.f32 1.0, %v3673
    %v3675 = vrot.slane %v126, 5
    %v3676 = vrot.slane %v128, 4
    %v3677 = vsel %vm1059, %v3676, %v3675
    %v3679 = vmul.f32 %v3674, %v3677
    %v3680 = vsel %vm1216, %v3679, 0.0
    %3681 = vadd.xlane.f32.xlu0 %v3680
    %v3682 = vpop.xlane.xlu0 %3681
    %v3683 = vadd.f32 %v938, %v3664
    %v3684 = vsel %vm1220, %v3683, -inf
    %3685 = vmax.xlane.f32.xlu0 %v3684
    %v3686 = vpop.xlane.xlu0 %3685
    %v3687 = vsub.f32 %v3683, %v3686
    %v3688 = vmul.f32 %v3687, 1.442695
    %v3689 = vpow.pop %v3688
    %v3690 = vsel %vm1220, %v3689, 0.0
    %3691 = vadd.xlane.f32.xlu0 %v3690
    %v3692 = vpop.xlane.xlu0 %3691
    %v3693 = vrcp.pop %v3692
    %v3694 = vmul.f32 %v3689, %v3693
    %v3695 = vlaneseq
    %v3696 = vshrl.u32 %v3695, 7
    %v3697 = vsub.s32 0, %v3696
    %v3698 = vrot.slane %v3694, %v3697
    %3700 = vbcast.lane.b32.xlu0 %v3698, 256
    %v3701 = vpop.permute.xlu0 %3700
    %s3703 = sor.u32 256, 8
    %3704 = vbcast.lane.b32.xlu0 %v3698, %s3703
    %v3705 = vpop.permute.xlu0 %3704
    %v3706 = vlaneseq
    %v3707 = vshrl.u32 %v3706, 7
    %v3708 = vsub.s32 1, %v3707
    %v3709 = vrot.slane %v3694, %v3708
    %3711 = vbcast.lane.b32.xlu0 %v3709, 256
    %v3712 = vpop.permute.xlu0 %3711
    %s3714 = sor.u32 256, 8
    %3715 = vbcast.lane.b32.xlu0 %v3709, %s3714
    %v3716 = vpop.permute.xlu0 %3715
    %v3717 = vmul.f32 %v3701, %v1217
    %v3718 = vmul.f32 %v3705, %v1212
    %v3719 = vmul.f32 %v3712, %v1218
    %v3720 = vmul.f32 %v3716, %v1213
    %v3721 = vsel %vm1216, %v3718, 0.0
    %v3722 = vadd.f32 %v3717, %v3721
    %v3723 = vrot.slane %v3722, 4
    %v3724 = vadd.f32 %v3722, %v3723
    %v3725 = vrot.slane %v3724, 2
    %v3726 = vadd.f32 %v3724, %v3725
    %v3727 = vrot.slane %v3726, 1
    %v3728 = vadd.f32 %v3726, %v3727
    %v3729 = vsel %vm1216, %v3720, 0.0
    %v3730 = vadd.f32 %v3719, %v3729
    %v3731 = vrot.slane %v3730, 4
    %v3732 = vadd.f32 %v3730, %v3731
    %v3733 = vrot.slane %v3732, 2
    %v3734 = vadd.f32 %v3732, %v3733
    %v3735 = vrot.slane %v3734, 1
    %v3736 = vadd.f32 %v3734, %v3735
    %v3739 = vsel %vm1059, %v3736, %v3728
    %v3741 = vadd.f32 %v1046, %v3739
    %v3742 = vmax.f32 %v3741, 0.0
    %v3743 = vpack.c.bf16 %v3742, %v3742
    %3744 = vmatprep.subr.bf16.mxu0 %v1567
    %3745 = vmatpush1.bf16.msra.mxu0 %v1566
    %3746 = vmatprep.subr.bf16.mxu0 %v1571
    %3747 = vmatpush1.bf16.msra.mxu0 %v1570
    %3748 = vmatprep.subr.bf16.mxu0 %v1575
    %3749 = vmatpush1.bf16.msra.mxu0 %v1574
    %3750 = vmatprep.subr.bf16.mxu0 %v1579
    %3751 = vmatpush1.bf16.msra.mxu0 %v1578
    %3752 = vmatprep.subr.bf16.mxu0 %v1583
    %3753 = vmatpush1.bf16.msra.mxu0 %v1582
    %3754 = vmatprep.subr.bf16.mxu0 %v1587
    %3755 = vmatpush1.bf16.msra.mxu0 %v1586
    %3756 = vmatprep.subr.bf16.mxu0 %v1591
    %3757 = vmatpush1.bf16.msra.mxu0 %v1590
    %3758 = vmatprep.subr.bf16.mxu0 %v1595
    %3759 = vmatpush1.bf16.msra.mxu0 %v1594
    %3760 = vmatprep.subr.bf16.mxu0 %v1599
    %3761 = vmatpush1.bf16.msra.mxu0 %v1598
    %3762 = vmatprep.subr.bf16.mxu0 %v1603
    %3763 = vmatpush1.bf16.msra.mxu0 %v1602
    %3764 = vmatprep.subr.bf16.mxu0 %v1607
    %3765 = vmatpush1.bf16.msra.mxu0 %v1606
    %3766 = vmatprep.subr.bf16.mxu0 %v1611
    %3767 = vmatpush1.bf16.msra.mxu0 %v1610
    %3768 = vmatprep.subr.bf16.mxu0 %v1615
    %3769 = vmatpush1.bf16.msra.mxu0 %v1614
    %3770 = vmatprep.subr.bf16.mxu0 %v1619
    %3771 = vmatpush1.bf16.msra.mxu0 %v1618
    %3772 = vmatprep.subr.bf16.mxu0 %v1623
    %3773 = vmatpush1.bf16.msra.mxu0 %v1622
    %3774 = vmatprep.subr.bf16.mxu0 %v1627
    %3775 = vmatpush1.bf16.msra.mxu0 %v1626
    %3776 = vmatprep.mubr.bf16.mxu0 %v3524
    %3777 = vmatmul.mubr.bf16.gmra.mrb[0].mxu0 %v3743
    %v3778 = vpop.f32.mrb[0].mxu0
    %v3779 = vadd.f32 %v1357, %v3778
    %v3780 = vpop.f32.mrb[0].mxu0
    %v3781 = vadd.f32 %v1361, %v3780
    %v3782 = vpop.f32.mrb[0].mxu0
    %v3783 = vpop.f32.mrb[0].mxu0
    %3784 = vdwg.mxu0
    %3785 = vmatprep.subr.bf16.mxu0 %v1569
    %3786 = vmatpush1.bf16.msra.mxu0 %v1568
    %3787 = vmatprep.subr.bf16.mxu0 %v1573
    %3788 = vmatpush1.bf16.msra.mxu0 %v1572
    %3789 = vmatprep.subr.bf16.mxu0 %v1577
    %3790 = vmatpush1.bf16.msra.mxu0 %v1576
    %3791 = vmatprep.subr.bf16.mxu0 %v1581
    %3792 = vmatpush1.bf16.msra.mxu0 %v1580
    %3793 = vmatprep.subr.bf16.mxu0 %v1585
    %3794 = vmatpush1.bf16.msra.mxu0 %v1584
    %3795 = vmatprep.subr.bf16.mxu0 %v1589
    %3796 = vmatpush1.bf16.msra.mxu0 %v1588
    %3797 = vmatprep.subr.bf16.mxu0 %v1593
    %3798 = vmatpush1.bf16.msra.mxu0 %v1592
    %3799 = vmatprep.subr.bf16.mxu0 %v1597
    %3800 = vmatpush1.bf16.msra.mxu0 %v1596
    %3801 = vmatprep.subr.bf16.mxu0 %v1601
    %3802 = vmatpush1.bf16.msra.mxu0 %v1600
    %3803 = vmatprep.subr.bf16.mxu0 %v1605
    %3804 = vmatpush1.bf16.msra.mxu0 %v1604
    %3805 = vmatprep.subr.bf16.mxu0 %v1609
    %3806 = vmatpush1.bf16.msra.mxu0 %v1608
    %3807 = vmatprep.subr.bf16.mxu0 %v1613
    %3808 = vmatpush1.bf16.msra.mxu0 %v1612
    %3809 = vmatprep.subr.bf16.mxu0 %v1617
    %3810 = vmatpush1.bf16.msra.mxu0 %v1616
    %3811 = vmatprep.subr.bf16.mxu0 %v1621
    %3812 = vmatpush1.bf16.msra.mxu0 %v1620
    %3813 = vmatprep.subr.bf16.mxu0 %v1625
    %3814 = vmatpush1.bf16.msra.mxu0 %v1624
    %3815 = vmatprep.subr.bf16.mxu0 %v1629
    %3816 = vmatpush1.bf16.msra.mxu0 %v1628
    %3817 = vmatprep.mubr.bf16.mxu0 %v3524
    %3818 = vmatmul.mubr.bf16.gmra.mrb[0].mxu0 %v3743
    %v3819 = vpop.f32.mrb[0].mxu0
    %v3820 = vadd.f32 %v1365, %v3819
    %v3821 = vpop.f32.mrb[0].mxu0
    %v3822 = vadd.f32 %v1369, %v3821
    %v3823 = vpop.f32.mrb[0].mxu0
    %v3824 = vpop.f32.mrb[0].mxu0
    %3825 = vdwg.mxu0
    %v3826 = vxor.u32 %v3779, 2147483648
    %v3827 = vmul.f32 %v3826, 1.442695
    %v3828 = vpow.pop %v3827
    %v3829 = vadd.f32 %v3828, 1.0
    %v3830 = vrcp.pop %v3829
    %v3831 = vmul.f32 1.0, %v3830
    %v3832 = vxor.u32 %v3781, 2147483648
    %v3833 = vmul.f32 %v3832, 1.442695
    %v3834 = vpow.pop %v3833
    %v3835 = vadd.f32 %v3834, 1.0
    %v3836 = vrcp.pop %v3835
    %v3837 = vmul.f32 1.0, %v3836
    %v3838 = vmul.f32 %v3831, %v3822
    %v3839 = vadd.f32 %v3820, %v3838
    %v3840 = vtanh.pop %v3839
    %v3841 = vsub.f32 1.0, %v3837
    %v3842 = vmul.f32 %v3841, %v3840
    %v3843 = vmul.f32 %v3837, %v3523
    %v3844 = vadd.f32 %v3842, %v3843
    %v3845 = vpack.c.bf16 %v3844, %v3844
    %3846 = vmatprep.subr.bf16.mxu0 %v2077
    %3847 = vmatpush1.bf16.msra.mxu0 %v2076
    %3848 = vmatprep.subr.bf16.mxu0 %v2081
    %3849 = vmatpush1.bf16.msra.mxu0 %v2080
    %3850 = vmatprep.subr.bf16.mxu0 %v2085
    %3851 = vmatpush1.bf16.msra.mxu0 %v2084
    %3852 = vmatprep.subr.bf16.mxu0 %v2089
    %3853 = vmatpush1.bf16.msra.mxu0 %v2088
    %3854 = vmatprep.subr.bf16.mxu0 %v2093
    %3855 = vmatpush1.bf16.msra.mxu0 %v2092
    %3856 = vmatprep.subr.bf16.mxu0 %v2097
    %3857 = vmatpush1.bf16.msra.mxu0 %v2096
    %3858 = vmatprep.subr.bf16.mxu0 %v2101
    %3859 = vmatpush1.bf16.msra.mxu0 %v2100
    %3860 = vmatprep.subr.bf16.mxu0 %v2105
    %3861 = vmatpush1.bf16.msra.mxu0 %v2104
    %3862 = vmatprep.subr.bf16.mxu0 %v2109
    %3863 = vmatpush1.bf16.msra.mxu0 %v2108
    %3864 = vmatprep.subr.bf16.mxu0 %v2113
    %3865 = vmatpush1.bf16.msra.mxu0 %v2112
    %3866 = vmatprep.subr.bf16.mxu0 %v2117
    %3867 = vmatpush1.bf16.msra.mxu0 %v2116
    %3868 = vmatprep.subr.bf16.mxu0 %v2121
    %3869 = vmatpush1.bf16.msra.mxu0 %v2120
    %3870 = vmatprep.subr.bf16.mxu0 %v2125
    %3871 = vmatpush1.bf16.msra.mxu0 %v2124
    %3872 = vmatprep.subr.bf16.mxu0 %v2129
    %3873 = vmatpush1.bf16.msra.mxu0 %v2128
    %3874 = vmatprep.subr.bf16.mxu0 %v2133
    %3875 = vmatpush1.bf16.msra.mxu0 %v2132
    %3876 = vmatprep.subr.bf16.mxu0 %v2137
    %3877 = vmatpush1.bf16.msra.mxu0 %v2136
    %3878 = vmatprep.mubr.bf16.mxu0 %v3626
    %3879 = vmatmul.mubr.bf16.gmra.mrb[0].mxu0 %v3845
    %v3880 = vpop.f32.mrb[0].mxu0
    %v3881 = vadd.f32 %v1867, %v3880
    %v3882 = vpop.f32.mrb[0].mxu0
    %v3883 = vadd.f32 %v1871, %v3882
    %v3884 = vpop.f32.mrb[0].mxu0
    %v3885 = vpop.f32.mrb[0].mxu0
    %3886 = vdwg.mxu0
    %3887 = vmatprep.subr.bf16.mxu0 %v2079
    %3888 = vmatpush1.bf16.msra.mxu0 %v2078
    %3889 = vmatprep.subr.bf16.mxu0 %v2083
    %3890 = vmatpush1.bf16.msra.mxu0 %v2082
    %3891 = vmatprep.subr.bf16.mxu0 %v2087
    %3892 = vmatpush1.bf16.msra.mxu0 %v2086
    %3893 = vmatprep.subr.bf16.mxu0 %v2091
    %3894 = vmatpush1.bf16.msra.mxu0 %v2090
    %3895 = vmatprep.subr.bf16.mxu0 %v2095
    %3896 = vmatpush1.bf16.msra.mxu0 %v2094
    %3897 = vmatprep.subr.bf16.mxu0 %v2099
    %3898 = vmatpush1.bf16.msra.mxu0 %v2098
    %3899 = vmatprep.subr.bf16.mxu0 %v2103
    %3900 = vmatpush1.bf16.msra.mxu0 %v2102
    %3901 = vmatprep.subr.bf16.mxu0 %v2107
    %3902 = vmatpush1.bf16.msra.mxu0 %v2106
    %3903 = vmatprep.subr.bf16.mxu0 %v2111
    %3904 = vmatpush1.bf16.msra.mxu0 %v2110
    %3905 = vmatprep.subr.bf16.mxu0 %v2115
    %3906 = vmatpush1.bf16.msra.mxu0 %v2114
    %3907 = vmatprep.subr.bf16.mxu0 %v2119
    %3908 = vmatpush1.bf16.msra.mxu0 %v2118
    %3909 = vmatprep.subr.bf16.mxu0 %v2123
    %3910 = vmatpush1.bf16.msra.mxu0 %v2122
    %3911 = vmatprep.subr.bf16.mxu0 %v2127
    %3912 = vmatpush1.bf16.msra.mxu0 %v2126
    %3913 = vmatprep.subr.bf16.mxu0 %v2131
    %3914 = vmatpush1.bf16.msra.mxu0 %v2130
    %3915 = vmatprep.subr.bf16.mxu0 %v2135
    %3916 = vmatpush1.bf16.msra.mxu0 %v2134
    %3917 = vmatprep.subr.bf16.mxu0 %v2139
    %3918 = vmatpush1.bf16.msra.mxu0 %v2138
    %3919 = vmatprep.mubr.bf16.mxu0 %v3626
    %3920 = vmatmul.mubr.bf16.gmra.mrb[0].mxu0 %v3845
    %v3921 = vpop.f32.mrb[0].mxu0
    %v3922 = vadd.f32 %v1875, %v3921
    %v3923 = vpop.f32.mrb[0].mxu0
    %v3924 = vadd.f32 %v1879, %v3923
    %v3925 = vpop.f32.mrb[0].mxu0
    %v3926 = vpop.f32.mrb[0].mxu0
    %3927 = vdwg.mxu0
    %v3928 = vxor.u32 %v3881, 2147483648
    %v3929 = vmul.f32 %v3928, 1.442695
    %v3930 = vpow.pop %v3929
    %v3931 = vadd.f32 %v3930, 1.0
    %v3932 = vrcp.pop %v3931
    %v3933 = vmul.f32 1.0, %v3932
    %v3934 = vxor.u32 %v3883, 2147483648
    %v3935 = vmul.f32 %v3934, 1.442695
    %v3936 = vpow.pop %v3935
    %v3937 = vadd.f32 %v3936, 1.0
    %v3938 = vrcp.pop %v3937
    %v3939 = vmul.f32 1.0, %v3938
    %v3940 = vmul.f32 %v3933, %v3924
    %v3941 = vadd.f32 %v3922, %v3940
    %v3942 = vtanh.pop %v3941
    %v3943 = vsub.f32 1.0, %v3939
    %v3944 = vmul.f32 %v3943, %v3942
    %v3945 = vmul.f32 %v3939, %v3625
    %v3946 = vadd.f32 %v3944, %v3945
    %v3947 = vpack.c.bf16 %v3946, %v3946
    %3948 = vmatprep.subr.bf16.mxu0 %v887
    %3949 = vmatpush1.bf16.msra.mxu0 %v2322
    %3950 = vmatprep.subr.bf16.mxu0 %v888
    %3951 = vmatpush1.bf16.msra.mxu0 %v2323
    %3952 = vmatprep.subr.bf16.mxu0 %v889
    %3953 = vmatpush1.bf16.msra.mxu0 %v2324
    %3954 = vmatprep.subr.bf16.mxu0 %v890
    %3955 = vmatpush1.bf16.msra.mxu0 %v2325
    %3956 = vmatprep.subr.bf16.mxu0 %v891
    %3957 = vmatpush1.bf16.msra.mxu0 %v2326
    %3958 = vmatprep.subr.bf16.mxu0 %v892
    %3959 = vmatpush1.bf16.msra.mxu0 %v2327
    %3960 = vmatprep.subr.bf16.mxu0 %v893
    %3961 = vmatpush1.bf16.msra.mxu0 %v2328
    %3962 = vmatprep.subr.bf16.mxu0 %v894
    %3963 = vmatpush1.bf16.msra.mxu0 %v2329
    %3964 = vmatprep.subr.bf16.mxu0 0
    %3965 = vmatpush1.bf16.msra.mxu0 0
    %3966 = vmatprep.subr.bf16.mxu0 0
    %3967 = vmatpush1.bf16.msra.mxu0 0
    %3968 = vmatprep.subr.bf16.mxu0 0
    %3969 = vmatpush1.bf16.msra.mxu0 0
    %3970 = vmatprep.subr.bf16.mxu0 0
    %3971 = vmatpush1.bf16.msra.mxu0 0
    %3972 = vmatprep.subr.bf16.mxu0 0
    %3973 = vmatpush1.bf16.msra.mxu0 0
    %3974 = vmatprep.subr.bf16.mxu0 0
    %3975 = vmatpush1.bf16.msra.mxu0 0
    %3976 = vmatprep.subr.bf16.mxu0 0
    %3977 = vmatpush1.bf16.msra.mxu0 0
    %3978 = vmatprep.subr.bf16.mxu0 0
    %3979 = vmatpush1.bf16.msra.mxu0 0
    %3980 = vmatprep.mubr.bf16.mxu0 0
    %3981 = vmatmul.mubr.bf16.gmra.mrb[0].mxu0 %v3947
    %v3982 = vpop.f32.mrb[0].mxu0
    %v3983 = vadd.f32 0.0, %v3982
    %v3984 = vpop.f32.mrb[0].mxu0
    %v3985 = vadd.f32 0.0, %v3984
    %v3986 = vpop.f32.mrb[0].mxu0
    %v3987 = vpop.f32.mrb[0].mxu0
    %3988 = vdwg.mxu0
    %v3989 = vadd.f32 %v3983, %v2382
    %v3990 = vxor.u32 %v3989, 2147483648
    %v3991 = vmul.f32 %v3990, 1.442695
    %v3992 = vpow.pop %v3991
    %v3993 = vadd.f32 %v3992, 1.0
    %v3994 = vrcp.pop %v3993
    %v3995 = vmul.f32 1.0, %v3994
    %v3996 = vrot.slane %v126, 6
    %v3997 = vrot.slane %v128, 5
    %v3998 = vsel %vm1059, %v3997, %v3996
    %v4000 = vmul.f32 %v3995, %v3998
    %v4001 = vsel %vm1216, %v4000, 0.0
    %4002 = vadd.xlane.f32.xlu0 %v4001
    %v4003 = vpop.xlane.xlu0 %4002
    %v4004 = vadd.f32 %v938, %v3985
    %v4005 = vsel %vm1220, %v4004, -inf
    %4006 = vmax.xlane.f32.xlu0 %v4005
    %v4007 = vpop.xlane.xlu0 %4006
    %v4008 = vsub.f32 %v4004, %v4007
    %v4009 = vmul.f32 %v4008, 1.442695
    %v4010 = vpow.pop %v4009
    %v4011 = vsel %vm1220, %v4010, 0.0
    %4012 = vadd.xlane.f32.xlu0 %v4011
    %v4013 = vpop.xlane.xlu0 %4012
    %v4014 = vrcp.pop %v4013
    %v4015 = vmul.f32 %v4010, %v4014
    %v4016 = vlaneseq
    %v4017 = vshrl.u32 %v4016, 7
    %v4018 = vsub.s32 0, %v4017
    %v4019 = vrot.slane %v4015, %v4018
    %4021 = vbcast.lane.b32.xlu0 %v4019, 256
    %v4022 = vpop.permute.xlu0 %4021
    %s4024 = sor.u32 256, 8
    %4025 = vbcast.lane.b32.xlu0 %v4019, %s4024
    %v4026 = vpop.permute.xlu0 %4025
    %v4027 = vlaneseq
    %v4028 = vshrl.u32 %v4027, 7
    %v4029 = vsub.s32 1, %v4028
    %v4030 = vrot.slane %v4015, %v4029
    %4032 = vbcast.lane.b32.xlu0 %v4030, 256
    %v4033 = vpop.permute.xlu0 %4032
    %s4035 = sor.u32 256, 8
    %4036 = vbcast.lane.b32.xlu0 %v4030, %s4035
    %v4037 = vpop.permute.xlu0 %4036
    %v4038 = vmul.f32 %v4022, %v1217
    %v4039 = vmul.f32 %v4026, %v1212
    %v4040 = vmul.f32 %v4033, %v1218
    %v4041 = vmul.f32 %v4037, %v1213
    %v4042 = vsel %vm1216, %v4039, 0.0
    %v4043 = vadd.f32 %v4038, %v4042
    %v4044 = vrot.slane %v4043, 4
    %v4045 = vadd.f32 %v4043, %v4044
    %v4046 = vrot.slane %v4045, 2
    %v4047 = vadd.f32 %v4045, %v4046
    %v4048 = vrot.slane %v4047, 1
    %v4049 = vadd.f32 %v4047, %v4048
    %v4050 = vsel %vm1216, %v4041, 0.0
    %v4051 = vadd.f32 %v4040, %v4050
    %v4052 = vrot.slane %v4051, 4
    %v4053 = vadd.f32 %v4051, %v4052
    %v4054 = vrot.slane %v4053, 2
    %v4055 = vadd.f32 %v4053, %v4054
    %v4056 = vrot.slane %v4055, 1
    %v4057 = vadd.f32 %v4055, %v4056
    %v4060 = vsel %vm1059, %v4057, %v4049
    %v4062 = vadd.f32 %v1046, %v4060
    %v4063 = vmax.f32 %v4062, 0.0
    %v4064 = vpack.c.bf16 %v4063, %v4063
    %4065 = vmatprep.subr.bf16.mxu0 %v1567
    %4066 = vmatpush1.bf16.msra.mxu0 %v1566
    %4067 = vmatprep.subr.bf16.mxu0 %v1571
    %4068 = vmatpush1.bf16.msra.mxu0 %v1570
    %4069 = vmatprep.subr.bf16.mxu0 %v1575
    %4070 = vmatpush1.bf16.msra.mxu0 %v1574
    %4071 = vmatprep.subr.bf16.mxu0 %v1579
    %4072 = vmatpush1.bf16.msra.mxu0 %v1578
    %4073 = vmatprep.subr.bf16.mxu0 %v1583
    %4074 = vmatpush1.bf16.msra.mxu0 %v1582
    %4075 = vmatprep.subr.bf16.mxu0 %v1587
    %4076 = vmatpush1.bf16.msra.mxu0 %v1586
    %4077 = vmatprep.subr.bf16.mxu0 %v1591
    %4078 = vmatpush1.bf16.msra.mxu0 %v1590
    %4079 = vmatprep.subr.bf16.mxu0 %v1595
    %4080 = vmatpush1.bf16.msra.mxu0 %v1594
    %4081 = vmatprep.subr.bf16.mxu0 %v1599
    %4082 = vmatpush1.bf16.msra.mxu0 %v1598
    %4083 = vmatprep.subr.bf16.mxu0 %v1603
    %4084 = vmatpush1.bf16.msra.mxu0 %v1602
    %4085 = vmatprep.subr.bf16.mxu0 %v1607
    %4086 = vmatpush1.bf16.msra.mxu0 %v1606
    %4087 = vmatprep.subr.bf16.mxu0 %v1611
    %4088 = vmatpush1.bf16.msra.mxu0 %v1610
    %4089 = vmatprep.subr.bf16.mxu0 %v1615
    %4090 = vmatpush1.bf16.msra.mxu0 %v1614
    %4091 = vmatprep.subr.bf16.mxu0 %v1619
    %4092 = vmatpush1.bf16.msra.mxu0 %v1618
    %4093 = vmatprep.subr.bf16.mxu0 %v1623
    %4094 = vmatpush1.bf16.msra.mxu0 %v1622
    %4095 = vmatprep.subr.bf16.mxu0 %v1627
    %4096 = vmatpush1.bf16.msra.mxu0 %v1626
    %4097 = vmatprep.mubr.bf16.mxu0 %v3845
    %4098 = vmatmul.mubr.bf16.gmra.mrb[0].mxu0 %v4064
    %v4099 = vpop.f32.mrb[0].mxu0
    %v4100 = vadd.f32 %v1357, %v4099
    %v4101 = vpop.f32.mrb[0].mxu0
    %v4102 = vadd.f32 %v1361, %v4101
    %v4103 = vpop.f32.mrb[0].mxu0
    %v4104 = vpop.f32.mrb[0].mxu0
    %4105 = vdwg.mxu0
    %4106 = vmatprep.subr.bf16.mxu0 %v1569
    %4107 = vmatpush1.bf16.msra.mxu0 %v1568
    %4108 = vmatprep.subr.bf16.mxu0 %v1573
    %4109 = vmatpush1.bf16.msra.mxu0 %v1572
    %4110 = vmatprep.subr.bf16.mxu0 %v1577
    %4111 = vmatpush1.bf16.msra.mxu0 %v1576
    %4112 = vmatprep.subr.bf16.mxu0 %v1581
    %4113 = vmatpush1.bf16.msra.mxu0 %v1580
    %4114 = vmatprep.subr.bf16.mxu0 %v1585
    %4115 = vmatpush1.bf16.msra.mxu0 %v1584
    %4116 = vmatprep.subr.bf16.mxu0 %v1589
    %4117 = vmatpush1.bf16.msra.mxu0 %v1588
    %4118 = vmatprep.subr.bf16.mxu0 %v1593
    %4119 = vmatpush1.bf16.msra.mxu0 %v1592
    %4120 = vmatprep.subr.bf16.mxu0 %v1597
    %4121 = vmatpush1.bf16.msra.mxu0 %v1596
    %4122 = vmatprep.subr.bf16.mxu0 %v1601
    %4123 = vmatpush1.bf16.msra.mxu0 %v1600
    %4124 = vmatprep.subr.bf16.mxu0 %v1605
    %4125 = vmatpush1.bf16.msra.mxu0 %v1604
    %4126 = vmatprep.subr.bf16.mxu0 %v1609
    %4127 = vmatpush1.bf16.msra.mxu0 %v1608
    %4128 = vmatprep.subr.bf16.mxu0 %v1613
    %4129 = vmatpush1.bf16.msra.mxu0 %v1612
    %4130 = vmatprep.subr.bf16.mxu0 %v1617
    %4131 = vmatpush1.bf16.msra.mxu0 %v1616
    %4132 = vmatprep.subr.bf16.mxu0 %v1621
    %4133 = vmatpush1.bf16.msra.mxu0 %v1620
    %4134 = vmatprep.subr.bf16.mxu0 %v1625
    %4135 = vmatpush1.bf16.msra.mxu0 %v1624
    %4136 = vmatprep.subr.bf16.mxu0 %v1629
    %4137 = vmatpush1.bf16.msra.mxu0 %v1628
    %4138 = vmatprep.mubr.bf16.mxu0 %v3845
    %4139 = vmatmul.mubr.bf16.gmra.mrb[0].mxu0 %v4064
    %v4140 = vpop.f32.mrb[0].mxu0
    %v4141 = vadd.f32 %v1365, %v4140
    %v4142 = vpop.f32.mrb[0].mxu0
    %v4143 = vadd.f32 %v1369, %v4142
    %v4144 = vpop.f32.mrb[0].mxu0
    %v4145 = vpop.f32.mrb[0].mxu0
    %4146 = vdwg.mxu0
    %v4147 = vxor.u32 %v4100, 2147483648
    %v4148 = vmul.f32 %v4147, 1.442695
    %v4149 = vpow.pop %v4148
    %v4150 = vadd.f32 %v4149, 1.0
    %v4151 = vrcp.pop %v4150
    %v4152 = vmul.f32 1.0, %v4151
    %v4153 = vxor.u32 %v4102, 2147483648
    %v4154 = vmul.f32 %v4153, 1.442695
    %v4155 = vpow.pop %v4154
    %v4156 = vadd.f32 %v4155, 1.0
    %v4157 = vrcp.pop %v4156
    %v4158 = vmul.f32 1.0, %v4157
    %v4159 = vmul.f32 %v4152, %v4143
    %v4160 = vadd.f32 %v4141, %v4159
    %v4161 = vtanh.pop %v4160
    %v4162 = vsub.f32 1.0, %v4158
    %v4163 = vmul.f32 %v4162, %v4161
    %v4164 = vmul.f32 %v4158, %v3844
    %v4165 = vadd.f32 %v4163, %v4164
    %v4166 = vpack.c.bf16 %v4165, %v4165
    %4167 = vmatprep.subr.bf16.mxu0 %v2077
    %4168 = vmatpush1.bf16.msra.mxu0 %v2076
    %4169 = vmatprep.subr.bf16.mxu0 %v2081
    %4170 = vmatpush1.bf16.msra.mxu0 %v2080
    %4171 = vmatprep.subr.bf16.mxu0 %v2085
    %4172 = vmatpush1.bf16.msra.mxu0 %v2084
    %4173 = vmatprep.subr.bf16.mxu0 %v2089
    %4174 = vmatpush1.bf16.msra.mxu0 %v2088
    %4175 = vmatprep.subr.bf16.mxu0 %v2093
    %4176 = vmatpush1.bf16.msra.mxu0 %v2092
    %4177 = vmatprep.subr.bf16.mxu0 %v2097
    %4178 = vmatpush1.bf16.msra.mxu0 %v2096
    %4179 = vmatprep.subr.bf16.mxu0 %v2101
    %4180 = vmatpush1.bf16.msra.mxu0 %v2100
    %4181 = vmatprep.subr.bf16.mxu0 %v2105
    %4182 = vmatpush1.bf16.msra.mxu0 %v2104
    %4183 = vmatprep.subr.bf16.mxu0 %v2109
    %4184 = vmatpush1.bf16.msra.mxu0 %v2108
    %4185 = vmatprep.subr.bf16.mxu0 %v2113
    %4186 = vmatpush1.bf16.msra.mxu0 %v2112
    %4187 = vmatprep.subr.bf16.mxu0 %v2117
    %4188 = vmatpush1.bf16.msra.mxu0 %v2116
    %4189 = vmatprep.subr.bf16.mxu0 %v2121
    %4190 = vmatpush1.bf16.msra.mxu0 %v2120
    %4191 = vmatprep.subr.bf16.mxu0 %v2125
    %4192 = vmatpush1.bf16.msra.mxu0 %v2124
    %4193 = vmatprep.subr.bf16.mxu0 %v2129
    %4194 = vmatpush1.bf16.msra.mxu0 %v2128
    %4195 = vmatprep.subr.bf16.mxu0 %v2133
    %4196 = vmatpush1.bf16.msra.mxu0 %v2132
    %4197 = vmatprep.subr.bf16.mxu0 %v2137
    %4198 = vmatpush1.bf16.msra.mxu0 %v2136
    %4199 = vmatprep.mubr.bf16.mxu0 %v3947
    %4200 = vmatmul.mubr.bf16.gmra.mrb[0].mxu0 %v4166
    %v4201 = vpop.f32.mrb[0].mxu0
    %v4202 = vadd.f32 %v1867, %v4201
    %v4203 = vpop.f32.mrb[0].mxu0
    %v4204 = vadd.f32 %v1871, %v4203
    %v4205 = vpop.f32.mrb[0].mxu0
    %v4206 = vpop.f32.mrb[0].mxu0
    %4207 = vdwg.mxu0
    %4208 = vmatprep.subr.bf16.mxu0 %v2079
    %4209 = vmatpush1.bf16.msra.mxu0 %v2078
    %4210 = vmatprep.subr.bf16.mxu0 %v2083
    %4211 = vmatpush1.bf16.msra.mxu0 %v2082
    %4212 = vmatprep.subr.bf16.mxu0 %v2087
    %4213 = vmatpush1.bf16.msra.mxu0 %v2086
    %4214 = vmatprep.subr.bf16.mxu0 %v2091
    %4215 = vmatpush1.bf16.msra.mxu0 %v2090
    %4216 = vmatprep.subr.bf16.mxu0 %v2095
    %4217 = vmatpush1.bf16.msra.mxu0 %v2094
    %4218 = vmatprep.subr.bf16.mxu0 %v2099
    %4219 = vmatpush1.bf16.msra.mxu0 %v2098
    %4220 = vmatprep.subr.bf16.mxu0 %v2103
    %4221 = vmatpush1.bf16.msra.mxu0 %v2102
    %4222 = vmatprep.subr.bf16.mxu0 %v2107
    %4223 = vmatpush1.bf16.msra.mxu0 %v2106
    %4224 = vmatprep.subr.bf16.mxu0 %v2111
    %4225 = vmatpush1.bf16.msra.mxu0 %v2110
    %4226 = vmatprep.subr.bf16.mxu0 %v2115
    %4227 = vmatpush1.bf16.msra.mxu0 %v2114
    %4228 = vmatprep.subr.bf16.mxu0 %v2119
    %4229 = vmatpush1.bf16.msra.mxu0 %v2118
    %4230 = vmatprep.subr.bf16.mxu0 %v2123
    %4231 = vmatpush1.bf16.msra.mxu0 %v2122
    %4232 = vmatprep.subr.bf16.mxu0 %v2127
    %4233 = vmatpush1.bf16.msra.mxu0 %v2126
    %4234 = vmatprep.subr.bf16.mxu0 %v2131
    %4235 = vmatpush1.bf16.msra.mxu0 %v2130
    %4236 = vmatprep.subr.bf16.mxu0 %v2135
    %4237 = vmatpush1.bf16.msra.mxu0 %v2134
    %4238 = vmatprep.subr.bf16.mxu0 %v2139
    %4239 = vmatpush1.bf16.msra.mxu0 %v2138
    %4240 = vmatprep.mubr.bf16.mxu0 %v3947
    %4241 = vmatmul.mubr.bf16.gmra.mrb[0].mxu0 %v4166
    %v4242 = vpop.f32.mrb[0].mxu0
    %v4243 = vadd.f32 %v1875, %v4242
    %v4244 = vpop.f32.mrb[0].mxu0
    %v4245 = vadd.f32 %v1879, %v4244
    %v4246 = vpop.f32.mrb[0].mxu0
    %v4247 = vpop.f32.mrb[0].mxu0
    %4248 = vdwg.mxu0
    %v4249 = vxor.u32 %v4202, 2147483648
    %v4250 = vmul.f32 %v4249, 1.442695
    %v4251 = vpow.pop %v4250
    %v4252 = vadd.f32 %v4251, 1.0
    %v4253 = vrcp.pop %v4252
    %v4254 = vmul.f32 1.0, %v4253
    %v4255 = vxor.u32 %v4204, 2147483648
    %v4256 = vmul.f32 %v4255, 1.442695
    %v4257 = vpow.pop %v4256
    %v4258 = vadd.f32 %v4257, 1.0
    %v4259 = vrcp.pop %v4258
    %v4260 = vmul.f32 1.0, %v4259
    %v4261 = vmul.f32 %v4254, %v4245
    %v4262 = vadd.f32 %v4243, %v4261
    %v4263 = vtanh.pop %v4262
    %v4264 = vsub.f32 1.0, %v4260
    %v4265 = vmul.f32 %v4264, %v4263
    %v4266 = vmul.f32 %v4260, %v3946
    %v4267 = vadd.f32 %v4265, %v4266
    %v4268 = vpack.c.bf16 %v4267, %v4267
    %4269 = vmatprep.subr.bf16.mxu0 %v887
    %4270 = vmatpush1.bf16.msra.mxu0 %v2322
    %4271 = vmatprep.subr.bf16.mxu0 %v888
    %4272 = vmatpush1.bf16.msra.mxu0 %v2323
    %4273 = vmatprep.subr.bf16.mxu0 %v889
    %4274 = vmatpush1.bf16.msra.mxu0 %v2324
    %4275 = vmatprep.subr.bf16.mxu0 %v890
    %4276 = vmatpush1.bf16.msra.mxu0 %v2325
    %4277 = vmatprep.subr.bf16.mxu0 %v891
    %4278 = vmatpush1.bf16.msra.mxu0 %v2326
    %4279 = vmatprep.subr.bf16.mxu0 %v892
    %4280 = vmatpush1.bf16.msra.mxu0 %v2327
    %4281 = vmatprep.subr.bf16.mxu0 %v893
    %4282 = vmatpush1.bf16.msra.mxu0 %v2328
    %4283 = vmatprep.subr.bf16.mxu0 %v894
    %4284 = vmatpush1.bf16.msra.mxu0 %v2329
    %4285 = vmatprep.subr.bf16.mxu0 0
    %4286 = vmatpush1.bf16.msra.mxu0 0
    %4287 = vmatprep.subr.bf16.mxu0 0
    %4288 = vmatpush1.bf16.msra.mxu0 0
    %4289 = vmatprep.subr.bf16.mxu0 0
    %4290 = vmatpush1.bf16.msra.mxu0 0
    %4291 = vmatprep.subr.bf16.mxu0 0
    %4292 = vmatpush1.bf16.msra.mxu0 0
    %4293 = vmatprep.subr.bf16.mxu0 0
    %4294 = vmatpush1.bf16.msra.mxu0 0
    %4295 = vmatprep.subr.bf16.mxu0 0
    %4296 = vmatpush1.bf16.msra.mxu0 0
    %4297 = vmatprep.subr.bf16.mxu0 0
    %4298 = vmatpush1.bf16.msra.mxu0 0
    %4299 = vmatprep.subr.bf16.mxu0 0
    %4300 = vmatpush1.bf16.msra.mxu0 0
    %4301 = vmatprep.mubr.bf16.mxu0 0
    %4302 = vmatmul.mubr.bf16.gmra.mrb[0].mxu0 %v4268
    %v4303 = vpop.f32.mrb[0].mxu0
    %v4304 = vadd.f32 0.0, %v4303
    %v4305 = vpop.f32.mrb[0].mxu0
    %v4306 = vadd.f32 0.0, %v4305
    %v4307 = vpop.f32.mrb[0].mxu0
    %v4308 = vpop.f32.mrb[0].mxu0
    %4309 = vdwg.mxu0
    %v4310 = vadd.f32 %v4304, %v2382
    %v4311 = vxor.u32 %v4310, 2147483648
    %v4312 = vmul.f32 %v4311, 1.442695
    %v4313 = vpow.pop %v4312
    %v4314 = vadd.f32 %v4313, 1.0
    %v4315 = vrcp.pop %v4314
    %v4316 = vmul.f32 1.0, %v4315
    %v4317 = vrot.slane %v126, 7
    %v4318 = vrot.slane %v128, 6
    %v4319 = vsel %vm1059, %v4318, %v4317
    %v4321 = vmul.f32 %v4316, %v4319
    %v4322 = vsel %vm1216, %v4321, 0.0
    %4323 = vadd.xlane.f32.xlu0 %v4322
    %v4324 = vpop.xlane.xlu0 %4323
    %v4325 = vadd.f32 %v938, %v4306
    %v4326 = vsel %vm1220, %v4325, -inf
    %4327 = vmax.xlane.f32.xlu0 %v4326
    %v4328 = vpop.xlane.xlu0 %4327
    %v4329 = vsub.f32 %v4325, %v4328
    %v4330 = vmul.f32 %v4329, 1.442695
    %v4331 = vpow.pop %v4330
    %v4332 = vsel %vm1220, %v4331, 0.0
    %4333 = vadd.xlane.f32.xlu0 %v4332
    %v4334 = vpop.xlane.xlu0 %4333
    %v4335 = vrcp.pop %v4334
    %v4336 = vmul.f32 %v4331, %v4335
    %v4337 = vlaneseq
    %v4338 = vshrl.u32 %v4337, 7
    %v4339 = vsub.s32 0, %v4338
    %v4340 = vrot.slane %v4336, %v4339
    %4342 = vbcast.lane.b32.xlu0 %v4340, 256
    %v4343 = vpop.permute.xlu0 %4342
    %s4345 = sor.u32 256, 8
    %4346 = vbcast.lane.b32.xlu0 %v4340, %s4345
    %v4347 = vpop.permute.xlu0 %4346
    %v4348 = vlaneseq
    %v4349 = vshrl.u32 %v4348, 7
    %v4350 = vsub.s32 1, %v4349
    %v4351 = vrot.slane %v4336, %v4350
    %4353 = vbcast.lane.b32.xlu0 %v4351, 256
    %v4354 = vpop.permute.xlu0 %4353
    %s4356 = sor.u32 256, 8
    %4357 = vbcast.lane.b32.xlu0 %v4351, %s4356
    %v4358 = vpop.permute.xlu0 %4357
    %v4359 = vmul.f32 %v4343, %v1217
    %v4360 = vmul.f32 %v4347, %v1212
    %v4361 = vmul.f32 %v4354, %v1218
    %v4362 = vmul.f32 %v4358, %v1213
    %v4363 = vsel %vm1216, %v4360, 0.0
    %v4364 = vadd.f32 %v4359, %v4363
    %v4365 = vrot.slane %v4364, 4
    %v4366 = vadd.f32 %v4364, %v4365
    %v4367 = vrot.slane %v4366, 2
    %v4368 = vadd.f32 %v4366, %v4367
    %v4369 = vrot.slane %v4368, 1
    %v4370 = vadd.f32 %v4368, %v4369
    %v4371 = vsel %vm1216, %v4362, 0.0
    %v4372 = vadd.f32 %v4361, %v4371
    %v4373 = vrot.slane %v4372, 4
    %v4374 = vadd.f32 %v4372, %v4373
    %v4375 = vrot.slane %v4374, 2
    %v4376 = vadd.f32 %v4374, %v4375
    %v4377 = vrot.slane %v4376, 1
    %v4378 = vadd.f32 %v4376, %v4377
    %v4381 = vsel %vm1059, %v4378, %v4370
    %v4383 = vadd.f32 %v1046, %v4381
    %v4384 = vmax.f32 %v4383, 0.0
    %v4385 = vpack.c.bf16 %v4384, %v4384
    %4386 = vmatprep.subr.bf16.mxu0 %v1567
    %4387 = vmatpush1.bf16.msra.mxu0 %v1566
    %4388 = vmatprep.subr.bf16.mxu0 %v1571
    %4389 = vmatpush1.bf16.msra.mxu0 %v1570
    %4390 = vmatprep.subr.bf16.mxu0 %v1575
    %4391 = vmatpush1.bf16.msra.mxu0 %v1574
    %4392 = vmatprep.subr.bf16.mxu0 %v1579
    %4393 = vmatpush1.bf16.msra.mxu0 %v1578
    %4394 = vmatprep.subr.bf16.mxu0 %v1583
    %4395 = vmatpush1.bf16.msra.mxu0 %v1582
    %4396 = vmatprep.subr.bf16.mxu0 %v1587
    %4397 = vmatpush1.bf16.msra.mxu0 %v1586
    %4398 = vmatprep.subr.bf16.mxu0 %v1591
    %4399 = vmatpush1.bf16.msra.mxu0 %v1590
    %4400 = vmatprep.subr.bf16.mxu0 %v1595
    %4401 = vmatpush1.bf16.msra.mxu0 %v1594
    %4402 = vmatprep.subr.bf16.mxu0 %v1599
    %4403 = vmatpush1.bf16.msra.mxu0 %v1598
    %4404 = vmatprep.subr.bf16.mxu0 %v1603
    %4405 = vmatpush1.bf16.msra.mxu0 %v1602
    %4406 = vmatprep.subr.bf16.mxu0 %v1607
    %4407 = vmatpush1.bf16.msra.mxu0 %v1606
    %4408 = vmatprep.subr.bf16.mxu0 %v1611
    %4409 = vmatpush1.bf16.msra.mxu0 %v1610
    %4410 = vmatprep.subr.bf16.mxu0 %v1615
    %4411 = vmatpush1.bf16.msra.mxu0 %v1614
    %4412 = vmatprep.subr.bf16.mxu0 %v1619
    %4413 = vmatpush1.bf16.msra.mxu0 %v1618
    %4414 = vmatprep.subr.bf16.mxu0 %v1623
    %4415 = vmatpush1.bf16.msra.mxu0 %v1622
    %4416 = vmatprep.subr.bf16.mxu0 %v1627
    %4417 = vmatpush1.bf16.msra.mxu0 %v1626
    %4418 = vmatprep.mubr.bf16.mxu0 %v4166
    %4419 = vmatmul.mubr.bf16.gmra.mrb[0].mxu0 %v4385
    %v4420 = vpop.f32.mrb[0].mxu0
    %v4421 = vadd.f32 %v1357, %v4420
    %v4422 = vpop.f32.mrb[0].mxu0
    %v4423 = vadd.f32 %v1361, %v4422
    %v4424 = vpop.f32.mrb[0].mxu0
    %v4425 = vpop.f32.mrb[0].mxu0
    %4426 = vdwg.mxu0
    %4427 = vmatprep.subr.bf16.mxu0 %v1569
    %4428 = vmatpush1.bf16.msra.mxu0 %v1568
    %4429 = vmatprep.subr.bf16.mxu0 %v1573
    %4430 = vmatpush1.bf16.msra.mxu0 %v1572
    %4431 = vmatprep.subr.bf16.mxu0 %v1577
    %4432 = vmatpush1.bf16.msra.mxu0 %v1576
    %4433 = vmatprep.subr.bf16.mxu0 %v1581
    %4434 = vmatpush1.bf16.msra.mxu0 %v1580
    %4435 = vmatprep.subr.bf16.mxu0 %v1585
    %4436 = vmatpush1.bf16.msra.mxu0 %v1584
    %4437 = vmatprep.subr.bf16.mxu0 %v1589
    %4438 = vmatpush1.bf16.msra.mxu0 %v1588
    %4439 = vmatprep.subr.bf16.mxu0 %v1593
    %4440 = vmatpush1.bf16.msra.mxu0 %v1592
    %4441 = vmatprep.subr.bf16.mxu0 %v1597
    %4442 = vmatpush1.bf16.msra.mxu0 %v1596
    %4443 = vmatprep.subr.bf16.mxu0 %v1601
    %4444 = vmatpush1.bf16.msra.mxu0 %v1600
    %4445 = vmatprep.subr.bf16.mxu0 %v1605
    %4446 = vmatpush1.bf16.msra.mxu0 %v1604
    %4447 = vmatprep.subr.bf16.mxu0 %v1609
    %4448 = vmatpush1.bf16.msra.mxu0 %v1608
    %4449 = vmatprep.subr.bf16.mxu0 %v1613
    %4450 = vmatpush1.bf16.msra.mxu0 %v1612
    %4451 = vmatprep.subr.bf16.mxu0 %v1617
    %4452 = vmatpush1.bf16.msra.mxu0 %v1616
    %4453 = vmatprep.subr.bf16.mxu0 %v1621
    %4454 = vmatpush1.bf16.msra.mxu0 %v1620
    %4455 = vmatprep.subr.bf16.mxu0 %v1625
    %4456 = vmatpush1.bf16.msra.mxu0 %v1624
    %4457 = vmatprep.subr.bf16.mxu0 %v1629
    %4458 = vmatpush1.bf16.msra.mxu0 %v1628
    %4459 = vmatprep.mubr.bf16.mxu0 %v4166
    %4460 = vmatmul.mubr.bf16.gmra.mrb[0].mxu0 %v4385
    %v4461 = vpop.f32.mrb[0].mxu0
    %v4462 = vadd.f32 %v1365, %v4461
    %v4463 = vpop.f32.mrb[0].mxu0
    %v4464 = vadd.f32 %v1369, %v4463
    %v4465 = vpop.f32.mrb[0].mxu0
    %v4466 = vpop.f32.mrb[0].mxu0
    %4467 = vdwg.mxu0
    %v4468 = vxor.u32 %v4421, 2147483648
    %v4469 = vmul.f32 %v4468, 1.442695
    %v4470 = vpow.pop %v4469
    %v4471 = vadd.f32 %v4470, 1.0
    %v4472 = vrcp.pop %v4471
    %v4473 = vmul.f32 1.0, %v4472
    %v4474 = vxor.u32 %v4423, 2147483648
    %v4475 = vmul.f32 %v4474, 1.442695
    %v4476 = vpow.pop %v4475
    %v4477 = vadd.f32 %v4476, 1.0
    %v4478 = vrcp.pop %v4477
    %v4479 = vmul.f32 1.0, %v4478
    %v4480 = vmul.f32 %v4473, %v4464
    %v4481 = vadd.f32 %v4462, %v4480
    %v4482 = vtanh.pop %v4481
    %v4483 = vsub.f32 1.0, %v4479
    %v4484 = vmul.f32 %v4483, %v4482
    %v4485 = vmul.f32 %v4479, %v4165
    %v4486 = vadd.f32 %v4484, %v4485
    %v4487 = vpack.c.bf16 %v4486, %v4486
    %4488 = vmatprep.subr.bf16.mxu0 %v2077
    %4489 = vmatpush1.bf16.msra.mxu0 %v2076
    %4490 = vmatprep.subr.bf16.mxu0 %v2081
    %4491 = vmatpush1.bf16.msra.mxu0 %v2080
    %4492 = vmatprep.subr.bf16.mxu0 %v2085
    %4493 = vmatpush1.bf16.msra.mxu0 %v2084
    %4494 = vmatprep.subr.bf16.mxu0 %v2089
    %4495 = vmatpush1.bf16.msra.mxu0 %v2088
    %4496 = vmatprep.subr.bf16.mxu0 %v2093
    %4497 = vmatpush1.bf16.msra.mxu0 %v2092
    %4498 = vmatprep.subr.bf16.mxu0 %v2097
    %4499 = vmatpush1.bf16.msra.mxu0 %v2096
    %4500 = vmatprep.subr.bf16.mxu0 %v2101
    %4501 = vmatpush1.bf16.msra.mxu0 %v2100
    %4502 = vmatprep.subr.bf16.mxu0 %v2105
    %4503 = vmatpush1.bf16.msra.mxu0 %v2104
    %4504 = vmatprep.subr.bf16.mxu0 %v2109
    %4505 = vmatpush1.bf16.msra.mxu0 %v2108
    %4506 = vmatprep.subr.bf16.mxu0 %v2113
    %4507 = vmatpush1.bf16.msra.mxu0 %v2112
    %4508 = vmatprep.subr.bf16.mxu0 %v2117
    %4509 = vmatpush1.bf16.msra.mxu0 %v2116
    %4510 = vmatprep.subr.bf16.mxu0 %v2121
    %4511 = vmatpush1.bf16.msra.mxu0 %v2120
    %4512 = vmatprep.subr.bf16.mxu0 %v2125
    %4513 = vmatpush1.bf16.msra.mxu0 %v2124
    %4514 = vmatprep.subr.bf16.mxu0 %v2129
    %4515 = vmatpush1.bf16.msra.mxu0 %v2128
    %4516 = vmatprep.subr.bf16.mxu0 %v2133
    %4517 = vmatpush1.bf16.msra.mxu0 %v2132
    %4518 = vmatprep.subr.bf16.mxu0 %v2137
    %4519 = vmatpush1.bf16.msra.mxu0 %v2136
    %4520 = vmatprep.mubr.bf16.mxu0 %v4268
    %4521 = vmatmul.mubr.bf16.gmra.mrb[0].mxu0 %v4487
    %v4522 = vpop.f32.mrb[0].mxu0
    %v4523 = vadd.f32 %v1867, %v4522
    %v4524 = vpop.f32.mrb[0].mxu0
    %v4525 = vadd.f32 %v1871, %v4524
    %v4526 = vpop.f32.mrb[0].mxu0
    %v4527 = vpop.f32.mrb[0].mxu0
    %4528 = vdwg.mxu0
    %4529 = vmatprep.subr.bf16.mxu0 %v2079
    %4530 = vmatpush1.bf16.msra.mxu0 %v2078
    %4531 = vmatprep.subr.bf16.mxu0 %v2083
    %4532 = vmatpush1.bf16.msra.mxu0 %v2082
    %4533 = vmatprep.subr.bf16.mxu0 %v2087
    %4534 = vmatpush1.bf16.msra.mxu0 %v2086
    %4535 = vmatprep.subr.bf16.mxu0 %v2091
    %4536 = vmatpush1.bf16.msra.mxu0 %v2090
    %4537 = vmatprep.subr.bf16.mxu0 %v2095
    %4538 = vmatpush1.bf16.msra.mxu0 %v2094
    %4539 = vmatprep.subr.bf16.mxu0 %v2099
    %4540 = vmatpush1.bf16.msra.mxu0 %v2098
    %4541 = vmatprep.subr.bf16.mxu0 %v2103
    %4542 = vmatpush1.bf16.msra.mxu0 %v2102
    %4543 = vmatprep.subr.bf16.mxu0 %v2107
    %4544 = vmatpush1.bf16.msra.mxu0 %v2106
    %4545 = vmatprep.subr.bf16.mxu0 %v2111
    %4546 = vmatpush1.bf16.msra.mxu0 %v2110
    %4547 = vmatprep.subr.bf16.mxu0 %v2115
    %4548 = vmatpush1.bf16.msra.mxu0 %v2114
    %4549 = vmatprep.subr.bf16.mxu0 %v2119
    %4550 = vmatpush1.bf16.msra.mxu0 %v2118
    %4551 = vmatprep.subr.bf16.mxu0 %v2123
    %4552 = vmatpush1.bf16.msra.mxu0 %v2122
    %4553 = vmatprep.subr.bf16.mxu0 %v2127
    %4554 = vmatpush1.bf16.msra.mxu0 %v2126
    %4555 = vmatprep.subr.bf16.mxu0 %v2131
    %4556 = vmatpush1.bf16.msra.mxu0 %v2130
    %4557 = vmatprep.subr.bf16.mxu0 %v2135
    %4558 = vmatpush1.bf16.msra.mxu0 %v2134
    %4559 = vmatprep.subr.bf16.mxu0 %v2139
    %4560 = vmatpush1.bf16.msra.mxu0 %v2138
    %4561 = vmatprep.mubr.bf16.mxu0 %v4268
    %4562 = vmatmul.mubr.bf16.gmra.mrb[0].mxu0 %v4487
    %v4563 = vpop.f32.mrb[0].mxu0
    %v4564 = vadd.f32 %v1875, %v4563
    %v4565 = vpop.f32.mrb[0].mxu0
    %v4566 = vadd.f32 %v1879, %v4565
    %v4567 = vpop.f32.mrb[0].mxu0
    %v4568 = vpop.f32.mrb[0].mxu0
    %4569 = vdwg.mxu0
    %v4570 = vxor.u32 %v4523, 2147483648
    %v4571 = vmul.f32 %v4570, 1.442695
    %v4572 = vpow.pop %v4571
    %v4573 = vadd.f32 %v4572, 1.0
    %v4574 = vrcp.pop %v4573
    %v4575 = vmul.f32 1.0, %v4574
    %v4576 = vxor.u32 %v4525, 2147483648
    %v4577 = vmul.f32 %v4576, 1.442695
    %v4578 = vpow.pop %v4577
    %v4579 = vadd.f32 %v4578, 1.0
    %v4580 = vrcp.pop %v4579
    %v4581 = vmul.f32 1.0, %v4580
    %v4582 = vmul.f32 %v4575, %v4566
    %v4583 = vadd.f32 %v4564, %v4582
    %v4584 = vtanh.pop %v4583
    %v4585 = vsub.f32 1.0, %v4581
    %v4586 = vmul.f32 %v4585, %v4584
    %v4587 = vmul.f32 %v4581, %v4267
    %v4588 = vadd.f32 %v4586, %v4587
    %v4589 = vpack.c.bf16 %v4588, %v4588
    %4590 = vmatprep.subr.bf16.mxu0 %v887
    %4591 = vmatpush1.bf16.msra.mxu0 %v2322
    %4592 = vmatprep.subr.bf16.mxu0 %v888
    %4593 = vmatpush1.bf16.msra.mxu0 %v2323
    %4594 = vmatprep.subr.bf16.mxu0 %v889
    %4595 = vmatpush1.bf16.msra.mxu0 %v2324
    %4596 = vmatprep.subr.bf16.mxu0 %v890
    %4597 = vmatpush1.bf16.msra.mxu0 %v2325
    %4598 = vmatprep.subr.bf16.mxu0 %v891
    %4599 = vmatpush1.bf16.msra.mxu0 %v2326
    %4600 = vmatprep.subr.bf16.mxu0 %v892
    %4601 = vmatpush1.bf16.msra.mxu0 %v2327
    %4602 = vmatprep.subr.bf16.mxu0 %v893
    %4603 = vmatpush1.bf16.msra.mxu0 %v2328
    %4604 = vmatprep.subr.bf16.mxu0 %v894
    %4605 = vmatpush1.bf16.msra.mxu0 %v2329
    %4606 = vmatprep.subr.bf16.mxu0 0
    %4607 = vmatpush1.bf16.msra.mxu0 0
    %4608 = vmatprep.subr.bf16.mxu0 0
    %4609 = vmatpush1.bf16.msra.mxu0 0
    %4610 = vmatprep.subr.bf16.mxu0 0
    %4611 = vmatpush1.bf16.msra.mxu0 0
    %4612 = vmatprep.subr.bf16.mxu0 0
    %4613 = vmatpush1.bf16.msra.mxu0 0
    %4614 = vmatprep.subr.bf16.mxu0 0
    %4615 = vmatpush1.bf16.msra.mxu0 0
    %4616 = vmatprep.subr.bf16.mxu0 0
    %4617 = vmatpush1.bf16.msra.mxu0 0
    %4618 = vmatprep.subr.bf16.mxu0 0
    %4619 = vmatpush1.bf16.msra.mxu0 0
    %4620 = vmatprep.subr.bf16.mxu0 0
    %4621 = vmatpush1.bf16.msra.mxu0 0
    %4622 = vmatprep.mubr.bf16.mxu0 0
    %4623 = vmatmul.mubr.bf16.gmra.mrb[0].mxu0 %v4589
    %v4624 = vpop.f32.mrb[0].mxu0
    %v4625 = vadd.f32 0.0, %v4624
    %v4626 = vpop.f32.mrb[0].mxu0
    %v4627 = vpop.f32.mrb[0].mxu0
    %v4628 = vpop.f32.mrb[0].mxu0
    %4629 = vdwg.mxu0
    %v4630 = vadd.f32 %v4625, %v2382
    %v4631 = vxor.u32 %v4630, 2147483648
    %v4632 = vmul.f32 %v4631, 1.442695
    %v4633 = vpow.pop %v4632
    %v4634 = vadd.f32 %v4633, 1.0
    %v4635 = vrcp.pop %v4634
    %v4636 = vmul.f32 1.0, %v4635
    %v4639 = vrot.slane %v129, 7
    %v4640 = vsel %vm1059, %v4639, %v127
    %v4642 = vmul.f32 %v4636, %v4640
    %v4643 = vsel %vm1216, %v4642, 0.0
    %4644 = vadd.xlane.f32.xlu0 %v4643
    %v4645 = vpop.xlane.xlu0 %4644
    %vm4646 = vcmask 7168
    %v4647 = vsel %vm4646, %v2398, %v2719
    %vm4648 = vcmask 15360
    %v4649 = vsel %vm4648, %v4647, %v3040
    %vm4650 = vcmask 23552
    %v4651 = vsel %vm4650, %v4649, %v3361
    %vm4652 = vcmask 31744
    %v4653 = vsel %vm4652, %v4651, %v3682
    %vm4654 = vcmask 39936
    %v4655 = vsel %vm4654, %v4653, %v4003
    %vm4656 = vcmask 48128
    %v4657 = vsel %vm4656, %v4655, %v4324
    %vm4658 = vcmask 56320
    %v4659 = vsel %vm4658, %v4657, %v4645
    %v4660 = vlog2.pop %v4659
    %v4661 = vmul.f32 %v4660, 0.6931472
    %v4662 = vmax.f32 %v4661, -100.0
    %v4663 = vsub.f32 1.0, %v4659
    %v4664 = vlog2.pop %v4663
    %v4665 = vmul.f32 %v4664, 0.6931472
    %v4666 = vmax.f32 %v4665, -100.0
    %v4667 = vmul.f32 %v4666, 0.0
    %v4668 = vadd.f32 %v4662, %v4667
    %v4669 = vsub.f32 0.0, %v4668
    %vm4670 = vcmask 58368
    %v4671 = vsel %vm4670, %v4669, 0.0
    %4672 = vadd.xlane.f32.xlu0 %v4671
    %v4673 = vpop.xlane.xlu0 %4672
    %v4674 = vrot.slane %v4673, 4
    %v4675 = vadd.f32 %v4673, %v4674
    %v4676 = vrot.slane %v4675, 2
    %v4677 = vadd.f32 %v4675, %v4676
    %v4678 = vrot.slane %v4677, 1
    %v4679 = vadd.f32 %v4677, %v4678
    %s4680 = vtos %v4679
    %v4681 = vrcp.pop 16.0
    %s4682 = vtos %v4681
    %s4683 = smul.f32 %s4680, %s4682
    %v4684 = vrcp.pop 2.0
    %s4685 = vtos %v4684
    %s4686 = smul.f32 %s4683, %s4685
    %4687 = vst.msk [vmem:[#allocation10] sm:$0x3] %vm4670, %v4659
    %v4688 = vstv %s4686
    %vm4689 = vcmask 0
    %4690 = vst.msk [vmem:[#allocation11] sm:$0x1] %vm4689, %v4688
    // Predicated region
    $region54: #{conv_discriminator_forward.1} parent=1 // pred_check
      _
    $region55: #{conv_discriminator_forward.1} parent=1 // pred_check_branch
      %4692 = sbr.rel (0) target = $region57
    $region56: #{conv_discriminator_forward.1} parent=1 // pred_region
      %s4694 = ssub.s32 32, 32
      %4695 = vsyncadd [#allocation4], %s4694
      %s4697 = sshll.u32 [#allocation10], 4
      %s4698 = int_to_ptr.vmem [resolvable:$true] %s4697
      %4700 = dma.vmem_to_hbm [thread:$0]  %s4698, 32, %s9, [#allocation4]
    $region57: #{conv_discriminator_forward.1} parent=1 // pred_fallthru
      _
    // Predicated region
    $region58: #{conv_discriminator_forward.1} parent=1 // pred_check
      _
    $region59: #{conv_discriminator_forward.1} parent=1 // pred_check_branch
      %4702 = sbr.rel (0) target = $region61
    $region60: #{conv_discriminator_forward.1} parent=1 // pred_region
      %s4704 = ssub.s32 16, 16
      %4705 = vsyncadd [#allocation12], %s4704
      %s4707 = sshll.u32 [#allocation11], 4
      %s4708 = int_to_ptr.vmem [resolvable:$true] %s4707
      %4710 = dma.vmem_to_hbm [thread:$0]  %s4708, 16, %s10, [#allocation12]
    $region61: #{conv_discriminator_forward.1} parent=1 // pred_fallthru
      _
    // Predicated region
    $region62: #{conv_discriminator_forward.1} parent=1 // pred_check
      _
    $region63: #{conv_discriminator_forward.1} parent=1 // pred_check_branch
      %4712 = sbr.rel (0) target = $region65
    $region64: #{conv_discriminator_forward.1} parent=1 // pred_region
      %4713 = dma.done [#allocation4], 32
    $region65: #{conv_discriminator_forward.1} parent=1 // pred_fallthru
      _
    // Predicated region
    $region66: #{conv_discriminator_forward.1} parent=1 // pred_check
      _
    $region67: #{conv_discriminator_forward.1} parent=1 // pred_check_branch
      %4715 = sbr.rel (0) target = $region69
    $region68: #{conv_discriminator_forward.1} parent=1 // pred_region
      %4716 = dma.done [#allocation12], 16
    $region69: #{conv_discriminator_forward.1} parent=1 // pred_fallthru
      _
    %4717 = vsyncpa [#allocation3], 1
    %4718 = vsyncpa [#allocation6], 1
    %4719 = vsyncpa [#allocation9], 1
    %4720 = vsyncpa [#allocation4], 1
    %4721 = vsyncpa [#allocation12], 1

</llo_original>
